<compile_context>
chip_gen: v6e
topology: v6e:2x2x1
jax: 0.10.0
libtpu: 0.0.40
codegen_flags: <defaults>
</compile_context>

<pallas_src>
import functools

import numpy as np

import jax
import jax.numpy as jnp
from jax import lax
from jax.experimental import pallas as pl
from jax.experimental.pallas import tpu as pltpu

LANE = 128      # vreg lane width
SUBLANE = 8     # f32 sublane tile
BN_EPS = 1e-5
MASK_COLS = 8   # [valid, w>0, w<W-1, h>0, h<H-1, 0, 0, 0]


def _round_up(x, m):
    return (x + m - 1) // m * m


# ---------------------------------------------------------------------------
# Fused kernel: conv3x3 -> BN -> ReLU -> conv3x3 -> BN -> (+x) -> ReLU
# ---------------------------------------------------------------------------
def _resnet_block_kernel(x_ref, masks_ref, w1_ref, g1_ref, b1_ref,
                         w2_hbm_ref, g2_ref, b2_ref, out_ref,
                         w2_vmem, w2_sem, *, p_true, width):
    pp, cp = x_ref.shape          # padded pixel rows, lane-dense padded channels

    # Prefetch conv2's weights (HBM -> VMEM) behind conv1 / bn1 / relu compute.
    w2_copy = pltpu.make_async_copy(w2_hbm_ref, w2_vmem, w2_sem)
    w2_copy.start()

    x = x_ref[...]                # (pp, cp) activation, VMEM-resident f32
    masks = masks_ref[...]        # (pp, MASK_COLS) per-row masks (precomputed)
    valid = masks[:, 0:1]         # q <  N*H*W   (real pixel rows)
    m_wm1 = masks[:, 1:2]         # w-1 >= 0
    m_wp1 = masks[:, 2:3]         # w+1 <  W
    m_hm1 = masks[:, 3:4]         # h-1 >= 0
    m_hp1 = masks[:, 4:5]         # h+1 <  H
    inv_p = 1.0 / float(p_true)

    def conv3x3(a, w_ref):
        # dx in {-1, 0, +1}: XLU sublane rolls + boundary masks realize the
        # padding=1 halo; every operand stays an aligned 2-D (rows, 128-lane)
        # tile.  Operands are cast to bf16 (weights already bf16); the MXU
        # accumulates in f32.
        a_dx = (
            (pltpu.roll(a, shift=1, axis=0) * m_wm1).astype(jnp.bfloat16),       # (h, w-1)
            a.astype(jnp.bfloat16),                                              # (h, w)
            (pltpu.roll(a, shift=pp - 1, axis=0) * m_wp1).astype(jnp.bfloat16),  # (h, w+1)
        )
        # 9 per-tap bf16 matmuls, straight-line accumulated, bucketed by ky.
        z = []
        for ky in range(3):
            acc = jnp.dot(a_dx[0], w_ref[3 * ky + 0],
                          preferred_element_type=jnp.float32)
            acc = acc + jnp.dot(a_dx[1], w_ref[3 * ky + 1],
                                preferred_element_type=jnp.float32)
            acc = acc + jnp.dot(a_dx[2], w_ref[3 * ky + 2],
                                preferred_element_type=jnp.float32)
            z.append(acc)
        # dy in {-1, 0, +1}: roll the bucketed partial sums along H (W rows).
        return (pltpu.roll(z[0], shift=width, axis=0) * m_hm1
                + z[1]
                + pltpu.roll(z[2], shift=pp - width, axis=0) * m_hp1)

    def batch_norm(a, g, b):
        # PyTorch training-mode BN: per-channel stats over the true N*H*W
        # pixels (padded rows masked out), biased variance, eps=1e-5.
        # Folded affine: a*s + t  -> only 2 full-tile VPU ops on the output.
        am = a * valid
        mean = jnp.sum(am, axis=0, keepdims=True) * inv_p
        var = jnp.sum(am * am, axis=0, keepdims=True) * inv_p - mean * mean
        s = g * lax.rsqrt(var + BN_EPS)
        t = b - mean * s
        return a * s + t

    h1 = jnp.maximum(batch_norm(conv3x3(x, w1_ref), g1_ref[...], b1_ref[...]), 0.0)
    w2_copy.wait()                # conv2 weights are now in VMEM
    y = batch_norm(conv3x3(h1, w2_vmem), g2_ref[...], b2_ref[...])
    out_ref[...] = jnp.maximum(y + x, 0.0)


# ---------------------------------------------------------------------------
# One-time host-side preparation (weights / per-row masks; no per-step work)
# ---------------------------------------------------------------------------
def _pixel_masks(n, h, w):
    """(pp, MASK_COLS) f32: per-pixel-row validity + 3x3-halo boundary masks.

    Built with numpy at trace time (shapes are static), so it is a baked-in
    constant — replaces the old O(p^2) shift-operator matrices."""
    p = n * h * w
    pp = _round_up(p, SUBLANE)
    q = np.arange(pp)
    wq = q % w
    hq = (q // w) % h
    real = q < p
    m = np.zeros((pp, MASK_COLS), np.float32)
    m[:, 0] = real
    m[:, 1] = real & (wq > 0)
    m[:, 2] = real & (wq < w - 1)
    m[:, 3] = real & (hq > 0)
    m[:, 4] = real & (hq < h - 1)
    return m


def prepare_params(conv1_w, bn1_g, bn1_b, conv2_w, bn2_g, bn2_b):
    """Pad weights / BN params to lane-dense channel counts, split the 3x3
    kernels into 9 per-tap (Cp, Cp) matmul operands, store weights as bf16."""
    c = conv1_w.shape[0]
    cp = _round_up(c, LANE)

    def prep_conv(w_oihw):
        kh, kw = w_oihw.shape[2], w_oihw.shape[3]
        taps = jnp.transpose(w_oihw.astype(jnp.float32), (2, 3, 1, 0))  # (3,3,Cin,Cout)
        taps = jnp.pad(taps, ((0, 0), (0, 0), (0, cp - c), (0, cp - c)))
        # bf16 operands, f32 accumulation on the MXU.
        return taps.reshape(kh * kw, cp, cp).astype(jnp.bfloat16)

    def prep_vec(v):
        return jnp.pad(v.astype(jnp.float32).reshape(1, c), ((0, 0), (0, cp - c)))

    return {
        "w1": prep_conv(conv1_w), "g1": prep_vec(bn1_g), "b1": prep_vec(bn1_b),
        "w2": prep_conv(conv2_w), "g2": prep_vec(bn2_g), "b2": prep_vec(bn2_b),
    }


def resnet_block_forward(x_nchw, params):
    n, c, h, w = x_nchw.shape
    p = n * h * w
    pp = _round_up(p, SUBLANE)
    cp = params["w1"].shape[-1]

    masks = jnp.asarray(_pixel_masks(n, h, w))     # trace-time constant

    # NCHW -> (pixels, channels), zero-padded to (8-mult rows, 128-mult lanes).
    # TODO(synk): accepting/producing NHWC (or the (pp, cp) slab) end-to-end
    #             would remove these wrapper-side transposes entirely.
    x2d = jnp.transpose(x_nchw, (0, 2, 3, 1)).reshape(p, c).astype(jnp.float32)
    x2d = jnp.pad(x2d, ((0, pp - p), (0, cp - c)))

    # VMEM footprint estimate (f32 activations/temps, bf16 weights) + headroom,
    # capped well under v7x's 64 MiB physical VMEM.
    vmem_est = 8 * pp * cp * 4 + 2 * 9 * cp * cp * 2 + pp * LANE * 4 + (4 << 20)
    vmem_limit = int(min(48 << 20, max(16 << 20, vmem_est)))

    vmem = pltpu.MemorySpace.VMEM
    out = pl.pallas_call(
        functools.partial(_resnet_block_kernel, p_true=p, width=w),
        out_shape=jax.ShapeDtypeStruct((pp, cp), jnp.float32),
        in_specs=[pl.BlockSpec(memory_space=vmem)] * 5         # x, masks, w1, g1, b1
                 + [pl.BlockSpec(memory_space=pl.ANY)]          # w2 stays in HBM
                 + [pl.BlockSpec(memory_space=vmem)] * 2,       # g2, b2
        out_specs=pl.BlockSpec(memory_space=vmem),
        scratch_shapes=[pltpu.VMEM((9, cp, cp), jnp.bfloat16),  # prefetched w2
                        pltpu.SemaphoreType.DMA],
        compiler_params=pltpu.CompilerParams(vmem_limit_bytes=vmem_limit),
    )(x2d, masks, params["w1"], params["g1"], params["b1"],
      params["w2"], params["g2"], params["b2"])

    return jnp.transpose(out[:p, :c].reshape(n, h, w, c), (0, 3, 1, 2))


# ---------------------------------------------------------------------------
# Pure-JAX reference (exact PyTorch ResNetBlock semantics) for validation
# ---------------------------------------------------------------------------
def resnet_block_ref(x, conv1_w, bn1_g, bn1_b, conv2_w, bn2_g, bn2_b):
    def conv(a, wgt):
        return lax.conv_general_dilated(
            a, wgt, window_strides=(1, 1), padding=((1, 1), (1, 1)),
            dimension_numbers=("NCHW", "OIHW", "NCHW"),
            precision=lax.Precision.HIGHEST)

    def bn(a, g, b):
        mean = jnp.mean(a, axis=(0, 2, 3), keepdims=True)
        var = jnp.mean((a - mean) ** 2, axis=(0, 2, 3), keepdims=True)
        return ((a - mean) * lax.rsqrt(var + BN_EPS)
                * g.reshape(1, -1, 1, 1) + b.reshape(1, -1, 1, 1))

    h1 = jnp.maximum(bn(conv(x, conv1_w), bn1_g, bn1_b), 0.0)
    y = bn(conv(h1, conv2_w), bn2_g, bn2_b)
    return jnp.maximum(y + x, 0.0)


def _bf16_representable(a):
    # Round test data to bf16-representable values so the correctness check is
    # insensitive to the bf16-operand / f32-accumulation MXU path.
    return a.astype(jnp.bfloat16).astype(jnp.float32)


def _run_case(key, n, c, h, w):
    ks = jax.random.split(key, 7)
    x = _bf16_representable(jax.random.normal(ks[0], (n, c, h, w), jnp.float32))
    conv1_w = _bf16_representable(0.1 * jax.random.normal(ks[1], (c, c, 3, 3), jnp.float32))
    conv2_w = _bf16_representable(0.1 * jax.random.normal(ks[2], (c, c, 3, 3), jnp.float32))
    bn1_g = 1.0 + 0.1 * jax.random.normal(ks[3], (c,), jnp.float32)
    bn1_b = 0.1 * jax.random.normal(ks[4], (c,), jnp.float32)
    bn2_g = 1.0 + 0.1 * jax.random.normal(ks[5], (c,), jnp.float32)
    bn2_b = 0.1 * jax.random.normal(ks[6], (c,), jnp.float32)

    params = prepare_params(conv1_w, bn1_g, bn1_b, conv2_w, bn2_g, bn2_b)

    out = jax.jit(resnet_block_forward)(x, params)
    jax.block_until_ready(out)

    ref = resnet_block_ref(x, conv1_w, bn1_g, bn1_b, conv2_w, bn2_g, bn2_b)
    assert out.shape == (n, c, h, w), out.shape
    err = float(jnp.max(jnp.abs(out - ref)))
    assert err < 2e-2, f"max abs error {err} for shape {(n, c, h, w)}"


if __name__ == "__main__":
    key = jax.random.PRNGKey(0)
    k1, k2 = jax.random.split(key)
    # Main case: batch=2, channels=32, 8x8 spatial -> 128 pixel rows, 128 lanes.
    _run_case(k1, 2, 32, 8, 8)
    # Odd-shaped case (6x9 board, 54 pixels): exercises padded-row BN masking
    # and non-128 roll amounts.
    _run_case(k2, 1, 16, 6, 9)
    print("KERNEL_OK")
</pallas_src>

<mosaic_0001>
module attributes {stable_mosaic.version = 11 : i64} {
  func.func @_resnet_block_kernel(%arg0: memref<128x128xf32, #tpu.memory_space<vmem>>, %arg1: memref<128x8xf32, #tpu.memory_space<vmem>>, %arg2: memref<9x128x128xbf16, #tpu.memory_space<vmem>>, %arg3: memref<1x128xf32, #tpu.memory_space<vmem>>, %arg4: memref<1x128xf32, #tpu.memory_space<vmem>>, %arg5: memref<9x128x128xbf16, #tpu.memory_space<any>>, %arg6: memref<1x128xf32, #tpu.memory_space<vmem>>, %arg7: memref<1x128xf32, #tpu.memory_space<vmem>>, %arg8: memref<128x128xf32, #tpu.memory_space<vmem>>, %arg9: memref<9x128x128xbf16, #tpu.memory_space<vmem>>, %arg10: memref<!tpu.dma_semaphore, #tpu.memory_space<semaphore_mem>>) attributes {dimension_semantics = [], scalar_prefetch = 0 : i64, scratch_operands = 2 : i64, tpu.core_type = #tpu.core_type<tc>} {
    tpu.enqueue_dma source(%arg5 : memref<9x128x128xbf16, #tpu.memory_space<any>>) target(%arg9 : memref<9x128x128xbf16, #tpu.memory_space<vmem>>) target_semaphore(%arg10 : memref<!tpu.dma_semaphore, #tpu.memory_space<semaphore_mem>>)
    %c0 = arith.constant 0 : index
    %c0_0 = arith.constant 0 : index
    %0 = vector.load %arg0[%c0, %c0_0] : memref<128x128xf32, #tpu.memory_space<vmem>>, vector<128x128xf32>
    %c0_1 = arith.constant 0 : index
    %c0_2 = arith.constant 0 : index
    %1 = vector.load %arg1[%c0_1, %c0_2] : memref<128x8xf32, #tpu.memory_space<vmem>>, vector<128x8xf32>
    %2 = vector.extract_strided_slice %1 {offsets = [0, 0], sizes = [128, 1], strides = [1, 1]} : vector<128x8xf32> to vector<128x1xf32>
    %3 = vector.extract_strided_slice %1 {offsets = [0, 1], sizes = [128, 1], strides = [1, 1]} : vector<128x8xf32> to vector<128x1xf32>
    %4 = vector.extract_strided_slice %1 {offsets = [0, 2], sizes = [128, 1], strides = [1, 1]} : vector<128x8xf32> to vector<128x1xf32>
    %5 = vector.extract_strided_slice %1 {offsets = [0, 3], sizes = [128, 1], strides = [1, 1]} : vector<128x8xf32> to vector<128x1xf32>
    %6 = vector.extract_strided_slice %1 {offsets = [0, 4], sizes = [128, 1], strides = [1, 1]} : vector<128x8xf32> to vector<128x1xf32>
    %c1_i32 = arith.constant 1 : i32
    %7 = tpu.dynamic_rotate %0 by %c1_i32 dim 0 : vector<128x128xf32>, i32 -> vector<128x128xf32>
    %8 = vector.broadcast %3 : vector<128x1xf32> to vector<128x128xf32>
    %9 = arith.mulf %7, %8 : vector<128x128xf32>
    %10 = arith.truncf %9 : vector<128x128xf32> to vector<128x128xbf16>
    %11 = arith.truncf %0 : vector<128x128xf32> to vector<128x128xbf16>
    %c127_i32 = arith.constant 127 : i32
    %12 = tpu.dynamic_rotate %0 by %c127_i32 dim 0 : vector<128x128xf32>, i32 -> vector<128x128xf32>
    %13 = vector.broadcast %4 : vector<128x1xf32> to vector<128x128xf32>
    %14 = arith.mulf %12, %13 : vector<128x128xf32>
    %15 = arith.truncf %14 : vector<128x128xf32> to vector<128x128xbf16>
    %c0_3 = arith.constant 0 : index
    %c0_4 = arith.constant 0 : index
    %c0_5 = arith.constant 0 : index
    %16 = vector.load %arg2[%c0_3, %c0_4, %c0_5] : memref<9x128x128xbf16, #tpu.memory_space<vmem>>, vector<1x128x128xbf16>
    %17 = vector.shape_cast %16 : vector<1x128x128xbf16> to vector<128x128xbf16>
    %cst = arith.constant dense<0.000000e+00> : vector<128x128xf32>
    %18 = tpu.matmul %10, %17, %cst {dimension_numbers = #tpu.dot_dimension_numbers<[1], [0], [0], [1], [0, 0, 1, 1], [], []>} : vector<128x128xbf16>, vector<128x128xbf16>, vector<128x128xf32> -> vector<128x128xf32>
    %c1 = arith.constant 1 : index
    %c0_6 = arith.constant 0 : index
    %c0_7 = arith.constant 0 : index
    %19 = vector.load %arg2[%c1, %c0_6, %c0_7] : memref<9x128x128xbf16, #tpu.memory_space<vmem>>, vector<1x128x128xbf16>
    %20 = vector.shape_cast %19 : vector<1x128x128xbf16> to vector<128x128xbf16>
    %cst_8 = arith.constant dense<0.000000e+00> : vector<128x128xf32>
    %21 = tpu.matmul %11, %20, %cst_8 {dimension_numbers = #tpu.dot_dimension_numbers<[1], [0], [0], [1], [0, 0, 1, 1], [], []>} : vector<128x128xbf16>, vector<128x128xbf16>, vector<128x128xf32> -> vector<128x128xf32>
    %22 = arith.addf %18, %21 : vector<128x128xf32>
    %c2 = arith.constant 2 : index
    %c0_9 = arith.constant 0 : index
    %c0_10 = arith.constant 0 : index
    %23 = vector.load %arg2[%c2, %c0_9, %c0_10] : memref<9x128x128xbf16, #tpu.memory_space<vmem>>, vector<1x128x128xbf16>
    %24 = vector.shape_cast %23 : vector<1x128x128xbf16> to vector<128x128xbf16>
    %cst_11 = arith.constant dense<0.000000e+00> : vector<128x128xf32>
    %25 = tpu.matmul %15, %24, %cst_11 {dimension_numbers = #tpu.dot_dimension_numbers<[1], [0], [0], [1], [0, 0, 1, 1], [], []>} : vector<128x128xbf16>, vector<128x128xbf16>, vector<128x128xf32> -> vector<128x128xf32>
    %26 = arith.addf %22, %25 : vector<128x128xf32>
    %c3 = arith.constant 3 : index
    %c0_12 = arith.constant 0 : index
    %c0_13 = arith.constant 0 : index
    %27 = vector.load %arg2[%c3, %c0_12, %c0_13] : memref<9x128x128xbf16, #tpu.memory_space<vmem>>, vector<1x128x128xbf16>
    %28 = vector.shape_cast %27 : vector<1x128x128xbf16> to vector<128x128xbf16>
    %cst_14 = arith.constant dense<0.000000e+00> : vector<128x128xf32>
    %29 = tpu.matmul %10, %28, %cst_14 {dimension_numbers = #tpu.dot_dimension_numbers<[1], [0], [0], [1], [0, 0, 1, 1], [], []>} : vector<128x128xbf16>, vector<128x128xbf16>, vector<128x128xf32> -> vector<128x128xf32>
    %c4 = arith.constant 4 : index
    %c0_15 = arith.constant 0 : index
    %c0_16 = arith.constant 0 : index
    %30 = vector.load %arg2[%c4, %c0_15, %c0_16] : memref<9x128x128xbf16, #tpu.memory_space<vmem>>, vector<1x128x128xbf16>
    %31 = vector.shape_cast %30 : vector<1x128x128xbf16> to vector<128x128xbf16>
    %cst_17 = arith.constant dense<0.000000e+00> : vector<128x128xf32>
    %32 = tpu.matmul %11, %31, %cst_17 {dimension_numbers = #tpu.dot_dimension_numbers<[1], [0], [0], [1], [0, 0, 1, 1], [], []>} : vector<128x128xbf16>, vector<128x128xbf16>, vector<128x128xf32> -> vector<128x128xf32>
    %33 = arith.addf %29, %32 : vector<128x128xf32>
    %c5 = arith.constant 5 : index
    %c0_18 = arith.constant 0 : index
    %c0_19 = arith.constant 0 : index
    %34 = vector.load %arg2[%c5, %c0_18, %c0_19] : memref<9x128x128xbf16, #tpu.memory_space<vmem>>, vector<1x128x128xbf16>
    %35 = vector.shape_cast %34 : vector<1x128x128xbf16> to vector<128x128xbf16>
    %cst_20 = arith.constant dense<0.000000e+00> : vector<128x128xf32>
    %36 = tpu.matmul %15, %35, %cst_20 {dimension_numbers = #tpu.dot_dimension_numbers<[1], [0], [0], [1], [0, 0, 1, 1], [], []>} : vector<128x128xbf16>, vector<128x128xbf16>, vector<128x128xf32> -> vector<128x128xf32>
    %37 = arith.addf %33, %36 : vector<128x128xf32>
    %c6 = arith.constant 6 : index
    %c0_21 = arith.constant 0 : index
    %c0_22 = arith.constant 0 : index
    %38 = vector.load %arg2[%c6, %c0_21, %c0_22] : memref<9x128x128xbf16, #tpu.memory_space<vmem>>, vector<1x128x128xbf16>
    %39 = vector.shape_cast %38 : vector<1x128x128xbf16> to vector<128x128xbf16>
    %cst_23 = arith.constant dense<0.000000e+00> : vector<128x128xf32>
    %40 = tpu.matmul %10, %39, %cst_23 {dimension_numbers = #tpu.dot_dimension_numbers<[1], [0], [0], [1], [0, 0, 1, 1], [], []>} : vector<128x128xbf16>, vector<128x128xbf16>, vector<128x128xf32> -> vector<128x128xf32>
    %c7 = arith.constant 7 : index
    %c0_24 = arith.constant 0 : index
    %c0_25 = arith.constant 0 : index
    %41 = vector.load %arg2[%c7, %c0_24, %c0_25] : memref<9x128x128xbf16, #tpu.memory_space<vmem>>, vector<1x128x128xbf16>
    %42 = vector.shape_cast %41 : vector<1x128x128xbf16> to vector<128x128xbf16>
    %cst_26 = arith.constant dense<0.000000e+00> : vector<128x128xf32>
    %43 = tpu.matmul %11, %42, %cst_26 {dimension_numbers = #tpu.dot_dimension_numbers<[1], [0], [0], [1], [0, 0, 1, 1], [], []>} : vector<128x128xbf16>, vector<128x128xbf16>, vector<128x128xf32> -> vector<128x128xf32>
    %44 = arith.addf %40, %43 : vector<128x128xf32>
    %c8 = arith.constant 8 : index
    %c0_27 = arith.constant 0 : index
    %c0_28 = arith.constant 0 : index
    %45 = vector.load %arg2[%c8, %c0_27, %c0_28] : memref<9x128x128xbf16, #tpu.memory_space<vmem>>, vector<1x128x128xbf16>
    %46 = vector.shape_cast %45 : vector<1x128x128xbf16> to vector<128x128xbf16>
    %cst_29 = arith.constant dense<0.000000e+00> : vector<128x128xf32>
    %47 = tpu.matmul %15, %46, %cst_29 {dimension_numbers = #tpu.dot_dimension_numbers<[1], [0], [0], [1], [0, 0, 1, 1], [], []>} : vector<128x128xbf16>, vector<128x128xbf16>, vector<128x128xf32> -> vector<128x128xf32>
    %48 = arith.addf %44, %47 : vector<128x128xf32>
    %c8_i32 = arith.constant 8 : i32
    %49 = tpu.dynamic_rotate %26 by %c8_i32 dim 0 : vector<128x128xf32>, i32 -> vector<128x128xf32>
    %50 = vector.broadcast %5 : vector<128x1xf32> to vector<128x128xf32>
    %51 = arith.mulf %49, %50 : vector<128x128xf32>
    %52 = arith.addf %51, %37 : vector<128x128xf32>
    %c120_i32 = arith.constant 120 : i32
    %53 = tpu.dynamic_rotate %48 by %c120_i32 dim 0 : vector<128x128xf32>, i32 -> vector<128x128xf32>
    %54 = vector.broadcast %6 : vector<128x1xf32> to vector<128x128xf32>
    %55 = arith.mulf %53, %54 : vector<128x128xf32>
    %56 = arith.addf %52, %55 : vector<128x128xf32>
    %c0_30 = arith.constant 0 : index
    %c0_31 = arith.constant 0 : index
    %57 = vector.load %arg3[%c0_30, %c0_31] : memref<1x128xf32, #tpu.memory_space<vmem>>, vector<1x128xf32>
    %c0_32 = arith.constant 0 : index
    %c0_33 = arith.constant 0 : index
    %58 = vector.load %arg4[%c0_32, %c0_33] : memref<1x128xf32, #tpu.memory_space<vmem>>, vector<1x128xf32>
    %59 = vector.broadcast %2 : vector<128x1xf32> to vector<128x128xf32>
    %60 = arith.mulf %56, %59 : vector<128x128xf32>
    %cst_34 = arith.constant dense<0.000000e+00> : vector<128xf32>
    %61 = vector.multi_reduction <add>, %60, %cst_34 [0] : vector<128x128xf32> to vector<128xf32>
    %62 = vector.shape_cast %61 : vector<128xf32> to vector<1x128xf32>
    %cst_35 = arith.constant 7.812500e-03 : f32
    %63 = vector.broadcast %cst_35 : f32 to vector<1x128xf32>
    %64 = arith.mulf %62, %63 : vector<1x128xf32>
    %65 = arith.mulf %60, %60 : vector<128x128xf32>
    %cst_36 = arith.constant dense<0.000000e+00> : vector<128xf32>
    %66 = vector.multi_reduction <add>, %65, %cst_36 [0] : vector<128x128xf32> to vector<128xf32>
    %67 = vector.shape_cast %66 : vector<128xf32> to vector<1x128xf32>
    %cst_37 = arith.constant 7.812500e-03 : f32
    %68 = vector.broadcast %cst_37 : f32 to vector<1x128xf32>
    %69 = arith.mulf %67, %68 : vector<1x128xf32>
    %70 = arith.mulf %64, %64 : vector<1x128xf32>
    %71 = arith.subf %69, %70 : vector<1x128xf32>
    %cst_38 = arith.constant 9.99999974E-6 : f32
    %72 = vector.broadcast %cst_38 : f32 to vector<1x128xf32>
    %73 = arith.addf %71, %72 : vector<1x128xf32>
    %74 = math.rsqrt %73 : vector<1x128xf32>
    %75 = arith.mulf %57, %74 : vector<1x128xf32>
    %76 = arith.mulf %64, %75 : vector<1x128xf32>
    %77 = arith.subf %58, %76 : vector<1x128xf32>
    %78 = vector.broadcast %75 : vector<1x128xf32> to vector<128x128xf32>
    %79 = arith.mulf %56, %78 : vector<128x128xf32>
    %80 = vector.broadcast %77 : vector<1x128xf32> to vector<128x128xf32>
    %81 = arith.addf %79, %80 : vector<128x128xf32>
    %cst_39 = arith.constant 0.000000e+00 : f32
    %82 = vector.broadcast %cst_39 : f32 to vector<128x128xf32>
    %83 = arith.maximumf %81, %82 : vector<128x128xf32>
    tpu.wait_dma2 semaphore(%arg10 : memref<!tpu.dma_semaphore, #tpu.memory_space<semaphore_mem>>) src(%arg5 : memref<9x128x128xbf16, #tpu.memory_space<any>>) dst(%arg9 : memref<9x128x128xbf16, #tpu.memory_space<vmem>>)
    %c1_i32_40 = arith.constant 1 : i32
    %84 = tpu.dynamic_rotate %83 by %c1_i32_40 dim 0 : vector<128x128xf32>, i32 -> vector<128x128xf32>
    %85 = vector.broadcast %3 : vector<128x1xf32> to vector<128x128xf32>
    %86 = arith.mulf %84, %85 : vector<128x128xf32>
    %87 = arith.truncf %86 : vector<128x128xf32> to vector<128x128xbf16>
    %88 = arith.truncf %83 : vector<128x128xf32> to vector<128x128xbf16>
    %c127_i32_41 = arith.constant 127 : i32
    %89 = tpu.dynamic_rotate %83 by %c127_i32_41 dim 0 : vector<128x128xf32>, i32 -> vector<128x128xf32>
    %90 = vector.broadcast %4 : vector<128x1xf32> to vector<128x128xf32>
    %91 = arith.mulf %89, %90 : vector<128x128xf32>
    %92 = arith.truncf %91 : vector<128x128xf32> to vector<128x128xbf16>
    %c0_42 = arith.constant 0 : index
    %c0_43 = arith.constant 0 : index
    %c0_44 = arith.constant 0 : index
    %93 = vector.load %arg9[%c0_42, %c0_43, %c0_44] : memref<9x128x128xbf16, #tpu.memory_space<vmem>>, vector<1x128x128xbf16>
    %94 = vector.shape_cast %93 : vector<1x128x128xbf16> to vector<128x128xbf16>
    %cst_45 = arith.constant dense<0.000000e+00> : vector<128x128xf32>
    %95 = tpu.matmul %87, %94, %cst_45 {dimension_numbers = #tpu.dot_dimension_numbers<[1], [0], [0], [1], [0, 0, 1, 1], [], []>} : vector<128x128xbf16>, vector<128x128xbf16>, vector<128x128xf32> -> vector<128x128xf32>
    %c1_46 = arith.constant 1 : index
    %c0_47 = arith.constant 0 : index
    %c0_48 = arith.constant 0 : index
    %96 = vector.load %arg9[%c1_46, %c0_47, %c0_48] : memref<9x128x128xbf16, #tpu.memory_space<vmem>>, vector<1x128x128xbf16>
    %97 = vector.shape_cast %96 : vector<1x128x128xbf16> to vector<128x128xbf16>
    %cst_49 = arith.constant dense<0.000000e+00> : vector<128x128xf32>
    %98 = tpu.matmul %88, %97, %cst_49 {dimension_numbers = #tpu.dot_dimension_numbers<[1], [0], [0], [1], [0, 0, 1, 1], [], []>} : vector<128x128xbf16>, vector<128x128xbf16>, vector<128x128xf32> -> vector<128x128xf32>
    %99 = arith.addf %95, %98 : vector<128x128xf32>
    %c2_50 = arith.constant 2 : index
    %c0_51 = arith.constant 0 : index
    %c0_52 = arith.constant 0 : index
    %100 = vector.load %arg9[%c2_50, %c0_51, %c0_52] : memref<9x128x128xbf16, #tpu.memory_space<vmem>>, vector<1x128x128xbf16>
    %101 = vector.shape_cast %100 : vector<1x128x128xbf16> to vector<128x128xbf16>
    %cst_53 = arith.constant dense<0.000000e+00> : vector<128x128xf32>
    %102 = tpu.matmul %92, %101, %cst_53 {dimension_numbers = #tpu.dot_dimension_numbers<[1], [0], [0], [1], [0, 0, 1, 1], [], []>} : vector<128x128xbf16>, vector<128x128xbf16>, vector<128x128xf32> -> vector<128x128xf32>
    %103 = arith.addf %99, %102 : vector<128x128xf32>
    %c3_54 = arith.constant 3 : index
    %c0_55 = arith.constant 0 : index
    %c0_56 = arith.constant 0 : index
    %104 = vector.load %arg9[%c3_54, %c0_55, %c0_56] : memref<9x128x128xbf16, #tpu.memory_space<vmem>>, vector<1x128x128xbf16>
    %105 = vector.shape_cast %104 : vector<1x128x128xbf16> to vector<128x128xbf16>
    %cst_57 = arith.constant dense<0.000000e+00> : vector<128x128xf32>
    %106 = tpu.matmul %87, %105, %cst_57 {dimension_numbers = #tpu.dot_dimension_numbers<[1], [0], [0], [1], [0, 0, 1, 1], [], []>} : vector<128x128xbf16>, vector<128x128xbf16>, vector<128x128xf32> -> vector<128x128xf32>
    %c4_58 = arith.constant 4 : index
    %c0_59 = arith.constant 0 : index
    %c0_60 = arith.constant 0 : index
    %107 = vector.load %arg9[%c4_58, %c0_59, %c0_60] : memref<9x128x128xbf16, #tpu.memory_space<vmem>>, vector<1x128x128xbf16>
    %108 = vector.shape_cast %107 : vector<1x128x128xbf16> to vector<128x128xbf16>
    %cst_61 = arith.constant dense<0.000000e+00> : vector<128x128xf32>
    %109 = tpu.matmul %88, %108, %cst_61 {dimension_numbers = #tpu.dot_dimension_numbers<[1], [0], [0], [1], [0, 0, 1, 1], [], []>} : vector<128x128xbf16>, vector<128x128xbf16>, vector<128x128xf32> -> vector<128x128xf32>
    %110 = arith.addf %106, %109 : vector<128x128xf32>
    %c5_62 = arith.constant 5 : index
    %c0_63 = arith.constant 0 : index
    %c0_64 = arith.constant 0 : index
    %111 = vector.load %arg9[%c5_62, %c0_63, %c0_64] : memref<9x128x128xbf16, #tpu.memory_space<vmem>>, vector<1x128x128xbf16>
    %112 = vector.shape_cast %111 : vector<1x128x128xbf16> to vector<128x128xbf16>
    %cst_65 = arith.constant dense<0.000000e+00> : vector<128x128xf32>
    %113 = tpu.matmul %92, %112, %cst_65 {dimension_numbers = #tpu.dot_dimension_numbers<[1], [0], [0], [1], [0, 0, 1, 1], [], []>} : vector<128x128xbf16>, vector<128x128xbf16>, vector<128x128xf32> -> vector<128x128xf32>
    %114 = arith.addf %110, %113 : vector<128x128xf32>
    %c6_66 = arith.constant 6 : index
    %c0_67 = arith.constant 0 : index
    %c0_68 = arith.constant 0 : index
    %115 = vector.load %arg9[%c6_66, %c0_67, %c0_68] : memref<9x128x128xbf16, #tpu.memory_space<vmem>>, vector<1x128x128xbf16>
    %116 = vector.shape_cast %115 : vector<1x128x128xbf16> to vector<128x128xbf16>
    %cst_69 = arith.constant dense<0.000000e+00> : vector<128x128xf32>
    %117 = tpu.matmul %87, %116, %cst_69 {dimension_numbers = #tpu.dot_dimension_numbers<[1], [0], [0], [1], [0, 0, 1, 1], [], []>} : vector<128x128xbf16>, vector<128x128xbf16>, vector<128x128xf32> -> vector<128x128xf32>
    %c7_70 = arith.constant 7 : index
    %c0_71 = arith.constant 0 : index
    %c0_72 = arith.constant 0 : index
    %118 = vector.load %arg9[%c7_70, %c0_71, %c0_72] : memref<9x128x128xbf16, #tpu.memory_space<vmem>>, vector<1x128x128xbf16>
    %119 = vector.shape_cast %118 : vector<1x128x128xbf16> to vector<128x128xbf16>
    %cst_73 = arith.constant dense<0.000000e+00> : vector<128x128xf32>
    %120 = tpu.matmul %88, %119, %cst_73 {dimension_numbers = #tpu.dot_dimension_numbers<[1], [0], [0], [1], [0, 0, 1, 1], [], []>} : vector<128x128xbf16>, vector<128x128xbf16>, vector<128x128xf32> -> vector<128x128xf32>
    %121 = arith.addf %117, %120 : vector<128x128xf32>
    %c8_74 = arith.constant 8 : index
    %c0_75 = arith.constant 0 : index
    %c0_76 = arith.constant 0 : index
    %122 = vector.load %arg9[%c8_74, %c0_75, %c0_76] : memref<9x128x128xbf16, #tpu.memory_space<vmem>>, vector<1x128x128xbf16>
    %123 = vector.shape_cast %122 : vector<1x128x128xbf16> to vector<128x128xbf16>
    %cst_77 = arith.constant dense<0.000000e+00> : vector<128x128xf32>
    %124 = tpu.matmul %92, %123, %cst_77 {dimension_numbers = #tpu.dot_dimension_numbers<[1], [0], [0], [1], [0, 0, 1, 1], [], []>} : vector<128x128xbf16>, vector<128x128xbf16>, vector<128x128xf32> -> vector<128x128xf32>
    %125 = arith.addf %121, %124 : vector<128x128xf32>
    %c8_i32_78 = arith.constant 8 : i32
    %126 = tpu.dynamic_rotate %103 by %c8_i32_78 dim 0 : vector<128x128xf32>, i32 -> vector<128x128xf32>
    %127 = vector.broadcast %5 : vector<128x1xf32> to vector<128x128xf32>
    %128 = arith.mulf %126, %127 : vector<128x128xf32>
    %129 = arith.addf %128, %114 : vector<128x128xf32>
    %c120_i32_79 = arith.constant 120 : i32
    %130 = tpu.dynamic_rotate %125 by %c120_i32_79 dim 0 : vector<128x128xf32>, i32 -> vector<128x128xf32>
    %131 = vector.broadcast %6 : vector<128x1xf32> to vector<128x128xf32>
    %132 = arith.mulf %130, %131 : vector<128x128xf32>
    %133 = arith.addf %129, %132 : vector<128x128xf32>
    %c0_80 = arith.constant 0 : index
    %c0_81 = arith.constant 0 : index
    %134 = vector.load %arg6[%c0_80, %c0_81] : memref<1x128xf32, #tpu.memory_space<vmem>>, vector<1x128xf32>
    %c0_82 = arith.constant 0 : index
    %c0_83 = arith.constant 0 : index
    %135 = vector.load %arg7[%c0_82, %c0_83] : memref<1x128xf32, #tpu.memory_space<vmem>>, vector<1x128xf32>
    %136 = vector.broadcast %2 : vector<128x1xf32> to vector<128x128xf32>
    %137 = arith.mulf %133, %136 : vector<128x128xf32>
    %cst_84 = arith.constant dense<0.000000e+00> : vector<128xf32>
    %138 = vector.multi_reduction <add>, %137, %cst_84 [0] : vector<128x128xf32> to vector<128xf32>
    %139 = vector.shape_cast %138 : vector<128xf32> to vector<1x128xf32>
    %cst_85 = arith.constant 7.812500e-03 : f32
    %140 = vector.broadcast %cst_85 : f32 to vector<1x128xf32>
    %141 = arith.mulf %139, %140 : vector<1x128xf32>
    %142 = arith.mulf %137, %137 : vector<128x128xf32>
    %cst_86 = arith.constant dense<0.000000e+00> : vector<128xf32>
    %143 = vector.multi_reduction <add>, %142, %cst_86 [0] : vector<128x128xf32> to vector<128xf32>
    %144 = vector.shape_cast %143 : vector<128xf32> to vector<1x128xf32>
    %cst_87 = arith.constant 7.812500e-03 : f32
    %145 = vector.broadcast %cst_87 : f32 to vector<1x128xf32>
    %146 = arith.mulf %144, %145 : vector<1x128xf32>
    %147 = arith.mulf %141, %141 : vector<1x128xf32>
    %148 = arith.subf %146, %147 : vector<1x128xf32>
    %cst_88 = arith.constant 9.99999974E-6 : f32
    %149 = vector.broadcast %cst_88 : f32 to vector<1x128xf32>
    %150 = arith.addf %148, %149 : vector<1x128xf32>
    %151 = math.rsqrt %150 : vector<1x128xf32>
    %152 = arith.mulf %134, %151 : vector<1x128xf32>
    %153 = arith.mulf %141, %152 : vector<1x128xf32>
    %154 = arith.subf %135, %153 : vector<1x128xf32>
    %155 = vector.broadcast %152 : vector<1x128xf32> to vector<128x128xf32>
    %156 = arith.mulf %133, %155 : vector<128x128xf32>
    %157 = vector.broadcast %154 : vector<1x128xf32> to vector<128x128xf32>
    %158 = arith.addf %156, %157 : vector<128x128xf32>
    %159 = arith.addf %158, %0 : vector<128x128xf32>
    %cst_89 = arith.constant 0.000000e+00 : f32
    %160 = vector.broadcast %cst_89 : f32 to vector<128x128xf32>
    %161 = arith.maximumf %159, %160 : vector<128x128xf32>
    %c0_90 = arith.constant 0 : index
    %c0_91 = arith.constant 0 : index
    %162 = vector.load %arg8[%c0_90, %c0_91] : memref<128x128xf32, #tpu.memory_space<vmem>>, vector<128x128xf32>
    tpu.vector_store %arg8[%c0_90, %c0_91], %161 {strides = array<i32>} : memref<128x128xf32, #tpu.memory_space<vmem>>, vector<128x128xf32>,
    return
  }
}

</mosaic_0001>

<llo_original>
// kernel: resnet_block_forward.1
$region0: #{resnet_block_forward.1}
  #allocation0 [shape = 'u32[]', space=smem, size = 0x4, offset = 0x4, fixed_abs, tag = 'smem constant byte address 0x4 - core index']
  #allocation1 [shape = 'u32[144,128]{1,0:T(1,128)}', space=vmem, size = 0x12000, scoped, tag = 'internal scratch']
  #allocation2 [shape = 'bf16[9,128,128]{2,1,0:T(8,128)(2,1)}', space=vmem, size = 0x48000, scoped, tag = 'scratch operand']
  #allocation3 [shape = 's32[1]{0}', space=sflag, size = 0x4, scoped, tag = 'scratch operand']
  #allocation8 [shape = 's32[]', space=sflag, size = 0x4, offset = 0, fixed_abs, tag = 'sflag constant byte address 0x0 - dummy sync flag']
  #allocation9 [shape = 's32[]', space=sflag, size = 0x4, offset = 0, fixed_abs, tag = 'sflag constant byte address 0x0 - dummy sync flag']
  #allocation10 [shape = 'u32[]', space=smem, size = 0x4, offset = 0x44, fixed_abs, tag = 'smem constant byte address 0x44 - assertion arg 0']
  #allocation11 [shape = 'u32[]', space=smem, size = 0x4, offset = 0x48, fixed_abs, tag = 'smem constant byte address 0x48 - assertion arg 1']
  %s0 = inlined_call_operand.vmem [shape: f32[128,128], index: 0, kind: input, shape index: {}]
  %s1 = inlined_call_operand.vmem [shape: f32[128,8], index: 1, kind: input, shape index: {}]
  %s2 = inlined_call_operand.hbm [shape: bf16[9,128,128], index: 2, kind: input, shape index: {}]
  %s3 = inlined_call_operand.vmem [shape: f32[1,128], index: 3, kind: input, shape index: {}]
  %s4 = inlined_call_operand.vmem [shape: f32[1,128], index: 4, kind: input, shape index: {}]
  %s5 = inlined_call_operand.hbm [shape: bf16[9,128,128], index: 5, kind: input, shape index: {}]
  %s6 = inlined_call_operand.vmem [shape: f32[1,128], index: 6, kind: input, shape index: {}]
  %s7 = inlined_call_operand.vmem [shape: f32[1,128], index: 7, kind: input, shape index: {}]
  %s8 = inlined_call_operand.hbm [shape: f32[128,128], index: 8, kind: output, shape index: {}]
  %s9 = sld [smem:[#allocation0]]
  $region46: #{resnet_block_forward.1} parent=0
    _
  %s11 = ssub.s32 1, %s9
  %s12 = scalar_select 0, %s11, %s9
  $region1: #{resnet_block_forward.1} parent=0
    #allocation4 [shape = 'u8[294912]{0}', space=vmem, size = 0x48000, scoped, tag = 'input window, operand 2, single buffered']
    #allocation5 [shape = 's32[1]{0}', space=sflag, size = 0x4, scoped, tag = 'scoped memory for resnet_block_forward.1']
    #allocation6 [shape = 's32[1]{0}', space=sflag, size = 0x4, scoped, tag = 'scoped memory for resnet_block_forward.1']
    #allocation7 [shape = 'u8[65536]{0}', space=vmem, size = 0x10000, scoped, tag = 'output window, operand 0, single buffered']
    %13 = vsyncpa [#allocation5], 0
    %14 = vsyncpa [#allocation6], 0
    // Predicated region
    $region2: #{resnet_block_forward.1} parent=1 // pred_check
      _
    $region3: #{resnet_block_forward.1} parent=1 // pred_check_branch
      %16 = sbr.rel (0) target = $region5
    $region4: #{resnet_block_forward.1} parent=1 // pred_region
      _
    $region5: #{resnet_block_forward.1} parent=1 // pred_fallthru
      _
    // Predicated region
    $region6: #{resnet_block_forward.1} parent=1 // pred_check
      _
    $region7: #{resnet_block_forward.1} parent=1 // pred_check_branch
      %18 = sbr.rel (0) target = $region9
    $region8: #{resnet_block_forward.1} parent=1 // pred_region
      _
    $region9: #{resnet_block_forward.1} parent=1 // pred_fallthru
      _
    // Predicated region
    $region10: #{resnet_block_forward.1} parent=1 // pred_check
      _
    $region11: #{resnet_block_forward.1} parent=1 // pred_check_branch
      %20 = sbr.rel (0) target = $region13
    $region12: #{resnet_block_forward.1} parent=1 // pred_region
      %s22 = ssub.s32 9216, 9216
      %23 = vsyncadd [#allocation5], %s22
      %s24 = sshll.u32 [#allocation4], 4
      %s25 = int_to_ptr.vmem [resolvable:$true] %s24
      %30 = dma.hbm_to_vmem [thread:$0]  %s2, 9216, %s25, [#allocation5], 64, 64, 4
    $region13: #{resnet_block_forward.1} parent=1 // pred_fallthru
      _
    // Predicated region
    $region14: #{resnet_block_forward.1} parent=1 // pred_check
      _
    $region15: #{resnet_block_forward.1} parent=1 // pred_check_branch
      %32 = sbr.rel (0) target = $region17
    $region16: #{resnet_block_forward.1} parent=1 // pred_region
      _
    $region17: #{resnet_block_forward.1} parent=1 // pred_fallthru
      _
    // Predicated region
    $region18: #{resnet_block_forward.1} parent=1 // pred_check
      _
    $region19: #{resnet_block_forward.1} parent=1 // pred_check_branch
      %34 = sbr.rel (0) target = $region21
    $region20: #{resnet_block_forward.1} parent=1 // pred_region
      _
    $region21: #{resnet_block_forward.1} parent=1 // pred_fallthru
      _
    // Predicated region
    $region22: #{resnet_block_forward.1} parent=1 // pred_check
      _
    $region23: #{resnet_block_forward.1} parent=1 // pred_check_branch
      %36 = sbr.rel (0) target = $region25
    $region24: #{resnet_block_forward.1} parent=1 // pred_region
      _
    $region25: #{resnet_block_forward.1} parent=1 // pred_fallthru
      _
    // Predicated region
    $region26: #{resnet_block_forward.1} parent=1 // pred_check
      _
    $region27: #{resnet_block_forward.1} parent=1 // pred_check_branch
      %38 = sbr.rel (0) target = $region29
    $region28: #{resnet_block_forward.1} parent=1 // pred_region
      _
    $region29: #{resnet_block_forward.1} parent=1 // pred_fallthru
      _
    // Predicated region
    $region30: #{resnet_block_forward.1} parent=1 // pred_check
      _
    $region31: #{resnet_block_forward.1} parent=1 // pred_check_branch
      %40 = sbr.rel (0) target = $region33
    $region32: #{resnet_block_forward.1} parent=1 // pred_region
      %41 = dma.done [#allocation5], 9216
    $region33: #{resnet_block_forward.1} parent=1 // pred_fallthru
      _
    // Predicated region
    $region34: #{resnet_block_forward.1} parent=1 // pred_check
      _
    $region35: #{resnet_block_forward.1} parent=1 // pred_check_branch
      %44 = sbr.rel target = $region37
    $region36: #{resnet_block_forward.1} parent=1 // pred_region
      %45 = sst [smem:[#allocation10]] [#allocation9]
      %46 = sst [smem:[#allocation11]] [#allocation8]
    $region37: #{resnet_block_forward.1} parent=1 // pred_fallthru
      _
    %48 = shalt.err (0)
    %s50 = sshll.u32 [#allocation2], 4
    %s51 = int_to_ptr.vmem [resolvable:$true] %s50
    %53 = dma.hbm_to_vmem [thread:$0]  %s5, 9216, %s51, [#allocation3]
    %v54 = vld [vmem:[%s0] sm:$0xff]
    %v55 = vld [vmem:[%s0 + $0x8] sm:$0xff]
    %v56 = vld [vmem:[%s0 + $0x10] sm:$0xff]
    %v57 = vld [vmem:[%s0 + $0x18] sm:$0xff]
    %v58 = vld [vmem:[%s0 + $0x20] sm:$0xff]
    %v59 = vld [vmem:[%s0 + $0x28] sm:$0xff]
    %v60 = vld [vmem:[%s0 + $0x30] sm:$0xff]
    %v61 = vld [vmem:[%s0 + $0x38] sm:$0xff]
    %v62 = vld [vmem:[%s0 + $0x40] sm:$0xff]
    %v63 = vld [vmem:[%s0 + $0x48] sm:$0xff]
    %v64 = vld [vmem:[%s0 + $0x50] sm:$0xff]
    %v65 = vld [vmem:[%s0 + $0x58] sm:$0xff]
    %v66 = vld [vmem:[%s0 + $0x60] sm:$0xff]
    %v67 = vld [vmem:[%s0 + $0x68] sm:$0xff]
    %v68 = vld [vmem:[%s0 + $0x70] sm:$0xff]
    %v69 = vld [vmem:[%s0 + $0x78] sm:$0xff]
    %v70 = vld [vmem:[%s1] sm:$0xff]
    %v71 = vld [vmem:[%s1 + $0x8] sm:$0xff]
    %v72 = vld [vmem:[%s1 + $0x10] sm:$0xff]
    %v73 = vld [vmem:[%s1 + $0x18] sm:$0xff]
    %v74 = vld [vmem:[%s1 + $0x20] sm:$0xff]
    %v75 = vld [vmem:[%s1 + $0x28] sm:$0xff]
    %v76 = vld [vmem:[%s1 + $0x30] sm:$0xff]
    %v77 = vld [vmem:[%s1 + $0x38] sm:$0xff]
    %v78 = vld [vmem:[%s1 + $0x40] sm:$0xff]
    %v79 = vld [vmem:[%s1 + $0x48] sm:$0xff]
    %v80 = vld [vmem:[%s1 + $0x50] sm:$0xff]
    %v81 = vld [vmem:[%s1 + $0x58] sm:$0xff]
    %v82 = vld [vmem:[%s1 + $0x60] sm:$0xff]
    %v83 = vld [vmem:[%s1 + $0x68] sm:$0xff]
    %v84 = vld [vmem:[%s1 + $0x70] sm:$0xff]
    %v85 = vld [vmem:[%s1 + $0x78] sm:$0xff]
    %v86 = vrot.slane %v54, 7
    %v87 = vrot.slane %v55, 7
    %v88 = vrot.slane %v56, 7
    %v89 = vrot.slane %v57, 7
    %v90 = vrot.slane %v58, 7
    %v91 = vrot.slane %v59, 7
    %v92 = vrot.slane %v60, 7
    %v93 = vrot.slane %v61, 7
    %v94 = vrot.slane %v62, 7
    %v95 = vrot.slane %v63, 7
    %v96 = vrot.slane %v64, 7
    %v97 = vrot.slane %v65, 7
    %v98 = vrot.slane %v66, 7
    %v99 = vrot.slane %v67, 7
    %v100 = vrot.slane %v68, 7
    %v101 = vrot.slane %v69, 7
    %v102 = vlaneseq
    %v103 = vshrl.u32 %v102, 7
    %vm104 = vcmp.lt.s32.totalorder %v103, 1
    %v105 = vsel %vm104, %v100, %v101
    %v106 = vsel %vm104, %v99, %v100
    %v107 = vsel %vm104, %v98, %v99
    %v108 = vsel %vm104, %v97, %v98
    %v109 = vsel %vm104, %v96, %v97
    %v110 = vsel %vm104, %v95, %v96
    %v111 = vsel %vm104, %v94, %v95
    %v112 = vsel %vm104, %v93, %v94
    %v113 = vsel %vm104, %v92, %v93
    %v114 = vsel %vm104, %v91, %v92
    %v115 = vsel %vm104, %v90, %v91
    %v116 = vsel %vm104, %v89, %v90
    %v117 = vsel %vm104, %v88, %v89
    %v118 = vsel %vm104, %v87, %v88
    %v119 = vsel %vm104, %v86, %v87
    %v120 = vsel %vm104, %v101, %v86
    %122 = vset.pattern.permute.xlu0 1
    %123 = vperm.xlu0 %122, %v70
    %v124 = vpop.permute.xlu0 %123
    %127 = vset.pattern.permute.xlu0 1
    %128 = vperm.xlu0 %127, %v71
    %v129 = vpop.permute.xlu0 %128
    %132 = vset.pattern.permute.xlu0 1
    %133 = vperm.xlu0 %132, %v72
    %v134 = vpop.permute.xlu0 %133
    %137 = vset.pattern.permute.xlu0 1
    %138 = vperm.xlu0 %137, %v73
    %v139 = vpop.permute.xlu0 %138
    %142 = vset.pattern.permute.xlu0 1
    %143 = vperm.xlu0 %142, %v74
    %v144 = vpop.permute.xlu0 %143
    %147 = vset.pattern.permute.xlu0 1
    %148 = vperm.xlu0 %147, %v75
    %v149 = vpop.permute.xlu0 %148
    %152 = vset.pattern.permute.xlu0 1
    %153 = vperm.xlu0 %152, %v76
    %v154 = vpop.permute.xlu0 %153
    %157 = vset.pattern.permute.xlu0 1
    %158 = vperm.xlu0 %157, %v77
    %v159 = vpop.permute.xlu0 %158
    %162 = vset.pattern.permute.xlu0 1
    %163 = vperm.xlu0 %162, %v78
    %v164 = vpop.permute.xlu0 %163
    %167 = vset.pattern.permute.xlu0 1
    %168 = vperm.xlu0 %167, %v79
    %v169 = vpop.permute.xlu0 %168
    %172 = vset.pattern.permute.xlu0 1
    %173 = vperm.xlu0 %172, %v80
    %v174 = vpop.permute.xlu0 %173
    %177 = vset.pattern.permute.xlu0 1
    %178 = vperm.xlu0 %177, %v81
    %v179 = vpop.permute.xlu0 %178
    %182 = vset.pattern.permute.xlu0 1
    %183 = vperm.xlu0 %182, %v82
    %v184 = vpop.permute.xlu0 %183
    %187 = vset.pattern.permute.xlu0 1
    %188 = vperm.xlu0 %187, %v83
    %v189 = vpop.permute.xlu0 %188
    %192 = vset.pattern.permute.xlu0 1
    %193 = vperm.xlu0 %192, %v84
    %v194 = vpop.permute.xlu0 %193
    %197 = vset.pattern.permute.xlu0 1
    %198 = vperm.xlu0 %197, %v85
    %v199 = vpop.permute.xlu0 %198
    %v201 = vmul.f32 %v120, %v124
    %v202 = vmul.f32 %v119, %v129
    %v203 = vmul.f32 %v118, %v134
    %v204 = vmul.f32 %v117, %v139
    %v205 = vmul.f32 %v116, %v144
    %v206 = vmul.f32 %v115, %v149
    %v207 = vmul.f32 %v114, %v154
    %v208 = vmul.f32 %v113, %v159
    %v209 = vmul.f32 %v112, %v164
    %v210 = vmul.f32 %v111, %v169
    %v211 = vmul.f32 %v110, %v174
    %v212 = vmul.f32 %v109, %v179
    %v213 = vmul.f32 %v108, %v184
    %v214 = vmul.f32 %v107, %v189
    %v215 = vmul.f32 %v106, %v194
    %v216 = vmul.f32 %v105, %v199
    %v217 = vpack.c.bf16 %v202, %v201
    %v218 = vpack.c.bf16 %v204, %v203
    %v219 = vpack.c.bf16 %v206, %v205
    %v220 = vpack.c.bf16 %v208, %v207
    %v221 = vpack.c.bf16 %v210, %v209
    %v222 = vpack.c.bf16 %v212, %v211
    %v223 = vpack.c.bf16 %v214, %v213
    %v224 = vpack.c.bf16 %v216, %v215
    %v225 = vpack.c.bf16 %v55, %v54
    %v226 = vpack.c.bf16 %v57, %v56
    %v227 = vpack.c.bf16 %v59, %v58
    %v228 = vpack.c.bf16 %v61, %v60
    %v229 = vpack.c.bf16 %v63, %v62
    %v230 = vpack.c.bf16 %v65, %v64
    %v231 = vpack.c.bf16 %v67, %v66
    %v232 = vpack.c.bf16 %v69, %v68
    %v233 = vrot.slane %v54, 1
    %v234 = vrot.slane %v55, 1
    %v235 = vrot.slane %v56, 1
    %v236 = vrot.slane %v57, 1
    %v237 = vrot.slane %v58, 1
    %v238 = vrot.slane %v59, 1
    %v239 = vrot.slane %v60, 1
    %v240 = vrot.slane %v61, 1
    %v241 = vrot.slane %v62, 1
    %v242 = vrot.slane %v63, 1
    %v243 = vrot.slane %v64, 1
    %v244 = vrot.slane %v65, 1
    %v245 = vrot.slane %v66, 1
    %v246 = vrot.slane %v67, 1
    %v247 = vrot.slane %v68, 1
    %v248 = vrot.slane %v69, 1
    %vm249 = vcmp.lt.s32.totalorder %v103, 7
    %v250 = vsel %vm249, %v247, %v248
    %v251 = vsel %vm249, %v246, %v247
    %v252 = vsel %vm249, %v245, %v246
    %v253 = vsel %vm249, %v244, %v245
    %v254 = vsel %vm249, %v243, %v244
    %v255 = vsel %vm249, %v242, %v243
    %v256 = vsel %vm249, %v241, %v242
    %v257 = vsel %vm249, %v240, %v241
    %v258 = vsel %vm249, %v239, %v240
    %v259 = vsel %vm249, %v238, %v239
    %v260 = vsel %vm249, %v237, %v238
    %v261 = vsel %vm249, %v236, %v237
    %v262 = vsel %vm249, %v235, %v236
    %v263 = vsel %vm249, %v234, %v235
    %v264 = vsel %vm249, %v233, %v234
    %v265 = vsel %vm249, %v248, %v233
    %266 = vset.pattern.permute.xlu0 2
    %267 = vperm.xlu0 %266, %v70
    %v268 = vpop.permute.xlu0 %267
    %270 = vset.pattern.permute.xlu0 2
    %271 = vperm.xlu0 %270, %v71
    %v272 = vpop.permute.xlu0 %271
    %274 = vset.pattern.permute.xlu0 2
    %275 = vperm.xlu0 %274, %v72
    %v276 = vpop.permute.xlu0 %275
    %278 = vset.pattern.permute.xlu0 2
    %279 = vperm.xlu0 %278, %v73
    %v280 = vpop.permute.xlu0 %279
    %282 = vset.pattern.permute.xlu0 2
    %283 = vperm.xlu0 %282, %v74
    %v284 = vpop.permute.xlu0 %283
    %286 = vset.pattern.permute.xlu0 2
    %287 = vperm.xlu0 %286, %v75
    %v288 = vpop.permute.xlu0 %287
    %290 = vset.pattern.permute.xlu0 2
    %291 = vperm.xlu0 %290, %v76
    %v292 = vpop.permute.xlu0 %291
    %294 = vset.pattern.permute.xlu0 2
    %295 = vperm.xlu0 %294, %v77
    %v296 = vpop.permute.xlu0 %295
    %298 = vset.pattern.permute.xlu0 2
    %299 = vperm.xlu0 %298, %v78
    %v300 = vpop.permute.xlu0 %299
    %302 = vset.pattern.permute.xlu0 2
    %303 = vperm.xlu0 %302, %v79
    %v304 = vpop.permute.xlu0 %303
    %306 = vset.pattern.permute.xlu0 2
    %307 = vperm.xlu0 %306, %v80
    %v308 = vpop.permute.xlu0 %307
    %310 = vset.pattern.permute.xlu0 2
    %311 = vperm.xlu0 %310, %v81
    %v312 = vpop.permute.xlu0 %311
    %314 = vset.pattern.permute.xlu0 2
    %315 = vperm.xlu0 %314, %v82
    %v316 = vpop.permute.xlu0 %315
    %318 = vset.pattern.permute.xlu0 2
    %319 = vperm.xlu0 %318, %v83
    %v320 = vpop.permute.xlu0 %319
    %322 = vset.pattern.permute.xlu0 2
    %323 = vperm.xlu0 %322, %v84
    %v324 = vpop.permute.xlu0 %323
    %326 = vset.pattern.permute.xlu0 2
    %327 = vperm.xlu0 %326, %v85
    %v328 = vpop.permute.xlu0 %327
    %v330 = vmul.f32 %v264, %v268
    %v331 = vmul.f32 %v263, %v272
    %v332 = vmul.f32 %v262, %v276
    %v333 = vmul.f32 %v261, %v280
    %v334 = vmul.f32 %v260, %v284
    %v335 = vmul.f32 %v259, %v288
    %v336 = vmul.f32 %v258, %v292
    %v337 = vmul.f32 %v257, %v296
    %v338 = vmul.f32 %v256, %v300
    %v339 = vmul.f32 %v255, %v304
    %v340 = vmul.f32 %v254, %v308
    %v341 = vmul.f32 %v253, %v312
    %v342 = vmul.f32 %v252, %v316
    %v343 = vmul.f32 %v251, %v320
    %v344 = vmul.f32 %v250, %v324
    %v345 = vmul.f32 %v265, %v328
    %v346 = vpack.c.bf16 %v331, %v330
    %v347 = vpack.c.bf16 %v333, %v332
    %v348 = vpack.c.bf16 %v335, %v334
    %v349 = vpack.c.bf16 %v337, %v336
    %v350 = vpack.c.bf16 %v339, %v338
    %v351 = vpack.c.bf16 %v341, %v340
    %v352 = vpack.c.bf16 %v343, %v342
    %v353 = vpack.c.bf16 %v345, %v344
    %v354 = vld [vmem:[#allocation4] sm:$0xf]
    %v355 = vld [vmem:[#allocation4 + $0x4] sm:$0xf]
    %v356 = vld [vmem:[#allocation4 + $0x8] sm:$0xf]
    %v357 = vld [vmem:[#allocation4 + $0xc] sm:$0xf]
    %v358 = vld [vmem:[#allocation4 + $0x10] sm:$0xf]
    %v359 = vld [vmem:[#allocation4 + $0x14] sm:$0xf]
    %v360 = vld [vmem:[#allocation4 + $0x18] sm:$0xf]
    %v361 = vld [vmem:[#allocation4 + $0x1c] sm:$0xf]
    %v362 = vld [vmem:[#allocation4 + $0x20] sm:$0xf]
    %v363 = vld [vmem:[#allocation4 + $0x24] sm:$0xf]
    %v364 = vld [vmem:[#allocation4 + $0x28] sm:$0xf]
    %v365 = vld [vmem:[#allocation4 + $0x2c] sm:$0xf]
    %v366 = vld [vmem:[#allocation4 + $0x30] sm:$0xf]
    %v367 = vld [vmem:[#allocation4 + $0x34] sm:$0xf]
    %v368 = vld [vmem:[#allocation4 + $0x38] sm:$0xf]
    %v369 = vld [vmem:[#allocation4 + $0x3c] sm:$0xf]
    %s370 = scalar_lea.vmem [#allocation4], 64
    %v371 = vld [vmem:[%s370] sm:$0xf]
    %v372 = vld [vmem:[%s370 + $0x4] sm:$0xf]
    %v373 = vld [vmem:[%s370 + $0x8] sm:$0xf]
    %v374 = vld [vmem:[%s370 + $0xc] sm:$0xf]
    %v375 = vld [vmem:[%s370 + $0x10] sm:$0xf]
    %v376 = vld [vmem:[%s370 + $0x14] sm:$0xf]
    %v377 = vld [vmem:[%s370 + $0x18] sm:$0xf]
    %v378 = vld [vmem:[%s370 + $0x1c] sm:$0xf]
    %v379 = vld [vmem:[%s370 + $0x20] sm:$0xf]
    %v380 = vld [vmem:[%s370 + $0x24] sm:$0xf]
    %v381 = vld [vmem:[%s370 + $0x28] sm:$0xf]
    %v382 = vld [vmem:[%s370 + $0x2c] sm:$0xf]
    %v383 = vld [vmem:[%s370 + $0x30] sm:$0xf]
    %v384 = vld [vmem:[%s370 + $0x34] sm:$0xf]
    %v385 = vld [vmem:[%s370 + $0x38] sm:$0xf]
    %v386 = vld [vmem:[%s370 + $0x3c] sm:$0xf]
    %v403 = vunpack.c.l.b16 %v371
    %v404 = vunpack.c.l.b16 %v372
    %v405 = vunpack.c.l.b16 %v373
    %v406 = vunpack.c.l.b16 %v374
    %v407 = vunpack.c.l.b16 %v375
    %v408 = vunpack.c.l.b16 %v376
    %v409 = vunpack.c.l.b16 %v377
    %v410 = vunpack.c.l.b16 %v378
    %v411 = vunpack.c.l.b16 %v379
    %v412 = vunpack.c.l.b16 %v380
    %v413 = vunpack.c.l.b16 %v381
    %v414 = vunpack.c.l.b16 %v382
    %v415 = vunpack.c.l.b16 %v383
    %v416 = vunpack.c.l.b16 %v384
    %v417 = vunpack.c.l.b16 %v385
    %v418 = vunpack.c.l.b16 %v386
    %v419 = vpack.c.b16 %v404, %v403
    %v420 = vpack.c.b16 %v406, %v405
    %v421 = vpack.c.b16 %v408, %v407
    %v422 = vpack.c.b16 %v410, %v409
    %v423 = vpack.c.b16 %v412, %v411
    %v424 = vpack.c.b16 %v414, %v413
    %v425 = vpack.c.b16 %v416, %v415
    %v426 = vpack.c.b16 %v418, %v417
    %435 = vmatprep.subr.bf16.mxu0 0
    %436 = vmatpush1.bf16.msra.mxu0 %v426
    %437 = vmatprep.subr.bf16.mxu0 0
    %438 = vmatpush1.bf16.msra.mxu0 %v425
    %439 = vmatprep.subr.bf16.mxu0 0
    %440 = vmatpush1.bf16.msra.mxu0 %v424
    %441 = vmatprep.subr.bf16.mxu0 0
    %442 = vmatpush1.bf16.msra.mxu0 %v423
    %443 = vmatprep.subr.bf16.mxu0 0
    %444 = vmatpush1.bf16.msra.mxu0 %v422
    %445 = vmatprep.subr.bf16.mxu0 0
    %446 = vmatpush1.bf16.msra.mxu0 %v421
    %447 = vmatprep.subr.bf16.mxu0 0
    %448 = vmatpush1.bf16.msra.mxu0 %v420
    %449 = vmatprep.subr.bf16.mxu0 0
    %450 = vmatpush1.bf16.msra.mxu0 %v419
    %451 = vmatprep.subr.bf16.mxu0 0
    %452 = vmatpush2.bf16.msra.mxu0 0
    %453 = vmatprep.subr.bf16.mxu0 0
    %454 = vmatpush2.bf16.msra.mxu0 0
    %455 = vmatprep.subr.bf16.mxu0 0
    %456 = vmatpush2.bf16.msra.mxu0 0
    %457 = vmatprep.subr.bf16.mxu0 0
    %458 = vmatpush2.bf16.msra.mxu0 0
    %459 = vmatprep.subr.bf16.mxu0 0
    %460 = vmatpush2.bf16.msra.mxu0 0
    %461 = vmatprep.subr.bf16.mxu0 0
    %462 = vmatpush2.bf16.msra.mxu0 0
    %463 = vmatprep.subr.bf16.mxu0 0
    %464 = vmatpush2.bf16.msra.mxu0 0
    %465 = vmatprep.subr.bf16.mxu0 0
    %466 = vmatpush2.bf16.msra.mxu0 0
    %467 = vmatprep.mubr.bf16.mxu0 0
    %468 = vmatmul.mubr.bf16.gmra.mxu0 %v225
    %v469 = vpop.f32.mrf.mxu0
    %v470 = vadd.f32 0.0, %v469
    %v471 = vpop.f32.mrf.mxu0
    %v472 = vpop.f32.mrf.mxu0
    %v473 = vadd.f32 0.0, %v472
    %v474 = vpop.f32.mrf.mxu0
    %475 = vmatprep.mubr.bf16.mxu0 0
    %476 = vmatmul.mubr.bf16.gmra.mxu0 %v226
    %v477 = vpop.f32.mrf.mxu0
    %v478 = vadd.f32 0.0, %v477
    %v479 = vpop.f32.mrf.mxu0
    %v480 = vpop.f32.mrf.mxu0
    %v481 = vadd.f32 0.0, %v480
    %v482 = vpop.f32.mrf.mxu0
    %483 = vmatprep.mubr.bf16.mxu0 0
    %484 = vmatmul.mubr.bf16.gmra.mxu0 %v227
    %v485 = vpop.f32.mrf.mxu0
    %v486 = vadd.f32 0.0, %v485
    %v487 = vpop.f32.mrf.mxu0
    %v488 = vpop.f32.mrf.mxu0
    %v489 = vadd.f32 0.0, %v488
    %v490 = vpop.f32.mrf.mxu0
    %491 = vmatprep.mubr.bf16.mxu0 0
    %492 = vmatmul.mubr.bf16.gmra.mxu0 %v228
    %v493 = vpop.f32.mrf.mxu0
    %v494 = vadd.f32 0.0, %v493
    %v495 = vpop.f32.mrf.mxu0
    %v496 = vpop.f32.mrf.mxu0
    %v497 = vadd.f32 0.0, %v496
    %v498 = vpop.f32.mrf.mxu0
    %499 = vmatprep.mubr.bf16.mxu0 0
    %500 = vmatmul.mubr.bf16.gmra.mxu0 %v229
    %v501 = vpop.f32.mrf.mxu0
    %v502 = vadd.f32 0.0, %v501
    %v503 = vpop.f32.mrf.mxu0
    %v504 = vpop.f32.mrf.mxu0
    %v505 = vadd.f32 0.0, %v504
    %v506 = vpop.f32.mrf.mxu0
    %507 = vmatprep.mubr.bf16.mxu0 0
    %508 = vmatmul.mubr.bf16.gmra.mxu0 %v230
    %v509 = vpop.f32.mrf.mxu0
    %v510 = vadd.f32 0.0, %v509
    %v511 = vpop.f32.mrf.mxu0
    %v512 = vpop.f32.mrf.mxu0
    %v513 = vadd.f32 0.0, %v512
    %v514 = vpop.f32.mrf.mxu0
    %515 = vmatprep.mubr.bf16.mxu0 0
    %516 = vmatmul.mubr.bf16.gmra.mxu0 %v231
    %v517 = vpop.f32.mrf.mxu0
    %v518 = vadd.f32 0.0, %v517
    %v519 = vpop.f32.mrf.mxu0
    %v520 = vpop.f32.mrf.mxu0
    %v521 = vadd.f32 0.0, %v520
    %v522 = vpop.f32.mrf.mxu0
    %523 = vmatprep.mubr.bf16.mxu0 0
    %524 = vmatmul.mubr.bf16.gmra.mxu0 %v232
    %v525 = vpop.f32.mrf.mxu0
    %v526 = vadd.f32 0.0, %v525
    %v527 = vpop.f32.mrf.mxu0
    %v528 = vpop.f32.mrf.mxu0
    %v529 = vadd.f32 0.0, %v528
    %v530 = vpop.f32.mrf.mxu0
    %531 = vdwg.mxu0
    %v548 = vunpack.c.l.b16 %v354
    %v549 = vunpack.c.l.b16 %v355
    %v550 = vunpack.c.l.b16 %v356
    %v551 = vunpack.c.l.b16 %v357
    %v552 = vunpack.c.l.b16 %v358
    %v553 = vunpack.c.l.b16 %v359
    %v554 = vunpack.c.l.b16 %v360
    %v555 = vunpack.c.l.b16 %v361
    %v556 = vunpack.c.l.b16 %v362
    %v557 = vunpack.c.l.b16 %v363
    %v558 = vunpack.c.l.b16 %v364
    %v559 = vunpack.c.l.b16 %v365
    %v560 = vunpack.c.l.b16 %v366
    %v561 = vunpack.c.l.b16 %v367
    %v562 = vunpack.c.l.b16 %v368
    %v563 = vunpack.c.l.b16 %v369
    %v564 = vpack.c.b16 %v549, %v548
    %v565 = vpack.c.b16 %v551, %v550
    %v566 = vpack.c.b16 %v553, %v552
    %v567 = vpack.c.b16 %v555, %v554
    %v568 = vpack.c.b16 %v557, %v556
    %v569 = vpack.c.b16 %v559, %v558
    %v570 = vpack.c.b16 %v561, %v560
    %v571 = vpack.c.b16 %v563, %v562
    %580 = vmatprep.subr.bf16.mxu0 0
    %581 = vmatpush1.bf16.msra.mxu0 %v571
    %582 = vmatprep.subr.bf16.mxu0 0
    %583 = vmatpush1.bf16.msra.mxu0 %v570
    %584 = vmatprep.subr.bf16.mxu0 0
    %585 = vmatpush1.bf16.msra.mxu0 %v569
    %586 = vmatprep.subr.bf16.mxu0 0
    %587 = vmatpush1.bf16.msra.mxu0 %v568
    %588 = vmatprep.subr.bf16.mxu0 0
    %589 = vmatpush1.bf16.msra.mxu0 %v567
    %590 = vmatprep.subr.bf16.mxu0 0
    %591 = vmatpush1.bf16.msra.mxu0 %v566
    %592 = vmatprep.subr.bf16.mxu0 0
    %593 = vmatpush1.bf16.msra.mxu0 %v565
    %594 = vmatprep.subr.bf16.mxu0 0
    %595 = vmatpush1.bf16.msra.mxu0 %v564
    %596 = vmatprep.subr.bf16.mxu0 0
    %597 = vmatpush2.bf16.msra.mxu0 0
    %598 = vmatprep.subr.bf16.mxu0 0
    %599 = vmatpush2.bf16.msra.mxu0 0
    %600 = vmatprep.subr.bf16.mxu0 0
    %601 = vmatpush2.bf16.msra.mxu0 0
    %602 = vmatprep.subr.bf16.mxu0 0
    %603 = vmatpush2.bf16.msra.mxu0 0
    %604 = vmatprep.subr.bf16.mxu0 0
    %605 = vmatpush2.bf16.msra.mxu0 0
    %606 = vmatprep.subr.bf16.mxu0 0
    %607 = vmatpush2.bf16.msra.mxu0 0
    %608 = vmatprep.subr.bf16.mxu0 0
    %609 = vmatpush2.bf16.msra.mxu0 0
    %610 = vmatprep.subr.bf16.mxu0 0
    %611 = vmatpush2.bf16.msra.mxu0 0
    %612 = vmatprep.mubr.bf16.mxu0 0
    %613 = vmatmul.mubr.bf16.gmra.mxu0 %v217
    %v614 = vpop.f32.mrf.mxu0
    %v615 = vadd.f32 %v470, %v614
    %v616 = vpop.f32.mrf.mxu0
    %v617 = vpop.f32.mrf.mxu0
    %v618 = vadd.f32 %v473, %v617
    %v619 = vpop.f32.mrf.mxu0
    %620 = vmatprep.mubr.bf16.mxu0 0
    %621 = vmatmul.mubr.bf16.gmra.mxu0 %v218
    %v622 = vpop.f32.mrf.mxu0
    %v623 = vadd.f32 %v478, %v622
    %v624 = vpop.f32.mrf.mxu0
    %v625 = vpop.f32.mrf.mxu0
    %v626 = vadd.f32 %v481, %v625
    %v627 = vpop.f32.mrf.mxu0
    %628 = vmatprep.mubr.bf16.mxu0 0
    %629 = vmatmul.mubr.bf16.gmra.mxu0 %v219
    %v630 = vpop.f32.mrf.mxu0
    %v631 = vadd.f32 %v486, %v630
    %v632 = vpop.f32.mrf.mxu0
    %v633 = vpop.f32.mrf.mxu0
    %v634 = vadd.f32 %v489, %v633
    %v635 = vpop.f32.mrf.mxu0
    %636 = vmatprep.mubr.bf16.mxu0 0
    %637 = vmatmul.mubr.bf16.gmra.mxu0 %v220
    %v638 = vpop.f32.mrf.mxu0
    %v639 = vadd.f32 %v494, %v638
    %v640 = vpop.f32.mrf.mxu0
    %v641 = vpop.f32.mrf.mxu0
    %v642 = vadd.f32 %v497, %v641
    %v643 = vpop.f32.mrf.mxu0
    %644 = vmatprep.mubr.bf16.mxu0 0
    %645 = vmatmul.mubr.bf16.gmra.mxu0 %v221
    %v646 = vpop.f32.mrf.mxu0
    %v647 = vadd.f32 %v502, %v646
    %v648 = vpop.f32.mrf.mxu0
    %v649 = vpop.f32.mrf.mxu0
    %v650 = vadd.f32 %v505, %v649
    %v651 = vpop.f32.mrf.mxu0
    %652 = vmatprep.mubr.bf16.mxu0 0
    %653 = vmatmul.mubr.bf16.gmra.mxu0 %v222
    %v654 = vpop.f32.mrf.mxu0
    %v655 = vadd.f32 %v510, %v654
    %v656 = vpop.f32.mrf.mxu0
    %v657 = vpop.f32.mrf.mxu0
    %v658 = vadd.f32 %v513, %v657
    %v659 = vpop.f32.mrf.mxu0
    %660 = vmatprep.mubr.bf16.mxu0 0
    %661 = vmatmul.mubr.bf16.gmra.mxu0 %v223
    %v662 = vpop.f32.mrf.mxu0
    %v663 = vadd.f32 %v518, %v662
    %v664 = vpop.f32.mrf.mxu0
    %v665 = vpop.f32.mrf.mxu0
    %v666 = vadd.f32 %v521, %v665
    %v667 = vpop.f32.mrf.mxu0
    %668 = vmatprep.mubr.bf16.mxu0 0
    %669 = vmatmul.mubr.bf16.gmra.mxu0 %v224
    %v670 = vpop.f32.mrf.mxu0
    %v671 = vadd.f32 %v526, %v670
    %v672 = vpop.f32.mrf.mxu0
    %v673 = vpop.f32.mrf.mxu0
    %v674 = vadd.f32 %v529, %v673
    %v675 = vpop.f32.mrf.mxu0
    %676 = vdwg.mxu0
    %s677 = scalar_lea.vmem [#allocation4], 128
    %v678 = vld [vmem:[%s677] sm:$0xf]
    %v679 = vld [vmem:[%s677 + $0x4] sm:$0xf]
    %v680 = vld [vmem:[%s677 + $0x8] sm:$0xf]
    %v681 = vld [vmem:[%s677 + $0xc] sm:$0xf]
    %v682 = vld [vmem:[%s677 + $0x10] sm:$0xf]
    %v683 = vld [vmem:[%s677 + $0x14] sm:$0xf]
    %v684 = vld [vmem:[%s677 + $0x18] sm:$0xf]
    %v685 = vld [vmem:[%s677 + $0x1c] sm:$0xf]
    %v686 = vld [vmem:[%s677 + $0x20] sm:$0xf]
    %v687 = vld [vmem:[%s677 + $0x24] sm:$0xf]
    %v688 = vld [vmem:[%s677 + $0x28] sm:$0xf]
    %v689 = vld [vmem:[%s677 + $0x2c] sm:$0xf]
    %v690 = vld [vmem:[%s677 + $0x30] sm:$0xf]
    %v691 = vld [vmem:[%s677 + $0x34] sm:$0xf]
    %v692 = vld [vmem:[%s677 + $0x38] sm:$0xf]
    %v693 = vld [vmem:[%s677 + $0x3c] sm:$0xf]
    %v710 = vunpack.c.l.b16 %v678
    %v711 = vunpack.c.l.b16 %v679
    %v712 = vunpack.c.l.b16 %v680
    %v713 = vunpack.c.l.b16 %v681
    %v714 = vunpack.c.l.b16 %v682
    %v715 = vunpack.c.l.b16 %v683
    %v716 = vunpack.c.l.b16 %v684
    %v717 = vunpack.c.l.b16 %v685
    %v718 = vunpack.c.l.b16 %v686
    %v719 = vunpack.c.l.b16 %v687
    %v720 = vunpack.c.l.b16 %v688
    %v721 = vunpack.c.l.b16 %v689
    %v722 = vunpack.c.l.b16 %v690
    %v723 = vunpack.c.l.b16 %v691
    %v724 = vunpack.c.l.b16 %v692
    %v725 = vunpack.c.l.b16 %v693
    %v726 = vpack.c.b16 %v711, %v710
    %v727 = vpack.c.b16 %v713, %v712
    %v728 = vpack.c.b16 %v715, %v714
    %v729 = vpack.c.b16 %v717, %v716
    %v730 = vpack.c.b16 %v719, %v718
    %v731 = vpack.c.b16 %v721, %v720
    %v732 = vpack.c.b16 %v723, %v722
    %v733 = vpack.c.b16 %v725, %v724
    %742 = vmatprep.subr.bf16.mxu0 0
    %743 = vmatpush1.bf16.msra.mxu0 %v733
    %744 = vmatprep.subr.bf16.mxu0 0
    %745 = vmatpush1.bf16.msra.mxu0 %v732
    %746 = vmatprep.subr.bf16.mxu0 0
    %747 = vmatpush1.bf16.msra.mxu0 %v731
    %748 = vmatprep.subr.bf16.mxu0 0
    %749 = vmatpush1.bf16.msra.mxu0 %v730
    %750 = vmatprep.subr.bf16.mxu0 0
    %751 = vmatpush1.bf16.msra.mxu0 %v729
    %752 = vmatprep.subr.bf16.mxu0 0
    %753 = vmatpush1.bf16.msra.mxu0 %v728
    %754 = vmatprep.subr.bf16.mxu0 0
    %755 = vmatpush1.bf16.msra.mxu0 %v727
    %756 = vmatprep.subr.bf16.mxu0 0
    %757 = vmatpush1.bf16.msra.mxu0 %v726
    %758 = vmatprep.subr.bf16.mxu0 0
    %759 = vmatpush2.bf16.msra.mxu0 0
    %760 = vmatprep.subr.bf16.mxu0 0
    %761 = vmatpush2.bf16.msra.mxu0 0
    %762 = vmatprep.subr.bf16.mxu0 0
    %763 = vmatpush2.bf16.msra.mxu0 0
    %764 = vmatprep.subr.bf16.mxu0 0
    %765 = vmatpush2.bf16.msra.mxu0 0
    %766 = vmatprep.subr.bf16.mxu0 0
    %767 = vmatpush2.bf16.msra.mxu0 0
    %768 = vmatprep.subr.bf16.mxu0 0
    %769 = vmatpush2.bf16.msra.mxu0 0
    %770 = vmatprep.subr.bf16.mxu0 0
    %771 = vmatpush2.bf16.msra.mxu0 0
    %772 = vmatprep.subr.bf16.mxu0 0
    %773 = vmatpush2.bf16.msra.mxu0 0
    %774 = vmatprep.mubr.bf16.mxu0 0
    %775 = vmatmul.mubr.bf16.gmra.mxu0 %v346
    %v776 = vpop.f32.mrf.mxu0
    %v777 = vadd.f32 0.0, %v776
    %v778 = vpop.f32.mrf.mxu0
    %v779 = vpop.f32.mrf.mxu0
    %v780 = vadd.f32 0.0, %v779
    %v781 = vpop.f32.mrf.mxu0
    %782 = vmatprep.mubr.bf16.mxu0 0
    %783 = vmatmul.mubr.bf16.gmra.mxu0 %v347
    %v784 = vpop.f32.mrf.mxu0
    %v785 = vadd.f32 0.0, %v784
    %v786 = vpop.f32.mrf.mxu0
    %v787 = vpop.f32.mrf.mxu0
    %v788 = vadd.f32 0.0, %v787
    %v789 = vpop.f32.mrf.mxu0
    %790 = vmatprep.mubr.bf16.mxu0 0
    %791 = vmatmul.mubr.bf16.gmra.mxu0 %v348
    %v792 = vpop.f32.mrf.mxu0
    %v793 = vadd.f32 0.0, %v792
    %v794 = vpop.f32.mrf.mxu0
    %v795 = vpop.f32.mrf.mxu0
    %v796 = vadd.f32 0.0, %v795
    %v797 = vpop.f32.mrf.mxu0
    %798 = vmatprep.mubr.bf16.mxu0 0
    %799 = vmatmul.mubr.bf16.gmra.mxu0 %v349
    %v800 = vpop.f32.mrf.mxu0
    %v801 = vadd.f32 0.0, %v800
    %v802 = vpop.f32.mrf.mxu0
    %v803 = vpop.f32.mrf.mxu0
    %v804 = vadd.f32 0.0, %v803
    %v805 = vpop.f32.mrf.mxu0
    %806 = vmatprep.mubr.bf16.mxu0 0
    %807 = vmatmul.mubr.bf16.gmra.mxu0 %v350
    %v808 = vpop.f32.mrf.mxu0
    %v809 = vadd.f32 0.0, %v808
    %v810 = vpop.f32.mrf.mxu0
    %v811 = vpop.f32.mrf.mxu0
    %v812 = vadd.f32 0.0, %v811
    %v813 = vpop.f32.mrf.mxu0
    %814 = vmatprep.mubr.bf16.mxu0 0
    %815 = vmatmul.mubr.bf16.gmra.mxu0 %v351
    %v816 = vpop.f32.mrf.mxu0
    %v817 = vadd.f32 0.0, %v816
    %v818 = vpop.f32.mrf.mxu0
    %v819 = vpop.f32.mrf.mxu0
    %v820 = vadd.f32 0.0, %v819
    %v821 = vpop.f32.mrf.mxu0
    %822 = vmatprep.mubr.bf16.mxu0 0
    %823 = vmatmul.mubr.bf16.gmra.mxu0 %v352
    %v824 = vpop.f32.mrf.mxu0
    %v825 = vadd.f32 0.0, %v824
    %v826 = vpop.f32.mrf.mxu0
    %v827 = vpop.f32.mrf.mxu0
    %v828 = vadd.f32 0.0, %v827
    %v829 = vpop.f32.mrf.mxu0
    %830 = vmatprep.mubr.bf16.mxu0 0
    %831 = vmatmul.mubr.bf16.gmra.mxu0 %v353
    %v832 = vpop.f32.mrf.mxu0
    %v833 = vadd.f32 0.0, %v832
    %v834 = vpop.f32.mrf.mxu0
    %v835 = vpop.f32.mrf.mxu0
    %v836 = vadd.f32 0.0, %v835
    %v837 = vpop.f32.mrf.mxu0
    %838 = vdwg.mxu0
    %v839 = vadd.f32 %v615, %v777
    %v840 = vadd.f32 %v618, %v780
    %v841 = vadd.f32 %v623, %v785
    %v842 = vadd.f32 %v626, %v788
    %v843 = vadd.f32 %v631, %v793
    %v844 = vadd.f32 %v634, %v796
    %v845 = vadd.f32 %v639, %v801
    %v846 = vadd.f32 %v642, %v804
    %v847 = vadd.f32 %v647, %v809
    %v848 = vadd.f32 %v650, %v812
    %v849 = vadd.f32 %v655, %v817
    %v850 = vadd.f32 %v658, %v820
    %v851 = vadd.f32 %v663, %v825
    %v852 = vadd.f32 %v666, %v828
    %v853 = vadd.f32 %v671, %v833
    %v854 = vadd.f32 %v674, %v836
    %s855 = scalar_lea.vmem [#allocation4], 192
    %v856 = vld [vmem:[%s855] sm:$0xf]
    %v857 = vld [vmem:[%s855 + $0x4] sm:$0xf]
    %v858 = vld [vmem:[%s855 + $0x8] sm:$0xf]
    %v859 = vld [vmem:[%s855 + $0xc] sm:$0xf]
    %v860 = vld [vmem:[%s855 + $0x10] sm:$0xf]
    %v861 = vld [vmem:[%s855 + $0x14] sm:$0xf]
    %v862 = vld [vmem:[%s855 + $0x18] sm:$0xf]
    %v863 = vld [vmem:[%s855 + $0x1c] sm:$0xf]
    %v864 = vld [vmem:[%s855 + $0x20] sm:$0xf]
    %v865 = vld [vmem:[%s855 + $0x24] sm:$0xf]
    %v866 = vld [vmem:[%s855 + $0x28] sm:$0xf]
    %v867 = vld [vmem:[%s855 + $0x2c] sm:$0xf]
    %v868 = vld [vmem:[%s855 + $0x30] sm:$0xf]
    %v869 = vld [vmem:[%s855 + $0x34] sm:$0xf]
    %v870 = vld [vmem:[%s855 + $0x38] sm:$0xf]
    %v871 = vld [vmem:[%s855 + $0x3c] sm:$0xf]
    %s872 = scalar_lea.vmem [#allocation4], 256
    %v873 = vld [vmem:[%s872] sm:$0xf]
    %v874 = vld [vmem:[%s872 + $0x4] sm:$0xf]
    %v875 = vld [vmem:[%s872 + $0x8] sm:$0xf]
    %v876 = vld [vmem:[%s872 + $0xc] sm:$0xf]
    %v877 = vld [vmem:[%s872 + $0x10] sm:$0xf]
    %v878 = vld [vmem:[%s872 + $0x14] sm:$0xf]
    %v879 = vld [vmem:[%s872 + $0x18] sm:$0xf]
    %v880 = vld [vmem:[%s872 + $0x1c] sm:$0xf]
    %v881 = vld [vmem:[%s872 + $0x20] sm:$0xf]
    %v882 = vld [vmem:[%s872 + $0x24] sm:$0xf]
    %v883 = vld [vmem:[%s872 + $0x28] sm:$0xf]
    %v884 = vld [vmem:[%s872 + $0x2c] sm:$0xf]
    %v885 = vld [vmem:[%s872 + $0x30] sm:$0xf]
    %v886 = vld [vmem:[%s872 + $0x34] sm:$0xf]
    %v887 = vld [vmem:[%s872 + $0x38] sm:$0xf]
    %v888 = vld [vmem:[%s872 + $0x3c] sm:$0xf]
    %v905 = vunpack.c.l.b16 %v873
    %v906 = vunpack.c.l.b16 %v874
    %v907 = vunpack.c.l.b16 %v875
    %v908 = vunpack.c.l.b16 %v876
    %v909 = vunpack.c.l.b16 %v877
    %v910 = vunpack.c.l.b16 %v878
    %v911 = vunpack.c.l.b16 %v879
    %v912 = vunpack.c.l.b16 %v880
    %v913 = vunpack.c.l.b16 %v881
    %v914 = vunpack.c.l.b16 %v882
    %v915 = vunpack.c.l.b16 %v883
    %v916 = vunpack.c.l.b16 %v884
    %v917 = vunpack.c.l.b16 %v885
    %v918 = vunpack.c.l.b16 %v886
    %v919 = vunpack.c.l.b16 %v887
    %v920 = vunpack.c.l.b16 %v888
    %v921 = vpack.c.b16 %v906, %v905
    %v922 = vpack.c.b16 %v908, %v907
    %v923 = vpack.c.b16 %v910, %v909
    %v924 = vpack.c.b16 %v912, %v911
    %v925 = vpack.c.b16 %v914, %v913
    %v926 = vpack.c.b16 %v916, %v915
    %v927 = vpack.c.b16 %v918, %v917
    %v928 = vpack.c.b16 %v920, %v919
    %937 = vmatprep.subr.bf16.mxu0 0
    %938 = vmatpush1.bf16.msra.mxu0 %v928
    %939 = vmatprep.subr.bf16.mxu0 0
    %940 = vmatpush1.bf16.msra.mxu0 %v927
    %941 = vmatprep.subr.bf16.mxu0 0
    %942 = vmatpush1.bf16.msra.mxu0 %v926
    %943 = vmatprep.subr.bf16.mxu0 0
    %944 = vmatpush1.bf16.msra.mxu0 %v925
    %945 = vmatprep.subr.bf16.mxu0 0
    %946 = vmatpush1.bf16.msra.mxu0 %v924
    %947 = vmatprep.subr.bf16.mxu0 0
    %948 = vmatpush1.bf16.msra.mxu0 %v923
    %949 = vmatprep.subr.bf16.mxu0 0
    %950 = vmatpush1.bf16.msra.mxu0 %v922
    %951 = vmatprep.subr.bf16.mxu0 0
    %952 = vmatpush1.bf16.msra.mxu0 %v921
    %953 = vmatprep.subr.bf16.mxu0 0
    %954 = vmatpush2.bf16.msra.mxu0 0
    %955 = vmatprep.subr.bf16.mxu0 0
    %956 = vmatpush2.bf16.msra.mxu0 0
    %957 = vmatprep.subr.bf16.mxu0 0
    %958 = vmatpush2.bf16.msra.mxu0 0
    %959 = vmatprep.subr.bf16.mxu0 0
    %960 = vmatpush2.bf16.msra.mxu0 0
    %961 = vmatprep.subr.bf16.mxu0 0
    %962 = vmatpush2.bf16.msra.mxu0 0
    %963 = vmatprep.subr.bf16.mxu0 0
    %964 = vmatpush2.bf16.msra.mxu0 0
    %965 = vmatprep.subr.bf16.mxu0 0
    %966 = vmatpush2.bf16.msra.mxu0 0
    %967 = vmatprep.subr.bf16.mxu0 0
    %968 = vmatpush2.bf16.msra.mxu0 0
    %969 = vmatprep.mubr.bf16.mxu0 0
    %970 = vmatmul.mubr.bf16.gmra.mxu0 %v225
    %v971 = vpop.f32.mrf.mxu0
    %v972 = vadd.f32 0.0, %v971
    %v973 = vpop.f32.mrf.mxu0
    %v974 = vpop.f32.mrf.mxu0
    %v975 = vadd.f32 0.0, %v974
    %v976 = vpop.f32.mrf.mxu0
    %977 = vmatprep.mubr.bf16.mxu0 0
    %978 = vmatmul.mubr.bf16.gmra.mxu0 %v226
    %v979 = vpop.f32.mrf.mxu0
    %v980 = vadd.f32 0.0, %v979
    %v981 = vpop.f32.mrf.mxu0
    %v982 = vpop.f32.mrf.mxu0
    %v983 = vadd.f32 0.0, %v982
    %v984 = vpop.f32.mrf.mxu0
    %985 = vmatprep.mubr.bf16.mxu0 0
    %986 = vmatmul.mubr.bf16.gmra.mxu0 %v227
    %v987 = vpop.f32.mrf.mxu0
    %v988 = vadd.f32 0.0, %v987
    %v989 = vpop.f32.mrf.mxu0
    %v990 = vpop.f32.mrf.mxu0
    %v991 = vadd.f32 0.0, %v990
    %v992 = vpop.f32.mrf.mxu0
    %993 = vmatprep.mubr.bf16.mxu0 0
    %994 = vmatmul.mubr.bf16.gmra.mxu0 %v228
    %v995 = vpop.f32.mrf.mxu0
    %v996 = vadd.f32 0.0, %v995
    %v997 = vpop.f32.mrf.mxu0
    %v998 = vpop.f32.mrf.mxu0
    %v999 = vadd.f32 0.0, %v998
    %v1000 = vpop.f32.mrf.mxu0
    %1001 = vmatprep.mubr.bf16.mxu0 0
    %1002 = vmatmul.mubr.bf16.gmra.mxu0 %v229
    %v1003 = vpop.f32.mrf.mxu0
    %v1004 = vadd.f32 0.0, %v1003
    %v1005 = vpop.f32.mrf.mxu0
    %v1006 = vpop.f32.mrf.mxu0
    %v1007 = vadd.f32 0.0, %v1006
    %v1008 = vpop.f32.mrf.mxu0
    %1009 = vmatprep.mubr.bf16.mxu0 0
    %1010 = vmatmul.mubr.bf16.gmra.mxu0 %v230
    %v1011 = vpop.f32.mrf.mxu0
    %v1012 = vadd.f32 0.0, %v1011
    %v1013 = vpop.f32.mrf.mxu0
    %v1014 = vpop.f32.mrf.mxu0
    %v1015 = vadd.f32 0.0, %v1014
    %v1016 = vpop.f32.mrf.mxu0
    %1017 = vmatprep.mubr.bf16.mxu0 0
    %1018 = vmatmul.mubr.bf16.gmra.mxu0 %v231
    %v1019 = vpop.f32.mrf.mxu0
    %v1020 = vadd.f32 0.0, %v1019
    %v1021 = vpop.f32.mrf.mxu0
    %v1022 = vpop.f32.mrf.mxu0
    %v1023 = vadd.f32 0.0, %v1022
    %v1024 = vpop.f32.mrf.mxu0
    %1025 = vmatprep.mubr.bf16.mxu0 0
    %1026 = vmatmul.mubr.bf16.gmra.mxu0 %v232
    %v1027 = vpop.f32.mrf.mxu0
    %v1028 = vadd.f32 0.0, %v1027
    %v1029 = vpop.f32.mrf.mxu0
    %v1030 = vpop.f32.mrf.mxu0
    %v1031 = vadd.f32 0.0, %v1030
    %v1032 = vpop.f32.mrf.mxu0
    %1033 = vdwg.mxu0
    %v1050 = vunpack.c.l.b16 %v856
    %v1051 = vunpack.c.l.b16 %v857
    %v1052 = vunpack.c.l.b16 %v858
    %v1053 = vunpack.c.l.b16 %v859
    %v1054 = vunpack.c.l.b16 %v860
    %v1055 = vunpack.c.l.b16 %v861
    %v1056 = vunpack.c.l.b16 %v862
    %v1057 = vunpack.c.l.b16 %v863
    %v1058 = vunpack.c.l.b16 %v864
    %v1059 = vunpack.c.l.b16 %v865
    %v1060 = vunpack.c.l.b16 %v866
    %v1061 = vunpack.c.l.b16 %v867
    %v1062 = vunpack.c.l.b16 %v868
    %v1063 = vunpack.c.l.b16 %v869
    %v1064 = vunpack.c.l.b16 %v870
    %v1065 = vunpack.c.l.b16 %v871
    %v1066 = vpack.c.b16 %v1051, %v1050
    %v1067 = vpack.c.b16 %v1053, %v1052
    %v1068 = vpack.c.b16 %v1055, %v1054
    %v1069 = vpack.c.b16 %v1057, %v1056
    %v1070 = vpack.c.b16 %v1059, %v1058
    %v1071 = vpack.c.b16 %v1061, %v1060
    %v1072 = vpack.c.b16 %v1063, %v1062
    %v1073 = vpack.c.b16 %v1065, %v1064
    %1082 = vmatprep.subr.bf16.mxu0 0
    %1083 = vmatpush1.bf16.msra.mxu0 %v1073
    %1084 = vmatprep.subr.bf16.mxu0 0
    %1085 = vmatpush1.bf16.msra.mxu0 %v1072
    %1086 = vmatprep.subr.bf16.mxu0 0
    %1087 = vmatpush1.bf16.msra.mxu0 %v1071
    %1088 = vmatprep.subr.bf16.mxu0 0
    %1089 = vmatpush1.bf16.msra.mxu0 %v1070
    %1090 = vmatprep.subr.bf16.mxu0 0
    %1091 = vmatpush1.bf16.msra.mxu0 %v1069
    %1092 = vmatprep.subr.bf16.mxu0 0
    %1093 = vmatpush1.bf16.msra.mxu0 %v1068
    %1094 = vmatprep.subr.bf16.mxu0 0
    %1095 = vmatpush1.bf16.msra.mxu0 %v1067
    %1096 = vmatprep.subr.bf16.mxu0 0
    %1097 = vmatpush1.bf16.msra.mxu0 %v1066
    %1098 = vmatprep.subr.bf16.mxu0 0
    %1099 = vmatpush2.bf16.msra.mxu0 0
    %1100 = vmatprep.subr.bf16.mxu0 0
    %1101 = vmatpush2.bf16.msra.mxu0 0
    %1102 = vmatprep.subr.bf16.mxu0 0
    %1103 = vmatpush2.bf16.msra.mxu0 0
    %1104 = vmatprep.subr.bf16.mxu0 0
    %1105 = vmatpush2.bf16.msra.mxu0 0
    %1106 = vmatprep.subr.bf16.mxu0 0
    %1107 = vmatpush2.bf16.msra.mxu0 0
    %1108 = vmatprep.subr.bf16.mxu0 0
    %1109 = vmatpush2.bf16.msra.mxu0 0
    %1110 = vmatprep.subr.bf16.mxu0 0
    %1111 = vmatpush2.bf16.msra.mxu0 0
    %1112 = vmatprep.subr.bf16.mxu0 0
    %1113 = vmatpush2.bf16.msra.mxu0 0
    %1114 = vmatprep.mubr.bf16.mxu0 0
    %1115 = vmatmul.mubr.bf16.gmra.mxu0 %v217
    %v1116 = vpop.f32.mrf.mxu0
    %v1117 = vadd.f32 %v972, %v1116
    %v1118 = vpop.f32.mrf.mxu0
    %v1119 = vpop.f32.mrf.mxu0
    %v1120 = vadd.f32 %v975, %v1119
    %v1121 = vpop.f32.mrf.mxu0
    %1122 = vmatprep.mubr.bf16.mxu0 0
    %1123 = vmatmul.mubr.bf16.gmra.mxu0 %v218
    %v1124 = vpop.f32.mrf.mxu0
    %v1125 = vadd.f32 %v980, %v1124
    %v1126 = vpop.f32.mrf.mxu0
    %v1127 = vpop.f32.mrf.mxu0
    %v1128 = vadd.f32 %v983, %v1127
    %v1129 = vpop.f32.mrf.mxu0
    %1130 = vmatprep.mubr.bf16.mxu0 0
    %1131 = vmatmul.mubr.bf16.gmra.mxu0 %v219
    %v1132 = vpop.f32.mrf.mxu0
    %v1133 = vadd.f32 %v988, %v1132
    %v1134 = vpop.f32.mrf.mxu0
    %v1135 = vpop.f32.mrf.mxu0
    %v1136 = vadd.f32 %v991, %v1135
    %v1137 = vpop.f32.mrf.mxu0
    %1138 = vmatprep.mubr.bf16.mxu0 0
    %1139 = vmatmul.mubr.bf16.gmra.mxu0 %v220
    %v1140 = vpop.f32.mrf.mxu0
    %v1141 = vadd.f32 %v996, %v1140
    %v1142 = vpop.f32.mrf.mxu0
    %v1143 = vpop.f32.mrf.mxu0
    %v1144 = vadd.f32 %v999, %v1143
    %v1145 = vpop.f32.mrf.mxu0
    %1146 = vmatprep.mubr.bf16.mxu0 0
    %1147 = vmatmul.mubr.bf16.gmra.mxu0 %v221
    %v1148 = vpop.f32.mrf.mxu0
    %v1149 = vadd.f32 %v1004, %v1148
    %v1150 = vpop.f32.mrf.mxu0
    %v1151 = vpop.f32.mrf.mxu0
    %v1152 = vadd.f32 %v1007, %v1151
    %v1153 = vpop.f32.mrf.mxu0
    %1154 = vmatprep.mubr.bf16.mxu0 0
    %1155 = vmatmul.mubr.bf16.gmra.mxu0 %v222
    %v1156 = vpop.f32.mrf.mxu0
    %v1157 = vadd.f32 %v1012, %v1156
    %v1158 = vpop.f32.mrf.mxu0
    %v1159 = vpop.f32.mrf.mxu0
    %v1160 = vadd.f32 %v1015, %v1159
    %v1161 = vpop.f32.mrf.mxu0
    %1162 = vmatprep.mubr.bf16.mxu0 0
    %1163 = vmatmul.mubr.bf16.gmra.mxu0 %v223
    %v1164 = vpop.f32.mrf.mxu0
    %v1165 = vadd.f32 %v1020, %v1164
    %v1166 = vpop.f32.mrf.mxu0
    %v1167 = vpop.f32.mrf.mxu0
    %v1168 = vadd.f32 %v1023, %v1167
    %v1169 = vpop.f32.mrf.mxu0
    %1170 = vmatprep.mubr.bf16.mxu0 0
    %1171 = vmatmul.mubr.bf16.gmra.mxu0 %v224
    %v1172 = vpop.f32.mrf.mxu0
    %v1173 = vadd.f32 %v1028, %v1172
    %v1174 = vpop.f32.mrf.mxu0
    %v1175 = vpop.f32.mrf.mxu0
    %v1176 = vadd.f32 %v1031, %v1175
    %v1177 = vpop.f32.mrf.mxu0
    %1178 = vdwg.mxu0
    %s1179 = scalar_lea.vmem [#allocation4], 320
    %v1180 = vld [vmem:[%s1179] sm:$0xf]
    %v1181 = vld [vmem:[%s1179 + $0x4] sm:$0xf]
    %v1182 = vld [vmem:[%s1179 + $0x8] sm:$0xf]
    %v1183 = vld [vmem:[%s1179 + $0xc] sm:$0xf]
    %v1184 = vld [vmem:[%s1179 + $0x10] sm:$0xf]
    %v1185 = vld [vmem:[%s1179 + $0x14] sm:$0xf]
    %v1186 = vld [vmem:[%s1179 + $0x18] sm:$0xf]
    %v1187 = vld [vmem:[%s1179 + $0x1c] sm:$0xf]
    %v1188 = vld [vmem:[%s1179 + $0x20] sm:$0xf]
    %v1189 = vld [vmem:[%s1179 + $0x24] sm:$0xf]
    %v1190 = vld [vmem:[%s1179 + $0x28] sm:$0xf]
    %v1191 = vld [vmem:[%s1179 + $0x2c] sm:$0xf]
    %v1192 = vld [vmem:[%s1179 + $0x30] sm:$0xf]
    %v1193 = vld [vmem:[%s1179 + $0x34] sm:$0xf]
    %v1194 = vld [vmem:[%s1179 + $0x38] sm:$0xf]
    %v1195 = vld [vmem:[%s1179 + $0x3c] sm:$0xf]
    %v1212 = vunpack.c.l.b16 %v1180
    %v1213 = vunpack.c.l.b16 %v1181
    %v1214 = vunpack.c.l.b16 %v1182
    %v1215 = vunpack.c.l.b16 %v1183
    %v1216 = vunpack.c.l.b16 %v1184
    %v1217 = vunpack.c.l.b16 %v1185
    %v1218 = vunpack.c.l.b16 %v1186
    %v1219 = vunpack.c.l.b16 %v1187
    %v1220 = vunpack.c.l.b16 %v1188
    %v1221 = vunpack.c.l.b16 %v1189
    %v1222 = vunpack.c.l.b16 %v1190
    %v1223 = vunpack.c.l.b16 %v1191
    %v1224 = vunpack.c.l.b16 %v1192
    %v1225 = vunpack.c.l.b16 %v1193
    %v1226 = vunpack.c.l.b16 %v1194
    %v1227 = vunpack.c.l.b16 %v1195
    %v1228 = vpack.c.b16 %v1213, %v1212
    %v1229 = vpack.c.b16 %v1215, %v1214
    %v1230 = vpack.c.b16 %v1217, %v1216
    %v1231 = vpack.c.b16 %v1219, %v1218
    %v1232 = vpack.c.b16 %v1221, %v1220
    %v1233 = vpack.c.b16 %v1223, %v1222
    %v1234 = vpack.c.b16 %v1225, %v1224
    %v1235 = vpack.c.b16 %v1227, %v1226
    %1244 = vmatprep.subr.bf16.mxu0 0
    %1245 = vmatpush1.bf16.msra.mxu0 %v1235
    %1246 = vmatprep.subr.bf16.mxu0 0
    %1247 = vmatpush1.bf16.msra.mxu0 %v1234
    %1248 = vmatprep.subr.bf16.mxu0 0
    %1249 = vmatpush1.bf16.msra.mxu0 %v1233
    %1250 = vmatprep.subr.bf16.mxu0 0
    %1251 = vmatpush1.bf16.msra.mxu0 %v1232
    %1252 = vmatprep.subr.bf16.mxu0 0
    %1253 = vmatpush1.bf16.msra.mxu0 %v1231
    %1254 = vmatprep.subr.bf16.mxu0 0
    %1255 = vmatpush1.bf16.msra.mxu0 %v1230
    %1256 = vmatprep.subr.bf16.mxu0 0
    %1257 = vmatpush1.bf16.msra.mxu0 %v1229
    %1258 = vmatprep.subr.bf16.mxu0 0
    %1259 = vmatpush1.bf16.msra.mxu0 %v1228
    %1260 = vmatprep.subr.bf16.mxu0 0
    %1261 = vmatpush2.bf16.msra.mxu0 0
    %1262 = vmatprep.subr.bf16.mxu0 0
    %1263 = vmatpush2.bf16.msra.mxu0 0
    %1264 = vmatprep.subr.bf16.mxu0 0
    %1265 = vmatpush2.bf16.msra.mxu0 0
    %1266 = vmatprep.subr.bf16.mxu0 0
    %1267 = vmatpush2.bf16.msra.mxu0 0
    %1268 = vmatprep.subr.bf16.mxu0 0
    %1269 = vmatpush2.bf16.msra.mxu0 0
    %1270 = vmatprep.subr.bf16.mxu0 0
    %1271 = vmatpush2.bf16.msra.mxu0 0
    %1272 = vmatprep.subr.bf16.mxu0 0
    %1273 = vmatpush2.bf16.msra.mxu0 0
    %1274 = vmatprep.subr.bf16.mxu0 0
    %1275 = vmatpush2.bf16.msra.mxu0 0
    %1276 = vmatprep.mubr.bf16.mxu0 0
    %1277 = vmatmul.mubr.bf16.gmra.mxu0 %v346
    %v1278 = vpop.f32.mrf.mxu0
    %v1279 = vadd.f32 0.0, %v1278
    %v1280 = vpop.f32.mrf.mxu0
    %v1281 = vpop.f32.mrf.mxu0
    %v1282 = vadd.f32 0.0, %v1281
    %v1283 = vpop.f32.mrf.mxu0
    %1284 = vmatprep.mubr.bf16.mxu0 0
    %1285 = vmatmul.mubr.bf16.gmra.mxu0 %v347
    %v1286 = vpop.f32.mrf.mxu0
    %v1287 = vadd.f32 0.0, %v1286
    %v1288 = vpop.f32.mrf.mxu0
    %v1289 = vpop.f32.mrf.mxu0
    %v1290 = vadd.f32 0.0, %v1289
    %v1291 = vpop.f32.mrf.mxu0
    %1292 = vmatprep.mubr.bf16.mxu0 0
    %1293 = vmatmul.mubr.bf16.gmra.mxu0 %v348
    %v1294 = vpop.f32.mrf.mxu0
    %v1295 = vadd.f32 0.0, %v1294
    %v1296 = vpop.f32.mrf.mxu0
    %v1297 = vpop.f32.mrf.mxu0
    %v1298 = vadd.f32 0.0, %v1297
    %v1299 = vpop.f32.mrf.mxu0
    %1300 = vmatprep.mubr.bf16.mxu0 0
    %1301 = vmatmul.mubr.bf16.gmra.mxu0 %v349
    %v1302 = vpop.f32.mrf.mxu0
    %v1303 = vadd.f32 0.0, %v1302
    %v1304 = vpop.f32.mrf.mxu0
    %v1305 = vpop.f32.mrf.mxu0
    %v1306 = vadd.f32 0.0, %v1305
    %v1307 = vpop.f32.mrf.mxu0
    %1308 = vmatprep.mubr.bf16.mxu0 0
    %1309 = vmatmul.mubr.bf16.gmra.mxu0 %v350
    %v1310 = vpop.f32.mrf.mxu0
    %v1311 = vadd.f32 0.0, %v1310
    %v1312 = vpop.f32.mrf.mxu0
    %v1313 = vpop.f32.mrf.mxu0
    %v1314 = vadd.f32 0.0, %v1313
    %v1315 = vpop.f32.mrf.mxu0
    %1316 = vmatprep.mubr.bf16.mxu0 0
    %1317 = vmatmul.mubr.bf16.gmra.mxu0 %v351
    %v1318 = vpop.f32.mrf.mxu0
    %v1319 = vadd.f32 0.0, %v1318
    %v1320 = vpop.f32.mrf.mxu0
    %v1321 = vpop.f32.mrf.mxu0
    %v1322 = vadd.f32 0.0, %v1321
    %v1323 = vpop.f32.mrf.mxu0
    %1324 = vmatprep.mubr.bf16.mxu0 0
    %1325 = vmatmul.mubr.bf16.gmra.mxu0 %v352
    %v1326 = vpop.f32.mrf.mxu0
    %v1327 = vadd.f32 0.0, %v1326
    %v1328 = vpop.f32.mrf.mxu0
    %v1329 = vpop.f32.mrf.mxu0
    %v1330 = vadd.f32 0.0, %v1329
    %v1331 = vpop.f32.mrf.mxu0
    %1332 = vmatprep.mubr.bf16.mxu0 0
    %1333 = vmatmul.mubr.bf16.gmra.mxu0 %v353
    %v1334 = vpop.f32.mrf.mxu0
    %v1335 = vadd.f32 0.0, %v1334
    %v1336 = vpop.f32.mrf.mxu0
    %v1337 = vpop.f32.mrf.mxu0
    %v1338 = vadd.f32 0.0, %v1337
    %v1339 = vpop.f32.mrf.mxu0
    %1340 = vdwg.mxu0
    %v1341 = vadd.f32 %v1117, %v1279
    %v1342 = vadd.f32 %v1120, %v1282
    %v1343 = vadd.f32 %v1125, %v1287
    %v1344 = vadd.f32 %v1128, %v1290
    %v1345 = vadd.f32 %v1133, %v1295
    %v1346 = vadd.f32 %v1136, %v1298
    %v1347 = vadd.f32 %v1141, %v1303
    %v1348 = vadd.f32 %v1144, %v1306
    %v1349 = vadd.f32 %v1149, %v1311
    %v1350 = vadd.f32 %v1152, %v1314
    %v1351 = vadd.f32 %v1157, %v1319
    %v1352 = vadd.f32 %v1160, %v1322
    %v1353 = vadd.f32 %v1165, %v1327
    %v1354 = vadd.f32 %v1168, %v1330
    %v1355 = vadd.f32 %v1173, %v1335
    %v1356 = vadd.f32 %v1176, %v1338
    %s1357 = scalar_lea.vmem [#allocation4], 384
    %v1358 = vld [vmem:[%s1357] sm:$0xf]
    %v1359 = vld [vmem:[%s1357 + $0x4] sm:$0xf]
    %v1360 = vld [vmem:[%s1357 + $0x8] sm:$0xf]
    %v1361 = vld [vmem:[%s1357 + $0xc] sm:$0xf]
    %v1362 = vld [vmem:[%s1357 + $0x10] sm:$0xf]
    %v1363 = vld [vmem:[%s1357 + $0x14] sm:$0xf]
    %v1364 = vld [vmem:[%s1357 + $0x18] sm:$0xf]
    %v1365 = vld [vmem:[%s1357 + $0x1c] sm:$0xf]
    %v1366 = vld [vmem:[%s1357 + $0x20] sm:$0xf]
    %v1367 = vld [vmem:[%s1357 + $0x24] sm:$0xf]
    %v1368 = vld [vmem:[%s1357 + $0x28] sm:$0xf]
    %v1369 = vld [vmem:[%s1357 + $0x2c] sm:$0xf]
    %v1370 = vld [vmem:[%s1357 + $0x30] sm:$0xf]
    %v1371 = vld [vmem:[%s1357 + $0x34] sm:$0xf]
    %v1372 = vld [vmem:[%s1357 + $0x38] sm:$0xf]
    %v1373 = vld [vmem:[%s1357 + $0x3c] sm:$0xf]
    %s1374 = scalar_lea.vmem [#allocation4], 448
    %v1375 = vld [vmem:[%s1374] sm:$0xf]
    %v1376 = vld [vmem:[%s1374 + $0x4] sm:$0xf]
    %v1377 = vld [vmem:[%s1374 + $0x8] sm:$0xf]
    %v1378 = vld [vmem:[%s1374 + $0xc] sm:$0xf]
    %v1379 = vld [vmem:[%s1374 + $0x10] sm:$0xf]
    %v1380 = vld [vmem:[%s1374 + $0x14] sm:$0xf]
    %v1381 = vld [vmem:[%s1374 + $0x18] sm:$0xf]
    %v1382 = vld [vmem:[%s1374 + $0x1c] sm:$0xf]
    %v1383 = vld [vmem:[%s1374 + $0x20] sm:$0xf]
    %v1384 = vld [vmem:[%s1374 + $0x24] sm:$0xf]
    %v1385 = vld [vmem:[%s1374 + $0x28] sm:$0xf]
    %v1386 = vld [vmem:[%s1374 + $0x2c] sm:$0xf]
    %v1387 = vld [vmem:[%s1374 + $0x30] sm:$0xf]
    %v1388 = vld [vmem:[%s1374 + $0x34] sm:$0xf]
    %v1389 = vld [vmem:[%s1374 + $0x38] sm:$0xf]
    %v1390 = vld [vmem:[%s1374 + $0x3c] sm:$0xf]
    %v1407 = vunpack.c.l.b16 %v1375
    %v1408 = vunpack.c.l.b16 %v1376
    %v1409 = vunpack.c.l.b16 %v1377
    %v1410 = vunpack.c.l.b16 %v1378
    %v1411 = vunpack.c.l.b16 %v1379
    %v1412 = vunpack.c.l.b16 %v1380
    %v1413 = vunpack.c.l.b16 %v1381
    %v1414 = vunpack.c.l.b16 %v1382
    %v1415 = vunpack.c.l.b16 %v1383
    %v1416 = vunpack.c.l.b16 %v1384
    %v1417 = vunpack.c.l.b16 %v1385
    %v1418 = vunpack.c.l.b16 %v1386
    %v1419 = vunpack.c.l.b16 %v1387
    %v1420 = vunpack.c.l.b16 %v1388
    %v1421 = vunpack.c.l.b16 %v1389
    %v1422 = vunpack.c.l.b16 %v1390
    %v1423 = vpack.c.b16 %v1408, %v1407
    %v1424 = vpack.c.b16 %v1410, %v1409
    %v1425 = vpack.c.b16 %v1412, %v1411
    %v1426 = vpack.c.b16 %v1414, %v1413
    %v1427 = vpack.c.b16 %v1416, %v1415
    %v1428 = vpack.c.b16 %v1418, %v1417
    %v1429 = vpack.c.b16 %v1420, %v1419
    %v1430 = vpack.c.b16 %v1422, %v1421
    %1439 = vmatprep.subr.bf16.mxu0 0
    %1440 = vmatpush1.bf16.msra.mxu0 %v1430
    %1441 = vmatprep.subr.bf16.mxu0 0
    %1442 = vmatpush1.bf16.msra.mxu0 %v1429
    %1443 = vmatprep.subr.bf16.mxu0 0
    %1444 = vmatpush1.bf16.msra.mxu0 %v1428
    %1445 = vmatprep.subr.bf16.mxu0 0
    %1446 = vmatpush1.bf16.msra.mxu0 %v1427
    %1447 = vmatprep.subr.bf16.mxu0 0
    %1448 = vmatpush1.bf16.msra.mxu0 %v1426
    %1449 = vmatprep.subr.bf16.mxu0 0
    %1450 = vmatpush1.bf16.msra.mxu0 %v1425
    %1451 = vmatprep.subr.bf16.mxu0 0
    %1452 = vmatpush1.bf16.msra.mxu0 %v1424
    %1453 = vmatprep.subr.bf16.mxu0 0
    %1454 = vmatpush1.bf16.msra.mxu0 %v1423
    %1455 = vmatprep.subr.bf16.mxu0 0
    %1456 = vmatpush2.bf16.msra.mxu0 0
    %1457 = vmatprep.subr.bf16.mxu0 0
    %1458 = vmatpush2.bf16.msra.mxu0 0
    %1459 = vmatprep.subr.bf16.mxu0 0
    %1460 = vmatpush2.bf16.msra.mxu0 0
    %1461 = vmatprep.subr.bf16.mxu0 0
    %1462 = vmatpush2.bf16.msra.mxu0 0
    %1463 = vmatprep.subr.bf16.mxu0 0
    %1464 = vmatpush2.bf16.msra.mxu0 0
    %1465 = vmatprep.subr.bf16.mxu0 0
    %1466 = vmatpush2.bf16.msra.mxu0 0
    %1467 = vmatprep.subr.bf16.mxu0 0
    %1468 = vmatpush2.bf16.msra.mxu0 0
    %1469 = vmatprep.subr.bf16.mxu0 0
    %1470 = vmatpush2.bf16.msra.mxu0 0
    %1471 = vmatprep.mubr.bf16.mxu0 0
    %1472 = vmatmul.mubr.bf16.gmra.mxu0 %v225
    %v1473 = vpop.f32.mrf.mxu0
    %v1474 = vadd.f32 0.0, %v1473
    %v1475 = vpop.f32.mrf.mxu0
    %v1476 = vpop.f32.mrf.mxu0
    %v1477 = vadd.f32 0.0, %v1476
    %v1478 = vpop.f32.mrf.mxu0
    %1479 = vmatprep.mubr.bf16.mxu0 0
    %1480 = vmatmul.mubr.bf16.gmra.mxu0 %v226
    %v1481 = vpop.f32.mrf.mxu0
    %v1482 = vadd.f32 0.0, %v1481
    %v1483 = vpop.f32.mrf.mxu0
    %v1484 = vpop.f32.mrf.mxu0
    %v1485 = vadd.f32 0.0, %v1484
    %v1486 = vpop.f32.mrf.mxu0
    %1487 = vmatprep.mubr.bf16.mxu0 0
    %1488 = vmatmul.mubr.bf16.gmra.mxu0 %v227
    %v1489 = vpop.f32.mrf.mxu0
    %v1490 = vadd.f32 0.0, %v1489
    %v1491 = vpop.f32.mrf.mxu0
    %v1492 = vpop.f32.mrf.mxu0
    %v1493 = vadd.f32 0.0, %v1492
    %v1494 = vpop.f32.mrf.mxu0
    %1495 = vmatprep.mubr.bf16.mxu0 0
    %1496 = vmatmul.mubr.bf16.gmra.mxu0 %v228
    %v1497 = vpop.f32.mrf.mxu0
    %v1498 = vadd.f32 0.0, %v1497
    %v1499 = vpop.f32.mrf.mxu0
    %v1500 = vpop.f32.mrf.mxu0
    %v1501 = vadd.f32 0.0, %v1500
    %v1502 = vpop.f32.mrf.mxu0
    %1503 = vmatprep.mubr.bf16.mxu0 0
    %1504 = vmatmul.mubr.bf16.gmra.mxu0 %v229
    %v1505 = vpop.f32.mrf.mxu0
    %v1506 = vadd.f32 0.0, %v1505
    %v1507 = vpop.f32.mrf.mxu0
    %v1508 = vpop.f32.mrf.mxu0
    %v1509 = vadd.f32 0.0, %v1508
    %v1510 = vpop.f32.mrf.mxu0
    %1511 = vmatprep.mubr.bf16.mxu0 0
    %1512 = vmatmul.mubr.bf16.gmra.mxu0 %v230
    %v1513 = vpop.f32.mrf.mxu0
    %v1514 = vadd.f32 0.0, %v1513
    %v1515 = vpop.f32.mrf.mxu0
    %v1516 = vpop.f32.mrf.mxu0
    %v1517 = vadd.f32 0.0, %v1516
    %v1518 = vpop.f32.mrf.mxu0
    %1519 = vmatprep.mubr.bf16.mxu0 0
    %1520 = vmatmul.mubr.bf16.gmra.mxu0 %v231
    %v1521 = vpop.f32.mrf.mxu0
    %v1522 = vadd.f32 0.0, %v1521
    %v1523 = vpop.f32.mrf.mxu0
    %v1524 = vpop.f32.mrf.mxu0
    %v1525 = vadd.f32 0.0, %v1524
    %v1526 = vpop.f32.mrf.mxu0
    %1527 = vmatprep.mubr.bf16.mxu0 0
    %1528 = vmatmul.mubr.bf16.gmra.mxu0 %v232
    %v1529 = vpop.f32.mrf.mxu0
    %v1530 = vadd.f32 0.0, %v1529
    %v1531 = vpop.f32.mrf.mxu0
    %v1532 = vpop.f32.mrf.mxu0
    %v1533 = vadd.f32 0.0, %v1532
    %v1534 = vpop.f32.mrf.mxu0
    %1535 = vdwg.mxu0
    %v1552 = vunpack.c.l.b16 %v1358
    %v1553 = vunpack.c.l.b16 %v1359
    %v1554 = vunpack.c.l.b16 %v1360
    %v1555 = vunpack.c.l.b16 %v1361
    %v1556 = vunpack.c.l.b16 %v1362
    %v1557 = vunpack.c.l.b16 %v1363
    %v1558 = vunpack.c.l.b16 %v1364
    %v1559 = vunpack.c.l.b16 %v1365
    %v1560 = vunpack.c.l.b16 %v1366
    %v1561 = vunpack.c.l.b16 %v1367
    %v1562 = vunpack.c.l.b16 %v1368
    %v1563 = vunpack.c.l.b16 %v1369
    %v1564 = vunpack.c.l.b16 %v1370
    %v1565 = vunpack.c.l.b16 %v1371
    %v1566 = vunpack.c.l.b16 %v1372
    %v1567 = vunpack.c.l.b16 %v1373
    %v1568 = vpack.c.b16 %v1553, %v1552
    %v1569 = vpack.c.b16 %v1555, %v1554
    %v1570 = vpack.c.b16 %v1557, %v1556
    %v1571 = vpack.c.b16 %v1559, %v1558
    %v1572 = vpack.c.b16 %v1561, %v1560
    %v1573 = vpack.c.b16 %v1563, %v1562
    %v1574 = vpack.c.b16 %v1565, %v1564
    %v1575 = vpack.c.b16 %v1567, %v1566
    %1584 = vmatprep.subr.bf16.mxu0 0
    %1585 = vmatpush1.bf16.msra.mxu0 %v1575
    %1586 = vmatprep.subr.bf16.mxu0 0
    %1587 = vmatpush1.bf16.msra.mxu0 %v1574
    %1588 = vmatprep.subr.bf16.mxu0 0
    %1589 = vmatpush1.bf16.msra.mxu0 %v1573
    %1590 = vmatprep.subr.bf16.mxu0 0
    %1591 = vmatpush1.bf16.msra.mxu0 %v1572
    %1592 = vmatprep.subr.bf16.mxu0 0
    %1593 = vmatpush1.bf16.msra.mxu0 %v1571
    %1594 = vmatprep.subr.bf16.mxu0 0
    %1595 = vmatpush1.bf16.msra.mxu0 %v1570
    %1596 = vmatprep.subr.bf16.mxu0 0
    %1597 = vmatpush1.bf16.msra.mxu0 %v1569
    %1598 = vmatprep.subr.bf16.mxu0 0
    %1599 = vmatpush1.bf16.msra.mxu0 %v1568
    %1600 = vmatprep.subr.bf16.mxu0 0
    %1601 = vmatpush2.bf16.msra.mxu0 0
    %1602 = vmatprep.subr.bf16.mxu0 0
    %1603 = vmatpush2.bf16.msra.mxu0 0
    %1604 = vmatprep.subr.bf16.mxu0 0
    %1605 = vmatpush2.bf16.msra.mxu0 0
    %1606 = vmatprep.subr.bf16.mxu0 0
    %1607 = vmatpush2.bf16.msra.mxu0 0
    %1608 = vmatprep.subr.bf16.mxu0 0
    %1609 = vmatpush2.bf16.msra.mxu0 0
    %1610 = vmatprep.subr.bf16.mxu0 0
    %1611 = vmatpush2.bf16.msra.mxu0 0
    %1612 = vmatprep.subr.bf16.mxu0 0
    %1613 = vmatpush2.bf16.msra.mxu0 0
    %1614 = vmatprep.subr.bf16.mxu0 0
    %1615 = vmatpush2.bf16.msra.mxu0 0
    %1616 = vmatprep.mubr.bf16.mxu0 0
    %1617 = vmatmul.mubr.bf16.gmra.mxu0 %v217
    %v1618 = vpop.f32.mrf.mxu0
    %v1619 = vadd.f32 %v1474, %v1618
    %v1620 = vpop.f32.mrf.mxu0
    %v1621 = vpop.f32.mrf.mxu0
    %v1622 = vadd.f32 %v1477, %v1621
    %v1623 = vpop.f32.mrf.mxu0
    %1624 = vmatprep.mubr.bf16.mxu0 0
    %1625 = vmatmul.mubr.bf16.gmra.mxu0 %v218
    %v1626 = vpop.f32.mrf.mxu0
    %v1627 = vadd.f32 %v1482, %v1626
    %v1628 = vpop.f32.mrf.mxu0
    %v1629 = vpop.f32.mrf.mxu0
    %v1630 = vadd.f32 %v1485, %v1629
    %v1631 = vpop.f32.mrf.mxu0
    %1632 = vmatprep.mubr.bf16.mxu0 0
    %1633 = vmatmul.mubr.bf16.gmra.mxu0 %v219
    %v1634 = vpop.f32.mrf.mxu0
    %v1635 = vadd.f32 %v1490, %v1634
    %v1636 = vpop.f32.mrf.mxu0
    %v1637 = vpop.f32.mrf.mxu0
    %v1638 = vadd.f32 %v1493, %v1637
    %v1639 = vpop.f32.mrf.mxu0
    %1640 = vmatprep.mubr.bf16.mxu0 0
    %1641 = vmatmul.mubr.bf16.gmra.mxu0 %v220
    %v1642 = vpop.f32.mrf.mxu0
    %v1643 = vadd.f32 %v1498, %v1642
    %v1644 = vpop.f32.mrf.mxu0
    %v1645 = vpop.f32.mrf.mxu0
    %v1646 = vadd.f32 %v1501, %v1645
    %v1647 = vpop.f32.mrf.mxu0
    %1648 = vmatprep.mubr.bf16.mxu0 0
    %1649 = vmatmul.mubr.bf16.gmra.mxu0 %v221
    %v1650 = vpop.f32.mrf.mxu0
    %v1651 = vadd.f32 %v1506, %v1650
    %v1652 = vpop.f32.mrf.mxu0
    %v1653 = vpop.f32.mrf.mxu0
    %v1654 = vadd.f32 %v1509, %v1653
    %v1655 = vpop.f32.mrf.mxu0
    %1656 = vmatprep.mubr.bf16.mxu0 0
    %1657 = vmatmul.mubr.bf16.gmra.mxu0 %v222
    %v1658 = vpop.f32.mrf.mxu0
    %v1659 = vadd.f32 %v1514, %v1658
    %v1660 = vpop.f32.mrf.mxu0
    %v1661 = vpop.f32.mrf.mxu0
    %v1662 = vadd.f32 %v1517, %v1661
    %v1663 = vpop.f32.mrf.mxu0
    %1664 = vmatprep.mubr.bf16.mxu0 0
    %1665 = vmatmul.mubr.bf16.gmra.mxu0 %v223
    %v1666 = vpop.f32.mrf.mxu0
    %v1667 = vadd.f32 %v1522, %v1666
    %v1668 = vpop.f32.mrf.mxu0
    %v1669 = vpop.f32.mrf.mxu0
    %v1670 = vadd.f32 %v1525, %v1669
    %v1671 = vpop.f32.mrf.mxu0
    %1672 = vmatprep.mubr.bf16.mxu0 0
    %1673 = vmatmul.mubr.bf16.gmra.mxu0 %v224
    %v1674 = vpop.f32.mrf.mxu0
    %v1675 = vadd.f32 %v1530, %v1674
    %v1676 = vpop.f32.mrf.mxu0
    %v1677 = vpop.f32.mrf.mxu0
    %v1678 = vadd.f32 %v1533, %v1677
    %v1679 = vpop.f32.mrf.mxu0
    %1680 = vdwg.mxu0
    %s1681 = scalar_lea.vmem [#allocation4], 512
    %v1682 = vld [vmem:[%s1681] sm:$0xf]
    %v1683 = vld [vmem:[%s1681 + $0x4] sm:$0xf]
    %v1684 = vld [vmem:[%s1681 + $0x8] sm:$0xf]
    %v1685 = vld [vmem:[%s1681 + $0xc] sm:$0xf]
    %v1686 = vld [vmem:[%s1681 + $0x10] sm:$0xf]
    %v1687 = vld [vmem:[%s1681 + $0x14] sm:$0xf]
    %v1688 = vld [vmem:[%s1681 + $0x18] sm:$0xf]
    %v1689 = vld [vmem:[%s1681 + $0x1c] sm:$0xf]
    %v1690 = vld [vmem:[%s1681 + $0x20] sm:$0xf]
    %v1691 = vld [vmem:[%s1681 + $0x24] sm:$0xf]
    %v1692 = vld [vmem:[%s1681 + $0x28] sm:$0xf]
    %v1693 = vld [vmem:[%s1681 + $0x2c] sm:$0xf]
    %v1694 = vld [vmem:[%s1681 + $0x30] sm:$0xf]
    %v1695 = vld [vmem:[%s1681 + $0x34] sm:$0xf]
    %v1696 = vld [vmem:[%s1681 + $0x38] sm:$0xf]
    %v1697 = vld [vmem:[%s1681 + $0x3c] sm:$0xf]
    %v1714 = vunpack.c.l.b16 %v1682
    %v1715 = vunpack.c.l.b16 %v1683
    %v1716 = vunpack.c.l.b16 %v1684
    %v1717 = vunpack.c.l.b16 %v1685
    %v1718 = vunpack.c.l.b16 %v1686
    %v1719 = vunpack.c.l.b16 %v1687
    %v1720 = vunpack.c.l.b16 %v1688
    %v1721 = vunpack.c.l.b16 %v1689
    %v1722 = vunpack.c.l.b16 %v1690
    %v1723 = vunpack.c.l.b16 %v1691
    %v1724 = vunpack.c.l.b16 %v1692
    %v1725 = vunpack.c.l.b16 %v1693
    %v1726 = vunpack.c.l.b16 %v1694
    %v1727 = vunpack.c.l.b16 %v1695
    %v1728 = vunpack.c.l.b16 %v1696
    %v1729 = vunpack.c.l.b16 %v1697
    %v1730 = vpack.c.b16 %v1715, %v1714
    %v1731 = vpack.c.b16 %v1717, %v1716
    %v1732 = vpack.c.b16 %v1719, %v1718
    %v1733 = vpack.c.b16 %v1721, %v1720
    %v1734 = vpack.c.b16 %v1723, %v1722
    %v1735 = vpack.c.b16 %v1725, %v1724
    %v1736 = vpack.c.b16 %v1727, %v1726
    %v1737 = vpack.c.b16 %v1729, %v1728
    %1746 = vmatprep.subr.bf16.mxu0 0
    %1747 = vmatpush1.bf16.msra.mxu0 %v1737
    %1748 = vmatprep.subr.bf16.mxu0 0
    %1749 = vmatpush1.bf16.msra.mxu0 %v1736
    %1750 = vmatprep.subr.bf16.mxu0 0
    %1751 = vmatpush1.bf16.msra.mxu0 %v1735
    %1752 = vmatprep.subr.bf16.mxu0 0
    %1753 = vmatpush1.bf16.msra.mxu0 %v1734
    %1754 = vmatprep.subr.bf16.mxu0 0
    %1755 = vmatpush1.bf16.msra.mxu0 %v1733
    %1756 = vmatprep.subr.bf16.mxu0 0
    %1757 = vmatpush1.bf16.msra.mxu0 %v1732
    %1758 = vmatprep.subr.bf16.mxu0 0
    %1759 = vmatpush1.bf16.msra.mxu0 %v1731
    %1760 = vmatprep.subr.bf16.mxu0 0
    %1761 = vmatpush1.bf16.msra.mxu0 %v1730
    %1762 = vmatprep.subr.bf16.mxu0 0
    %1763 = vmatpush2.bf16.msra.mxu0 0
    %1764 = vmatprep.subr.bf16.mxu0 0
    %1765 = vmatpush2.bf16.msra.mxu0 0
    %1766 = vmatprep.subr.bf16.mxu0 0
    %1767 = vmatpush2.bf16.msra.mxu0 0
    %1768 = vmatprep.subr.bf16.mxu0 0
    %1769 = vmatpush2.bf16.msra.mxu0 0
    %1770 = vmatprep.subr.bf16.mxu0 0
    %1771 = vmatpush2.bf16.msra.mxu0 0
    %1772 = vmatprep.subr.bf16.mxu0 0
    %1773 = vmatpush2.bf16.msra.mxu0 0
    %1774 = vmatprep.subr.bf16.mxu0 0
    %1775 = vmatpush2.bf16.msra.mxu0 0
    %1776 = vmatprep.subr.bf16.mxu0 0
    %1777 = vmatpush2.bf16.msra.mxu0 0
    %1778 = vmatprep.mubr.bf16.mxu0 0
    %1779 = vmatmul.mubr.bf16.gmra.mxu0 %v346
    %v1780 = vpop.f32.mrf.mxu0
    %v1781 = vadd.f32 0.0, %v1780
    %v1782 = vpop.f32.mrf.mxu0
    %v1783 = vpop.f32.mrf.mxu0
    %v1784 = vadd.f32 0.0, %v1783
    %v1785 = vpop.f32.mrf.mxu0
    %1786 = vmatprep.mubr.bf16.mxu0 0
    %1787 = vmatmul.mubr.bf16.gmra.mxu0 %v347
    %v1788 = vpop.f32.mrf.mxu0
    %v1789 = vadd.f32 0.0, %v1788
    %v1790 = vpop.f32.mrf.mxu0
    %v1791 = vpop.f32.mrf.mxu0
    %v1792 = vadd.f32 0.0, %v1791
    %v1793 = vpop.f32.mrf.mxu0
    %1794 = vmatprep.mubr.bf16.mxu0 0
    %1795 = vmatmul.mubr.bf16.gmra.mxu0 %v348
    %v1796 = vpop.f32.mrf.mxu0
    %v1797 = vadd.f32 0.0, %v1796
    %v1798 = vpop.f32.mrf.mxu0
    %v1799 = vpop.f32.mrf.mxu0
    %v1800 = vadd.f32 0.0, %v1799
    %v1801 = vpop.f32.mrf.mxu0
    %1802 = vmatprep.mubr.bf16.mxu0 0
    %1803 = vmatmul.mubr.bf16.gmra.mxu0 %v349
    %v1804 = vpop.f32.mrf.mxu0
    %v1805 = vadd.f32 0.0, %v1804
    %v1806 = vpop.f32.mrf.mxu0
    %v1807 = vpop.f32.mrf.mxu0
    %v1808 = vadd.f32 0.0, %v1807
    %v1809 = vpop.f32.mrf.mxu0
    %1810 = vmatprep.mubr.bf16.mxu0 0
    %1811 = vmatmul.mubr.bf16.gmra.mxu0 %v350
    %v1812 = vpop.f32.mrf.mxu0
    %v1813 = vadd.f32 0.0, %v1812
    %v1814 = vpop.f32.mrf.mxu0
    %v1815 = vpop.f32.mrf.mxu0
    %v1816 = vadd.f32 0.0, %v1815
    %v1817 = vpop.f32.mrf.mxu0
    %1818 = vmatprep.mubr.bf16.mxu0 0
    %1819 = vmatmul.mubr.bf16.gmra.mxu0 %v351
    %v1820 = vpop.f32.mrf.mxu0
    %v1821 = vadd.f32 0.0, %v1820
    %v1822 = vpop.f32.mrf.mxu0
    %v1823 = vpop.f32.mrf.mxu0
    %v1824 = vadd.f32 0.0, %v1823
    %v1825 = vpop.f32.mrf.mxu0
    %1826 = vmatprep.mubr.bf16.mxu0 0
    %1827 = vmatmul.mubr.bf16.gmra.mxu0 %v352
    %v1828 = vpop.f32.mrf.mxu0
    %v1829 = vadd.f32 0.0, %v1828
    %v1830 = vpop.f32.mrf.mxu0
    %v1831 = vpop.f32.mrf.mxu0
    %v1832 = vadd.f32 0.0, %v1831
    %v1833 = vpop.f32.mrf.mxu0
    %1834 = vmatprep.mubr.bf16.mxu0 0
    %1835 = vmatmul.mubr.bf16.gmra.mxu0 %v353
    %v1836 = vpop.f32.mrf.mxu0
    %v1837 = vadd.f32 0.0, %v1836
    %v1838 = vpop.f32.mrf.mxu0
    %v1839 = vpop.f32.mrf.mxu0
    %v1840 = vadd.f32 0.0, %v1839
    %v1841 = vpop.f32.mrf.mxu0
    %1842 = vdwg.mxu0
    %v1843 = vadd.f32 %v1619, %v1781
    %v1844 = vadd.f32 %v1622, %v1784
    %v1845 = vadd.f32 %v1627, %v1789
    %v1846 = vadd.f32 %v1630, %v1792
    %v1847 = vadd.f32 %v1635, %v1797
    %v1848 = vadd.f32 %v1638, %v1800
    %v1849 = vadd.f32 %v1643, %v1805
    %v1850 = vadd.f32 %v1646, %v1808
    %v1851 = vadd.f32 %v1651, %v1813
    %v1852 = vadd.f32 %v1654, %v1816
    %v1853 = vadd.f32 %v1659, %v1821
    %v1854 = vadd.f32 %v1662, %v1824
    %v1855 = vadd.f32 %v1667, %v1829
    %v1856 = vadd.f32 %v1670, %v1832
    %v1857 = vadd.f32 %v1675, %v1837
    %v1858 = vadd.f32 %v1678, %v1840
    %1859 = vset.pattern.permute.xlu0 3
    %1860 = vperm.xlu0 %1859, %v70
    %v1861 = vpop.permute.xlu0 %1860
    %1863 = vset.pattern.permute.xlu0 3
    %1864 = vperm.xlu0 %1863, %v71
    %v1865 = vpop.permute.xlu0 %1864
    %1867 = vset.pattern.permute.xlu0 3
    %1868 = vperm.xlu0 %1867, %v72
    %v1869 = vpop.permute.xlu0 %1868
    %1871 = vset.pattern.permute.xlu0 3
    %1872 = vperm.xlu0 %1871, %v73
    %v1873 = vpop.permute.xlu0 %1872
    %1875 = vset.pattern.permute.xlu0 3
    %1876 = vperm.xlu0 %1875, %v74
    %v1877 = vpop.permute.xlu0 %1876
    %1879 = vset.pattern.permute.xlu0 3
    %1880 = vperm.xlu0 %1879, %v75
    %v1881 = vpop.permute.xlu0 %1880
    %1883 = vset.pattern.permute.xlu0 3
    %1884 = vperm.xlu0 %1883, %v76
    %v1885 = vpop.permute.xlu0 %1884
    %1887 = vset.pattern.permute.xlu0 3
    %1888 = vperm.xlu0 %1887, %v77
    %v1889 = vpop.permute.xlu0 %1888
    %1891 = vset.pattern.permute.xlu0 3
    %1892 = vperm.xlu0 %1891, %v78
    %v1893 = vpop.permute.xlu0 %1892
    %1895 = vset.pattern.permute.xlu0 3
    %1896 = vperm.xlu0 %1895, %v79
    %v1897 = vpop.permute.xlu0 %1896
    %1899 = vset.pattern.permute.xlu0 3
    %1900 = vperm.xlu0 %1899, %v80
    %v1901 = vpop.permute.xlu0 %1900
    %1903 = vset.pattern.permute.xlu0 3
    %1904 = vperm.xlu0 %1903, %v81
    %v1905 = vpop.permute.xlu0 %1904
    %1907 = vset.pattern.permute.xlu0 3
    %1908 = vperm.xlu0 %1907, %v82
    %v1909 = vpop.permute.xlu0 %1908
    %1911 = vset.pattern.permute.xlu0 3
    %1912 = vperm.xlu0 %1911, %v83
    %v1913 = vpop.permute.xlu0 %1912
    %1915 = vset.pattern.permute.xlu0 3
    %1916 = vperm.xlu0 %1915, %v84
    %v1917 = vpop.permute.xlu0 %1916
    %1919 = vset.pattern.permute.xlu0 3
    %1920 = vperm.xlu0 %1919, %v85
    %v1921 = vpop.permute.xlu0 %1920
    %v1923 = vmul.f32 %v854, %v1861
    %v1924 = vmul.f32 %v839, %v1865
    %v1925 = vmul.f32 %v840, %v1869
    %v1926 = vmul.f32 %v841, %v1873
    %v1927 = vmul.f32 %v842, %v1877
    %v1928 = vmul.f32 %v843, %v1881
    %v1929 = vmul.f32 %v844, %v1885
    %v1930 = vmul.f32 %v845, %v1889
    %v1931 = vmul.f32 %v846, %v1893
    %v1932 = vmul.f32 %v847, %v1897
    %v1933 = vmul.f32 %v848, %v1901
    %v1934 = vmul.f32 %v849, %v1905
    %v1935 = vmul.f32 %v850, %v1909
    %v1936 = vmul.f32 %v851, %v1913
    %v1937 = vmul.f32 %v852, %v1917
    %v1938 = vmul.f32 %v853, %v1921
    %v1939 = vadd.f32 %v1923, %v1341
    %v1940 = vadd.f32 %v1924, %v1342
    %v1941 = vadd.f32 %v1925, %v1343
    %v1942 = vadd.f32 %v1926, %v1344
    %v1943 = vadd.f32 %v1927, %v1345
    %v1944 = vadd.f32 %v1928, %v1346
    %v1945 = vadd.f32 %v1929, %v1347
    %v1946 = vadd.f32 %v1930, %v1348
    %v1947 = vadd.f32 %v1931, %v1349
    %v1948 = vadd.f32 %v1932, %v1350
    %v1949 = vadd.f32 %v1933, %v1351
    %v1950 = vadd.f32 %v1934, %v1352
    %v1951 = vadd.f32 %v1935, %v1353
    %v1952 = vadd.f32 %v1936, %v1354
    %v1953 = vadd.f32 %v1937, %v1355
    %v1954 = vadd.f32 %v1938, %v1356
    %1955 = vset.pattern.permute.xlu0 4
    %1956 = vperm.xlu0 %1955, %v70
    %v1957 = vpop.permute.xlu0 %1956
    %1959 = vset.pattern.permute.xlu0 4
    %1960 = vperm.xlu0 %1959, %v71
    %v1961 = vpop.permute.xlu0 %1960
    %1963 = vset.pattern.permute.xlu0 4
    %1964 = vperm.xlu0 %1963, %v72
    %v1965 = vpop.permute.xlu0 %1964
    %1967 = vset.pattern.permute.xlu0 4
    %1968 = vperm.xlu0 %1967, %v73
    %v1969 = vpop.permute.xlu0 %1968
    %1971 = vset.pattern.permute.xlu0 4
    %1972 = vperm.xlu0 %1971, %v74
    %v1973 = vpop.permute.xlu0 %1972
    %1975 = vset.pattern.permute.xlu0 4
    %1976 = vperm.xlu0 %1975, %v75
    %v1977 = vpop.permute.xlu0 %1976
    %1979 = vset.pattern.permute.xlu0 4
    %1980 = vperm.xlu0 %1979, %v76
    %v1981 = vpop.permute.xlu0 %1980
    %1983 = vset.pattern.permute.xlu0 4
    %1984 = vperm.xlu0 %1983, %v77
    %v1985 = vpop.permute.xlu0 %1984
    %1987 = vset.pattern.permute.xlu0 4
    %1988 = vperm.xlu0 %1987, %v78
    %v1989 = vpop.permute.xlu0 %1988
    %1991 = vset.pattern.permute.xlu0 4
    %1992 = vperm.xlu0 %1991, %v79
    %v1993 = vpop.permute.xlu0 %1992
    %1995 = vset.pattern.permute.xlu0 4
    %1996 = vperm.xlu0 %1995, %v80
    %v1997 = vpop.permute.xlu0 %1996
    %1999 = vset.pattern.permute.xlu0 4
    %2000 = vperm.xlu0 %1999, %v81
    %v2001 = vpop.permute.xlu0 %2000
    %2003 = vset.pattern.permute.xlu0 4
    %2004 = vperm.xlu0 %2003, %v82
    %v2005 = vpop.permute.xlu0 %2004
    %2007 = vset.pattern.permute.xlu0 4
    %2008 = vperm.xlu0 %2007, %v83
    %v2009 = vpop.permute.xlu0 %2008
    %2011 = vset.pattern.permute.xlu0 4
    %2012 = vperm.xlu0 %2011, %v84
    %v2013 = vpop.permute.xlu0 %2012
    %2015 = vset.pattern.permute.xlu0 4
    %2016 = vperm.xlu0 %2015, %v85
    %v2017 = vpop.permute.xlu0 %2016
    %v2019 = vmul.f32 %v1844, %v1957
    %v2020 = vmul.f32 %v1845, %v1961
    %v2021 = vmul.f32 %v1846, %v1965
    %v2022 = vmul.f32 %v1847, %v1969
    %v2023 = vmul.f32 %v1848, %v1973
    %v2024 = vmul.f32 %v1849, %v1977
    %v2025 = vmul.f32 %v1850, %v1981
    %v2026 = vmul.f32 %v1851, %v1985
    %v2027 = vmul.f32 %v1852, %v1989
    %v2028 = vmul.f32 %v1853, %v1993
    %v2029 = vmul.f32 %v1854, %v1997
    %v2030 = vmul.f32 %v1855, %v2001
    %v2031 = vmul.f32 %v1856, %v2005
    %v2032 = vmul.f32 %v1857, %v2009
    %v2033 = vmul.f32 %v1858, %v2013
    %v2034 = vmul.f32 %v1843, %v2017
    %v2035 = vadd.f32 %v1939, %v2019
    %v2036 = vadd.f32 %v1940, %v2020
    %v2037 = vadd.f32 %v1941, %v2021
    %v2038 = vadd.f32 %v1942, %v2022
    %v2039 = vadd.f32 %v1943, %v2023
    %v2040 = vadd.f32 %v1944, %v2024
    %v2041 = vadd.f32 %v1945, %v2025
    %v2042 = vadd.f32 %v1946, %v2026
    %v2043 = vadd.f32 %v1947, %v2027
    %v2044 = vadd.f32 %v1948, %v2028
    %v2045 = vadd.f32 %v1949, %v2029
    %v2046 = vadd.f32 %v1950, %v2030
    %v2047 = vadd.f32 %v1951, %v2031
    %v2048 = vadd.f32 %v1952, %v2032
    %v2049 = vadd.f32 %v1953, %v2033
    %v2050 = vadd.f32 %v1954, %v2034
    %v2051 = vld [vmem:[%s3] sm:$0x1]
    %v2052 = vld [vmem:[%s4] sm:$0x1]
    %2053 = vset.pattern.permute.xlu0 0
    %2054 = vperm.xlu0 %2053, %v70
    %v2055 = vpop.permute.xlu0 %2054
    %2057 = vset.pattern.permute.xlu0 0
    %2058 = vperm.xlu0 %2057, %v71
    %v2059 = vpop.permute.xlu0 %2058
    %2061 = vset.pattern.permute.xlu0 0
    %2062 = vperm.xlu0 %2061, %v72
    %v2063 = vpop.permute.xlu0 %2062
    %2065 = vset.pattern.permute.xlu0 0
    %2066 = vperm.xlu0 %2065, %v73
    %v2067 = vpop.permute.xlu0 %2066
    %2069 = vset.pattern.permute.xlu0 0
    %2070 = vperm.xlu0 %2069, %v74
    %v2071 = vpop.permute.xlu0 %2070
    %2073 = vset.pattern.permute.xlu0 0
    %2074 = vperm.xlu0 %2073, %v75
    %v2075 = vpop.permute.xlu0 %2074
    %2077 = vset.pattern.permute.xlu0 0
    %2078 = vperm.xlu0 %2077, %v76
    %v2079 = vpop.permute.xlu0 %2078
    %2081 = vset.pattern.permute.xlu0 0
    %2082 = vperm.xlu0 %2081, %v77
    %v2083 = vpop.permute.xlu0 %2082
    %2085 = vset.pattern.permute.xlu0 0
    %2086 = vperm.xlu0 %2085, %v78
    %v2087 = vpop.permute.xlu0 %2086
    %2089 = vset.pattern.permute.xlu0 0
    %2090 = vperm.xlu0 %2089, %v79
    %v2091 = vpop.permute.xlu0 %2090
    %2093 = vset.pattern.permute.xlu0 0
    %2094 = vperm.xlu0 %2093, %v80
    %v2095 = vpop.permute.xlu0 %2094
    %2097 = vset.pattern.permute.xlu0 0
    %2098 = vperm.xlu0 %2097, %v81
    %v2099 = vpop.permute.xlu0 %2098
    %2101 = vset.pattern.permute.xlu0 0
    %2102 = vperm.xlu0 %2101, %v82
    %v2103 = vpop.permute.xlu0 %2102
    %2105 = vset.pattern.permute.xlu0 0
    %2106 = vperm.xlu0 %2105, %v83
    %v2107 = vpop.permute.xlu0 %2106
    %2109 = vset.pattern.permute.xlu0 0
    %2110 = vperm.xlu0 %2109, %v84
    %v2111 = vpop.permute.xlu0 %2110
    %2113 = vset.pattern.permute.xlu0 0
    %2114 = vperm.xlu0 %2113, %v85
    %v2115 = vpop.permute.xlu0 %2114
    %v2117 = vmul.f32 %v2035, %v2055
    %v2118 = vmul.f32 %v2036, %v2059
    %v2119 = vmul.f32 %v2037, %v2063
    %v2120 = vmul.f32 %v2038, %v2067
    %v2121 = vmul.f32 %v2039, %v2071
    %v2122 = vmul.f32 %v2040, %v2075
    %v2123 = vmul.f32 %v2041, %v2079
    %v2124 = vmul.f32 %v2042, %v2083
    %v2125 = vmul.f32 %v2043, %v2087
    %v2126 = vmul.f32 %v2044, %v2091
    %v2127 = vmul.f32 %v2045, %v2095
    %v2128 = vmul.f32 %v2046, %v2099
    %v2129 = vmul.f32 %v2047, %v2103
    %v2130 = vmul.f32 %v2048, %v2107
    %v2131 = vmul.f32 %v2049, %v2111
    %v2132 = vmul.f32 %v2050, %v2115
    %v2133 = vadd.f32 %v2117, %v2118
    %v2134 = vadd.f32 %v2133, %v2119
    %v2135 = vadd.f32 %v2134, %v2120
    %v2136 = vadd.f32 %v2135, %v2121
    %v2137 = vadd.f32 %v2136, %v2122
    %v2138 = vadd.f32 %v2137, %v2123
    %v2139 = vadd.f32 %v2138, %v2124
    %v2140 = vadd.f32 %v2139, %v2125
    %v2141 = vadd.f32 %v2140, %v2126
    %v2142 = vadd.f32 %v2141, %v2127
    %v2143 = vadd.f32 %v2142, %v2128
    %v2144 = vadd.f32 %v2143, %v2129
    %v2145 = vadd.f32 %v2144, %v2130
    %v2146 = vadd.f32 %v2145, %v2131
    %v2147 = vadd.f32 %v2146, %v2132
    %v2148 = vrot.slane %v2147, 4
    %v2149 = vadd.f32 %v2147, %v2148
    %v2150 = vrot.slane %v2149, 2
    %v2151 = vadd.f32 %v2149, %v2150
    %v2152 = vrot.slane %v2151, 1
    %v2153 = vadd.f32 %v2151, %v2152
    %v2154 = vmul.f32 %v2153, 0.0078125
    %v2155 = vmul.f32 %v2117, %v2117
    %v2156 = vmul.f32 %v2118, %v2118
    %v2157 = vmul.f32 %v2119, %v2119
    %v2158 = vmul.f32 %v2120, %v2120
    %v2159 = vmul.f32 %v2121, %v2121
    %v2160 = vmul.f32 %v2122, %v2122
    %v2161 = vmul.f32 %v2123, %v2123
    %v2162 = vmul.f32 %v2124, %v2124
    %v2163 = vmul.f32 %v2125, %v2125
    %v2164 = vmul.f32 %v2126, %v2126
    %v2165 = vmul.f32 %v2127, %v2127
    %v2166 = vmul.f32 %v2128, %v2128
    %v2167 = vmul.f32 %v2129, %v2129
    %v2168 = vmul.f32 %v2130, %v2130
    %v2169 = vmul.f32 %v2131, %v2131
    %v2170 = vmul.f32 %v2132, %v2132
    %v2171 = vadd.f32 %v2155, %v2156
    %v2172 = vadd.f32 %v2171, %v2157
    %v2173 = vadd.f32 %v2172, %v2158
    %v2174 = vadd.f32 %v2173, %v2159
    %v2175 = vadd.f32 %v2174, %v2160
    %v2176 = vadd.f32 %v2175, %v2161
    %v2177 = vadd.f32 %v2176, %v2162
    %v2178 = vadd.f32 %v2177, %v2163
    %v2179 = vadd.f32 %v2178, %v2164
    %v2180 = vadd.f32 %v2179, %v2165
    %v2181 = vadd.f32 %v2180, %v2166
    %v2182 = vadd.f32 %v2181, %v2167
    %v2183 = vadd.f32 %v2182, %v2168
    %v2184 = vadd.f32 %v2183, %v2169
    %v2185 = vadd.f32 %v2184, %v2170
    %v2186 = vrot.slane %v2185, 4
    %v2187 = vadd.f32 %v2185, %v2186
    %v2188 = vrot.slane %v2187, 2
    %v2189 = vadd.f32 %v2187, %v2188
    %v2190 = vrot.slane %v2189, 1
    %v2191 = vadd.f32 %v2189, %v2190
    %v2192 = vmul.f32 %v2191, 0.0078125
    %v2193 = vmul.f32 %v2154, %v2154
    %v2194 = vsub.f32 %v2192, %v2193
    %v2195 = vadd.f32 %v2194, 1e-05
    %v2196 = vrsqrt.pop %v2195
    %v2197 = vmul.f32 %v2051, %v2196
    %v2198 = vmul.f32 %v2154, %v2197
    %v2199 = vsub.f32 %v2052, %v2198
    %v2201 = vlaneseq
    %v2202 = vshrl.u32 %v2201, 7
    %v2203 = vsub.s32 0, %v2202
    %v2204 = vrot.slane %v2197, %v2203
    %v2206 = vmul.f32 %v2035, %v2204
    %v2207 = vmul.f32 %v2036, %v2204
    %v2208 = vmul.f32 %v2037, %v2204
    %v2209 = vmul.f32 %v2038, %v2204
    %v2210 = vmul.f32 %v2039, %v2204
    %v2211 = vmul.f32 %v2040, %v2204
    %v2212 = vmul.f32 %v2041, %v2204
    %v2213 = vmul.f32 %v2042, %v2204
    %v2214 = vmul.f32 %v2043, %v2204
    %v2215 = vmul.f32 %v2044, %v2204
    %v2216 = vmul.f32 %v2045, %v2204
    %v2217 = vmul.f32 %v2046, %v2204
    %v2218 = vmul.f32 %v2047, %v2204
    %v2219 = vmul.f32 %v2048, %v2204
    %v2220 = vmul.f32 %v2049, %v2204
    %v2221 = vmul.f32 %v2050, %v2204
    %v2223 = vlaneseq
    %v2224 = vshrl.u32 %v2223, 7
    %v2225 = vsub.s32 0, %v2224
    %v2226 = vrot.slane %v2199, %v2225
    %v2228 = vadd.f32 %v2206, %v2226
    %v2229 = vadd.f32 %v2207, %v2226
    %v2230 = vadd.f32 %v2208, %v2226
    %v2231 = vadd.f32 %v2209, %v2226
    %v2232 = vadd.f32 %v2210, %v2226
    %v2233 = vadd.f32 %v2211, %v2226
    %v2234 = vadd.f32 %v2212, %v2226
    %v2235 = vadd.f32 %v2213, %v2226
    %v2236 = vadd.f32 %v2214, %v2226
    %v2237 = vadd.f32 %v2215, %v2226
    %v2238 = vadd.f32 %v2216, %v2226
    %v2239 = vadd.f32 %v2217, %v2226
    %v2240 = vadd.f32 %v2218, %v2226
    %v2241 = vadd.f32 %v2219, %v2226
    %v2242 = vadd.f32 %v2220, %v2226
    %v2243 = vadd.f32 %v2221, %v2226
    %v2244 = vmax.f32 %v2228, 0.0
    %v2245 = vmax.f32 %v2229, 0.0
    %v2246 = vmax.f32 %v2230, 0.0
    %v2247 = vmax.f32 %v2231, 0.0
    %v2248 = vmax.f32 %v2232, 0.0
    %v2249 = vmax.f32 %v2233, 0.0
    %v2250 = vmax.f32 %v2234, 0.0
    %v2251 = vmax.f32 %v2235, 0.0
    %v2252 = vmax.f32 %v2236, 0.0
    %v2253 = vmax.f32 %v2237, 0.0
    %v2254 = vmax.f32 %v2238, 0.0
    %v2255 = vmax.f32 %v2239, 0.0
    %v2256 = vmax.f32 %v2240, 0.0
    %v2257 = vmax.f32 %v2241, 0.0
    %v2258 = vmax.f32 %v2242, 0.0
    %v2259 = vmax.f32 %v2243, 0.0
    %s2260 = smul.u32 4, 9
    %s2261 = smul.u32 %s2260, 16
    %s2262 = smul.u32 %s2261, 1
    %s2263 = sshll.u32 %s2262, 4
    %2264 = dma.done [#allocation3], %s2263
    %v2265 = vrot.slane %v2244, 7
    %v2266 = vrot.slane %v2245, 7
    %v2267 = vrot.slane %v2246, 7
    %v2268 = vrot.slane %v2247, 7
    %v2269 = vrot.slane %v2248, 7
    %v2270 = vrot.slane %v2249, 7
    %v2271 = vrot.slane %v2250, 7
    %v2272 = vrot.slane %v2251, 7
    %v2273 = vrot.slane %v2252, 7
    %v2274 = vrot.slane %v2253, 7
    %v2275 = vrot.slane %v2254, 7
    %v2276 = vrot.slane %v2255, 7
    %v2277 = vrot.slane %v2256, 7
    %v2278 = vrot.slane %v2257, 7
    %v2279 = vrot.slane %v2258, 7
    %v2280 = vrot.slane %v2259, 7
    %v2281 = vsel %vm104, %v2279, %v2280
    %v2282 = vsel %vm104, %v2278, %v2279
    %v2283 = vsel %vm104, %v2277, %v2278
    %v2284 = vsel %vm104, %v2276, %v2277
    %v2285 = vsel %vm104, %v2275, %v2276
    %v2286 = vsel %vm104, %v2274, %v2275
    %v2287 = vsel %vm104, %v2273, %v2274
    %v2288 = vsel %vm104, %v2272, %v2273
    %v2289 = vsel %vm104, %v2271, %v2272
    %v2290 = vsel %vm104, %v2270, %v2271
    %v2291 = vsel %vm104, %v2269, %v2270
    %v2292 = vsel %vm104, %v2268, %v2269
    %v2293 = vsel %vm104, %v2267, %v2268
    %v2294 = vsel %vm104, %v2266, %v2267
    %v2295 = vsel %vm104, %v2265, %v2266
    %v2296 = vsel %vm104, %v2280, %v2265
    %v2297 = vmul.f32 %v2296, %v124
    %v2298 = vmul.f32 %v2295, %v129
    %v2299 = vmul.f32 %v2294, %v134
    %v2300 = vmul.f32 %v2293, %v139
    %v2301 = vmul.f32 %v2292, %v144
    %v2302 = vmul.f32 %v2291, %v149
    %v2303 = vmul.f32 %v2290, %v154
    %v2304 = vmul.f32 %v2289, %v159
    %v2305 = vmul.f32 %v2288, %v164
    %v2306 = vmul.f32 %v2287, %v169
    %v2307 = vmul.f32 %v2286, %v174
    %v2308 = vmul.f32 %v2285, %v179
    %v2309 = vmul.f32 %v2284, %v184
    %v2310 = vmul.f32 %v2283, %v189
    %v2311 = vmul.f32 %v2282, %v194
    %v2312 = vmul.f32 %v2281, %v199
    %v2313 = vpack.c.bf16 %v2298, %v2297
    %v2314 = vpack.c.bf16 %v2300, %v2299
    %v2315 = vpack.c.bf16 %v2302, %v2301
    %v2316 = vpack.c.bf16 %v2304, %v2303
    %v2317 = vpack.c.bf16 %v2306, %v2305
    %v2318 = vpack.c.bf16 %v2308, %v2307
    %v2319 = vpack.c.bf16 %v2310, %v2309
    %v2320 = vpack.c.bf16 %v2312, %v2311
    %v2321 = vpack.c.bf16 %v2245, %v2244
    %v2322 = vpack.c.bf16 %v2247, %v2246
    %v2323 = vpack.c.bf16 %v2249, %v2248
    %v2324 = vpack.c.bf16 %v2251, %v2250
    %v2325 = vpack.c.bf16 %v2253, %v2252
    %v2326 = vpack.c.bf16 %v2255, %v2254
    %v2327 = vpack.c.bf16 %v2257, %v2256
    %v2328 = vpack.c.bf16 %v2259, %v2258
    %v2329 = vrot.slane %v2244, 1
    %v2330 = vrot.slane %v2245, 1
    %v2331 = vrot.slane %v2246, 1
    %v2332 = vrot.slane %v2247, 1
    %v2333 = vrot.slane %v2248, 1
    %v2334 = vrot.slane %v2249, 1
    %v2335 = vrot.slane %v2250, 1
    %v2336 = vrot.slane %v2251, 1
    %v2337 = vrot.slane %v2252, 1
    %v2338 = vrot.slane %v2253, 1
    %v2339 = vrot.slane %v2254, 1
    %v2340 = vrot.slane %v2255, 1
    %v2341 = vrot.slane %v2256, 1
    %v2342 = vrot.slane %v2257, 1
    %v2343 = vrot.slane %v2258, 1
    %v2344 = vrot.slane %v2259, 1
    %v2345 = vsel %vm249, %v2343, %v2344
    %v2346 = vsel %vm249, %v2342, %v2343
    %v2347 = vsel %vm249, %v2341, %v2342
    %v2348 = vsel %vm249, %v2340, %v2341
    %v2349 = vsel %vm249, %v2339, %v2340
    %v2350 = vsel %vm249, %v2338, %v2339
    %v2351 = vsel %vm249, %v2337, %v2338
    %v2352 = vsel %vm249, %v2336, %v2337
    %v2353 = vsel %vm249, %v2335, %v2336
    %v2354 = vsel %vm249, %v2334, %v2335
    %v2355 = vsel %vm249, %v2333, %v2334
    %v2356 = vsel %vm249, %v2332, %v2333
    %v2357 = vsel %vm249, %v2331, %v2332
    %v2358 = vsel %vm249, %v2330, %v2331
    %v2359 = vsel %vm249, %v2329, %v2330
    %v2360 = vsel %vm249, %v2344, %v2329
    %v2361 = vmul.f32 %v2359, %v268
    %v2362 = vmul.f32 %v2358, %v272
    %v2363 = vmul.f32 %v2357, %v276
    %v2364 = vmul.f32 %v2356, %v280
    %v2365 = vmul.f32 %v2355, %v284
    %v2366 = vmul.f32 %v2354, %v288
    %v2367 = vmul.f32 %v2353, %v292
    %v2368 = vmul.f32 %v2352, %v296
    %v2369 = vmul.f32 %v2351, %v300
    %v2370 = vmul.f32 %v2350, %v304
    %v2371 = vmul.f32 %v2349, %v308
    %v2372 = vmul.f32 %v2348, %v312
    %v2373 = vmul.f32 %v2347, %v316
    %v2374 = vmul.f32 %v2346, %v320
    %v2375 = vmul.f32 %v2345, %v324
    %v2376 = vmul.f32 %v2360, %v328
    %v2377 = vpack.c.bf16 %v2362, %v2361
    %v2378 = vpack.c.bf16 %v2364, %v2363
    %v2379 = vpack.c.bf16 %v2366, %v2365
    %v2380 = vpack.c.bf16 %v2368, %v2367
    %v2381 = vpack.c.bf16 %v2370, %v2369
    %v2382 = vpack.c.bf16 %v2372, %v2371
    %v2383 = vpack.c.bf16 %v2374, %v2373
    %v2384 = vpack.c.bf16 %v2376, %v2375
    %v2385 = vld [vmem:[#allocation2] sm:$0xf]
    %v2386 = vld [vmem:[#allocation2 + $0x4] sm:$0xf]
    %v2387 = vld [vmem:[#allocation2 + $0x8] sm:$0xf]
    %v2388 = vld [vmem:[#allocation2 + $0xc] sm:$0xf]
    %v2389 = vld [vmem:[#allocation2 + $0x10] sm:$0xf]
    %v2390 = vld [vmem:[#allocation2 + $0x14] sm:$0xf]
    %v2391 = vld [vmem:[#allocation2 + $0x18] sm:$0xf]
    %v2392 = vld [vmem:[#allocation2 + $0x1c] sm:$0xf]
    %v2393 = vld [vmem:[#allocation2 + $0x20] sm:$0xf]
    %v2394 = vld [vmem:[#allocation2 + $0x24] sm:$0xf]
    %v2395 = vld [vmem:[#allocation2 + $0x28] sm:$0xf]
    %v2396 = vld [vmem:[#allocation2 + $0x2c] sm:$0xf]
    %v2397 = vld [vmem:[#allocation2 + $0x30] sm:$0xf]
    %v2398 = vld [vmem:[#allocation2 + $0x34] sm:$0xf]
    %v2399 = vld [vmem:[#allocation2 + $0x38] sm:$0xf]
    %v2400 = vld [vmem:[#allocation2 + $0x3c] sm:$0xf]
    %s2401 = scalar_lea.vmem [#allocation2], 64
    %v2402 = vld [vmem:[%s2401] sm:$0xf]
    %v2403 = vld [vmem:[%s2401 + $0x4] sm:$0xf]
    %v2404 = vld [vmem:[%s2401 + $0x8] sm:$0xf]
    %v2405 = vld [vmem:[%s2401 + $0xc] sm:$0xf]
    %v2406 = vld [vmem:[%s2401 + $0x10] sm:$0xf]
    %v2407 = vld [vmem:[%s2401 + $0x14] sm:$0xf]
    %v2408 = vld [vmem:[%s2401 + $0x18] sm:$0xf]
    %v2409 = vld [vmem:[%s2401 + $0x1c] sm:$0xf]
    %v2410 = vld [vmem:[%s2401 + $0x20] sm:$0xf]
    %v2411 = vld [vmem:[%s2401 + $0x24] sm:$0xf]
    %v2412 = vld [vmem:[%s2401 + $0x28] sm:$0xf]
    %v2413 = vld [vmem:[%s2401 + $0x2c] sm:$0xf]
    %v2414 = vld [vmem:[%s2401 + $0x30] sm:$0xf]
    %v2415 = vld [vmem:[%s2401 + $0x34] sm:$0xf]
    %v2416 = vld [vmem:[%s2401 + $0x38] sm:$0xf]
    %v2417 = vld [vmem:[%s2401 + $0x3c] sm:$0xf]
    %v2434 = vunpack.c.l.b16 %v2402
    %v2435 = vunpack.c.l.b16 %v2403
    %v2436 = vunpack.c.l.b16 %v2404
    %v2437 = vunpack.c.l.b16 %v2405
    %v2438 = vunpack.c.l.b16 %v2406
    %v2439 = vunpack.c.l.b16 %v2407
    %v2440 = vunpack.c.l.b16 %v2408
    %v2441 = vunpack.c.l.b16 %v2409
    %v2442 = vunpack.c.l.b16 %v2410
    %v2443 = vunpack.c.l.b16 %v2411
    %v2444 = vunpack.c.l.b16 %v2412
    %v2445 = vunpack.c.l.b16 %v2413
    %v2446 = vunpack.c.l.b16 %v2414
    %v2447 = vunpack.c.l.b16 %v2415
    %v2448 = vunpack.c.l.b16 %v2416
    %v2449 = vunpack.c.l.b16 %v2417
    %v2450 = vpack.c.b16 %v2435, %v2434
    %v2451 = vpack.c.b16 %v2437, %v2436
    %v2452 = vpack.c.b16 %v2439, %v2438
    %v2453 = vpack.c.b16 %v2441, %v2440
    %v2454 = vpack.c.b16 %v2443, %v2442
    %v2455 = vpack.c.b16 %v2445, %v2444
    %v2456 = vpack.c.b16 %v2447, %v2446
    %v2457 = vpack.c.b16 %v2449, %v2448
    %2466 = vmatprep.subr.bf16.mxu0 0
    %2467 = vmatpush1.bf16.msra.mxu0 %v2457
    %2468 = vmatprep.subr.bf16.mxu0 0
    %2469 = vmatpush1.bf16.msra.mxu0 %v2456
    %2470 = vmatprep.subr.bf16.mxu0 0
    %2471 = vmatpush1.bf16.msra.mxu0 %v2455
    %2472 = vmatprep.subr.bf16.mxu0 0
    %2473 = vmatpush1.bf16.msra.mxu0 %v2454
    %2474 = vmatprep.subr.bf16.mxu0 0
    %2475 = vmatpush1.bf16.msra.mxu0 %v2453
    %2476 = vmatprep.subr.bf16.mxu0 0
    %2477 = vmatpush1.bf16.msra.mxu0 %v2452
    %2478 = vmatprep.subr.bf16.mxu0 0
    %2479 = vmatpush1.bf16.msra.mxu0 %v2451
    %2480 = vmatprep.subr.bf16.mxu0 0
    %2481 = vmatpush1.bf16.msra.mxu0 %v2450
    %2482 = vmatprep.subr.bf16.mxu0 0
    %2483 = vmatpush2.bf16.msra.mxu0 0
    %2484 = vmatprep.subr.bf16.mxu0 0
    %2485 = vmatpush2.bf16.msra.mxu0 0
    %2486 = vmatprep.subr.bf16.mxu0 0
    %2487 = vmatpush2.bf16.msra.mxu0 0
    %2488 = vmatprep.subr.bf16.mxu0 0
    %2489 = vmatpush2.bf16.msra.mxu0 0
    %2490 = vmatprep.subr.bf16.mxu0 0
    %2491 = vmatpush2.bf16.msra.mxu0 0
    %2492 = vmatprep.subr.bf16.mxu0 0
    %2493 = vmatpush2.bf16.msra.mxu0 0
    %2494 = vmatprep.subr.bf16.mxu0 0
    %2495 = vmatpush2.bf16.msra.mxu0 0
    %2496 = vmatprep.subr.bf16.mxu0 0
    %2497 = vmatpush2.bf16.msra.mxu0 0
    %2498 = vmatprep.mubr.bf16.mxu0 0
    %2499 = vmatmul.mubr.bf16.gmra.mxu0 %v2321
    %v2500 = vpop.f32.mrf.mxu0
    %v2501 = vadd.f32 0.0, %v2500
    %v2502 = vpop.f32.mrf.mxu0
    %v2503 = vpop.f32.mrf.mxu0
    %v2504 = vadd.f32 0.0, %v2503
    %v2505 = vpop.f32.mrf.mxu0
    %2506 = vmatprep.mubr.bf16.mxu0 0
    %2507 = vmatmul.mubr.bf16.gmra.mxu0 %v2322
    %v2508 = vpop.f32.mrf.mxu0
    %v2509 = vadd.f32 0.0, %v2508
    %v2510 = vpop.f32.mrf.mxu0
    %v2511 = vpop.f32.mrf.mxu0
    %v2512 = vadd.f32 0.0, %v2511
    %v2513 = vpop.f32.mrf.mxu0
    %2514 = vmatprep.mubr.bf16.mxu0 0
    %2515 = vmatmul.mubr.bf16.gmra.mxu0 %v2323
    %v2516 = vpop.f32.mrf.mxu0
    %v2517 = vadd.f32 0.0, %v2516
    %v2518 = vpop.f32.mrf.mxu0
    %v2519 = vpop.f32.mrf.mxu0
    %v2520 = vadd.f32 0.0, %v2519
    %v2521 = vpop.f32.mrf.mxu0
    %2522 = vmatprep.mubr.bf16.mxu0 0
    %2523 = vmatmul.mubr.bf16.gmra.mxu0 %v2324
    %v2524 = vpop.f32.mrf.mxu0
    %v2525 = vadd.f32 0.0, %v2524
    %v2526 = vpop.f32.mrf.mxu0
    %v2527 = vpop.f32.mrf.mxu0
    %v2528 = vadd.f32 0.0, %v2527
    %v2529 = vpop.f32.mrf.mxu0
    %2530 = vmatprep.mubr.bf16.mxu0 0
    %2531 = vmatmul.mubr.bf16.gmra.mxu0 %v2325
    %v2532 = vpop.f32.mrf.mxu0
    %v2533 = vadd.f32 0.0, %v2532
    %v2534 = vpop.f32.mrf.mxu0
    %v2535 = vpop.f32.mrf.mxu0
    %v2536 = vadd.f32 0.0, %v2535
    %v2537 = vpop.f32.mrf.mxu0
    %2538 = vmatprep.mubr.bf16.mxu0 0
    %2539 = vmatmul.mubr.bf16.gmra.mxu0 %v2326
    %v2540 = vpop.f32.mrf.mxu0
    %v2541 = vadd.f32 0.0, %v2540
    %v2542 = vpop.f32.mrf.mxu0
    %v2543 = vpop.f32.mrf.mxu0
    %v2544 = vadd.f32 0.0, %v2543
    %v2545 = vpop.f32.mrf.mxu0
    %2546 = vmatprep.mubr.bf16.mxu0 0
    %2547 = vmatmul.mubr.bf16.gmra.mxu0 %v2327
    %v2548 = vpop.f32.mrf.mxu0
    %v2549 = vadd.f32 0.0, %v2548
    %v2550 = vpop.f32.mrf.mxu0
    %v2551 = vpop.f32.mrf.mxu0
    %v2552 = vadd.f32 0.0, %v2551
    %v2553 = vpop.f32.mrf.mxu0
    %2554 = vmatprep.mubr.bf16.mxu0 0
    %2555 = vmatmul.mubr.bf16.gmra.mxu0 %v2328
    %v2556 = vpop.f32.mrf.mxu0
    %v2557 = vadd.f32 0.0, %v2556
    %v2558 = vpop.f32.mrf.mxu0
    %v2559 = vpop.f32.mrf.mxu0
    %v2560 = vadd.f32 0.0, %v2559
    %v2561 = vpop.f32.mrf.mxu0
    %2562 = vdwg.mxu0
    %v2579 = vunpack.c.l.b16 %v2385
    %v2580 = vunpack.c.l.b16 %v2386
    %v2581 = vunpack.c.l.b16 %v2387
    %v2582 = vunpack.c.l.b16 %v2388
    %v2583 = vunpack.c.l.b16 %v2389
    %v2584 = vunpack.c.l.b16 %v2390
    %v2585 = vunpack.c.l.b16 %v2391
    %v2586 = vunpack.c.l.b16 %v2392
    %v2587 = vunpack.c.l.b16 %v2393
    %v2588 = vunpack.c.l.b16 %v2394
    %v2589 = vunpack.c.l.b16 %v2395
    %v2590 = vunpack.c.l.b16 %v2396
    %v2591 = vunpack.c.l.b16 %v2397
    %v2592 = vunpack.c.l.b16 %v2398
    %v2593 = vunpack.c.l.b16 %v2399
    %v2594 = vunpack.c.l.b16 %v2400
    %v2595 = vpack.c.b16 %v2580, %v2579
    %v2596 = vpack.c.b16 %v2582, %v2581
    %v2597 = vpack.c.b16 %v2584, %v2583
    %v2598 = vpack.c.b16 %v2586, %v2585
    %v2599 = vpack.c.b16 %v2588, %v2587
    %v2600 = vpack.c.b16 %v2590, %v2589
    %v2601 = vpack.c.b16 %v2592, %v2591
    %v2602 = vpack.c.b16 %v2594, %v2593
    %2611 = vmatprep.subr.bf16.mxu0 0
    %2612 = vmatpush1.bf16.msra.mxu0 %v2602
    %2613 = vmatprep.subr.bf16.mxu0 0
    %2614 = vmatpush1.bf16.msra.mxu0 %v2601
    %2615 = vmatprep.subr.bf16.mxu0 0
    %2616 = vmatpush1.bf16.msra.mxu0 %v2600
    %2617 = vmatprep.subr.bf16.mxu0 0
    %2618 = vmatpush1.bf16.msra.mxu0 %v2599
    %2619 = vmatprep.subr.bf16.mxu0 0
    %2620 = vmatpush1.bf16.msra.mxu0 %v2598
    %2621 = vmatprep.subr.bf16.mxu0 0
    %2622 = vmatpush1.bf16.msra.mxu0 %v2597
    %2623 = vmatprep.subr.bf16.mxu0 0
    %2624 = vmatpush1.bf16.msra.mxu0 %v2596
    %2625 = vmatprep.subr.bf16.mxu0 0
    %2626 = vmatpush1.bf16.msra.mxu0 %v2595
    %2627 = vmatprep.subr.bf16.mxu0 0
    %2628 = vmatpush2.bf16.msra.mxu0 0
    %2629 = vmatprep.subr.bf16.mxu0 0
    %2630 = vmatpush2.bf16.msra.mxu0 0
    %2631 = vmatprep.subr.bf16.mxu0 0
    %2632 = vmatpush2.bf16.msra.mxu0 0
    %2633 = vmatprep.subr.bf16.mxu0 0
    %2634 = vmatpush2.bf16.msra.mxu0 0
    %2635 = vmatprep.subr.bf16.mxu0 0
    %2636 = vmatpush2.bf16.msra.mxu0 0
    %2637 = vmatprep.subr.bf16.mxu0 0
    %2638 = vmatpush2.bf16.msra.mxu0 0
    %2639 = vmatprep.subr.bf16.mxu0 0
    %2640 = vmatpush2.bf16.msra.mxu0 0
    %2641 = vmatprep.subr.bf16.mxu0 0
    %2642 = vmatpush2.bf16.msra.mxu0 0
    %2643 = vmatprep.mubr.bf16.mxu0 0
    %2644 = vmatmul.mubr.bf16.gmra.mxu0 %v2313
    %v2645 = vpop.f32.mrf.mxu0
    %v2646 = vadd.f32 %v2501, %v2645
    %v2647 = vpop.f32.mrf.mxu0
    %v2648 = vpop.f32.mrf.mxu0
    %v2649 = vadd.f32 %v2504, %v2648
    %v2650 = vpop.f32.mrf.mxu0
    %2651 = vmatprep.mubr.bf16.mxu0 0
    %2652 = vmatmul.mubr.bf16.gmra.mxu0 %v2314
    %v2653 = vpop.f32.mrf.mxu0
    %v2654 = vadd.f32 %v2509, %v2653
    %v2655 = vpop.f32.mrf.mxu0
    %v2656 = vpop.f32.mrf.mxu0
    %v2657 = vadd.f32 %v2512, %v2656
    %v2658 = vpop.f32.mrf.mxu0
    %2659 = vmatprep.mubr.bf16.mxu0 0
    %2660 = vmatmul.mubr.bf16.gmra.mxu0 %v2315
    %v2661 = vpop.f32.mrf.mxu0
    %v2662 = vadd.f32 %v2517, %v2661
    %v2663 = vpop.f32.mrf.mxu0
    %v2664 = vpop.f32.mrf.mxu0
    %v2665 = vadd.f32 %v2520, %v2664
    %v2666 = vpop.f32.mrf.mxu0
    %2667 = vmatprep.mubr.bf16.mxu0 0
    %2668 = vmatmul.mubr.bf16.gmra.mxu0 %v2316
    %v2669 = vpop.f32.mrf.mxu0
    %v2670 = vadd.f32 %v2525, %v2669
    %v2671 = vpop.f32.mrf.mxu0
    %v2672 = vpop.f32.mrf.mxu0
    %v2673 = vadd.f32 %v2528, %v2672
    %v2674 = vpop.f32.mrf.mxu0
    %2675 = vmatprep.mubr.bf16.mxu0 0
    %2676 = vmatmul.mubr.bf16.gmra.mxu0 %v2317
    %v2677 = vpop.f32.mrf.mxu0
    %v2678 = vadd.f32 %v2533, %v2677
    %v2679 = vpop.f32.mrf.mxu0
    %v2680 = vpop.f32.mrf.mxu0
    %v2681 = vadd.f32 %v2536, %v2680
    %v2682 = vpop.f32.mrf.mxu0
    %2683 = vmatprep.mubr.bf16.mxu0 0
    %2684 = vmatmul.mubr.bf16.gmra.mxu0 %v2318
    %v2685 = vpop.f32.mrf.mxu0
    %v2686 = vadd.f32 %v2541, %v2685
    %v2687 = vpop.f32.mrf.mxu0
    %v2688 = vpop.f32.mrf.mxu0
    %v2689 = vadd.f32 %v2544, %v2688
    %v2690 = vpop.f32.mrf.mxu0
    %2691 = vmatprep.mubr.bf16.mxu0 0
    %2692 = vmatmul.mubr.bf16.gmra.mxu0 %v2319
    %v2693 = vpop.f32.mrf.mxu0
    %v2694 = vadd.f32 %v2549, %v2693
    %v2695 = vpop.f32.mrf.mxu0
    %v2696 = vpop.f32.mrf.mxu0
    %v2697 = vadd.f32 %v2552, %v2696
    %v2698 = vpop.f32.mrf.mxu0
    %2699 = vmatprep.mubr.bf16.mxu0 0
    %2700 = vmatmul.mubr.bf16.gmra.mxu0 %v2320
    %v2701 = vpop.f32.mrf.mxu0
    %v2702 = vadd.f32 %v2557, %v2701
    %v2703 = vpop.f32.mrf.mxu0
    %v2704 = vpop.f32.mrf.mxu0
    %v2705 = vadd.f32 %v2560, %v2704
    %v2706 = vpop.f32.mrf.mxu0
    %2707 = vdwg.mxu0
    %s2708 = scalar_lea.vmem [#allocation2], 128
    %v2709 = vld [vmem:[%s2708] sm:$0xf]
    %v2710 = vld [vmem:[%s2708 + $0x4] sm:$0xf]
    %v2711 = vld [vmem:[%s2708 + $0x8] sm:$0xf]
    %v2712 = vld [vmem:[%s2708 + $0xc] sm:$0xf]
    %v2713 = vld [vmem:[%s2708 + $0x10] sm:$0xf]
    %v2714 = vld [vmem:[%s2708 + $0x14] sm:$0xf]
    %v2715 = vld [vmem:[%s2708 + $0x18] sm:$0xf]
    %v2716 = vld [vmem:[%s2708 + $0x1c] sm:$0xf]
    %v2717 = vld [vmem:[%s2708 + $0x20] sm:$0xf]
    %v2718 = vld [vmem:[%s2708 + $0x24] sm:$0xf]
    %v2719 = vld [vmem:[%s2708 + $0x28] sm:$0xf]
    %v2720 = vld [vmem:[%s2708 + $0x2c] sm:$0xf]
    %v2721 = vld [vmem:[%s2708 + $0x30] sm:$0xf]
    %v2722 = vld [vmem:[%s2708 + $0x34] sm:$0xf]
    %v2723 = vld [vmem:[%s2708 + $0x38] sm:$0xf]
    %v2724 = vld [vmem:[%s2708 + $0x3c] sm:$0xf]
    %v2741 = vunpack.c.l.b16 %v2709
    %v2742 = vunpack.c.l.b16 %v2710
    %v2743 = vunpack.c.l.b16 %v2711
    %v2744 = vunpack.c.l.b16 %v2712
    %v2745 = vunpack.c.l.b16 %v2713
    %v2746 = vunpack.c.l.b16 %v2714
    %v2747 = vunpack.c.l.b16 %v2715
    %v2748 = vunpack.c.l.b16 %v2716
    %v2749 = vunpack.c.l.b16 %v2717
    %v2750 = vunpack.c.l.b16 %v2718
    %v2751 = vunpack.c.l.b16 %v2719
    %v2752 = vunpack.c.l.b16 %v2720
    %v2753 = vunpack.c.l.b16 %v2721
    %v2754 = vunpack.c.l.b16 %v2722
    %v2755 = vunpack.c.l.b16 %v2723
    %v2756 = vunpack.c.l.b16 %v2724
    %v2757 = vpack.c.b16 %v2742, %v2741
    %v2758 = vpack.c.b16 %v2744, %v2743
    %v2759 = vpack.c.b16 %v2746, %v2745
    %v2760 = vpack.c.b16 %v2748, %v2747
    %v2761 = vpack.c.b16 %v2750, %v2749
    %v2762 = vpack.c.b16 %v2752, %v2751
    %v2763 = vpack.c.b16 %v2754, %v2753
    %v2764 = vpack.c.b16 %v2756, %v2755
    %2773 = vmatprep.subr.bf16.mxu0 0
    %2774 = vmatpush1.bf16.msra.mxu0 %v2764
    %2775 = vmatprep.subr.bf16.mxu0 0
    %2776 = vmatpush1.bf16.msra.mxu0 %v2763
    %2777 = vmatprep.subr.bf16.mxu0 0
    %2778 = vmatpush1.bf16.msra.mxu0 %v2762
    %2779 = vmatprep.subr.bf16.mxu0 0
    %2780 = vmatpush1.bf16.msra.mxu0 %v2761
    %2781 = vmatprep.subr.bf16.mxu0 0
    %2782 = vmatpush1.bf16.msra.mxu0 %v2760
    %2783 = vmatprep.subr.bf16.mxu0 0
    %2784 = vmatpush1.bf16.msra.mxu0 %v2759
    %2785 = vmatprep.subr.bf16.mxu0 0
    %2786 = vmatpush1.bf16.msra.mxu0 %v2758
    %2787 = vmatprep.subr.bf16.mxu0 0
    %2788 = vmatpush1.bf16.msra.mxu0 %v2757
    %2789 = vmatprep.subr.bf16.mxu0 0
    %2790 = vmatpush2.bf16.msra.mxu0 0
    %2791 = vmatprep.subr.bf16.mxu0 0
    %2792 = vmatpush2.bf16.msra.mxu0 0
    %2793 = vmatprep.subr.bf16.mxu0 0
    %2794 = vmatpush2.bf16.msra.mxu0 0
    %2795 = vmatprep.subr.bf16.mxu0 0
    %2796 = vmatpush2.bf16.msra.mxu0 0
    %2797 = vmatprep.subr.bf16.mxu0 0
    %2798 = vmatpush2.bf16.msra.mxu0 0
    %2799 = vmatprep.subr.bf16.mxu0 0
    %2800 = vmatpush2.bf16.msra.mxu0 0
    %2801 = vmatprep.subr.bf16.mxu0 0
    %2802 = vmatpush2.bf16.msra.mxu0 0
    %2803 = vmatprep.subr.bf16.mxu0 0
    %2804 = vmatpush2.bf16.msra.mxu0 0
    %2805 = vmatprep.mubr.bf16.mxu0 0
    %2806 = vmatmul.mubr.bf16.gmra.mxu0 %v2377
    %v2807 = vpop.f32.mrf.mxu0
    %v2808 = vadd.f32 0.0, %v2807
    %v2809 = vpop.f32.mrf.mxu0
    %v2810 = vpop.f32.mrf.mxu0
    %v2811 = vadd.f32 0.0, %v2810
    %v2812 = vpop.f32.mrf.mxu0
    %2813 = vmatprep.mubr.bf16.mxu0 0
    %2814 = vmatmul.mubr.bf16.gmra.mxu0 %v2378
    %v2815 = vpop.f32.mrf.mxu0
    %v2816 = vadd.f32 0.0, %v2815
    %v2817 = vpop.f32.mrf.mxu0
    %v2818 = vpop.f32.mrf.mxu0
    %v2819 = vadd.f32 0.0, %v2818
    %v2820 = vpop.f32.mrf.mxu0
    %2821 = vmatprep.mubr.bf16.mxu0 0
    %2822 = vmatmul.mubr.bf16.gmra.mxu0 %v2379
    %v2823 = vpop.f32.mrf.mxu0
    %v2824 = vadd.f32 0.0, %v2823
    %v2825 = vpop.f32.mrf.mxu0
    %v2826 = vpop.f32.mrf.mxu0
    %v2827 = vadd.f32 0.0, %v2826
    %v2828 = vpop.f32.mrf.mxu0
    %2829 = vmatprep.mubr.bf16.mxu0 0
    %2830 = vmatmul.mubr.bf16.gmra.mxu0 %v2380
    %v2831 = vpop.f32.mrf.mxu0
    %v2832 = vadd.f32 0.0, %v2831
    %v2833 = vpop.f32.mrf.mxu0
    %v2834 = vpop.f32.mrf.mxu0
    %v2835 = vadd.f32 0.0, %v2834
    %v2836 = vpop.f32.mrf.mxu0
    %2837 = vmatprep.mubr.bf16.mxu0 0
    %2838 = vmatmul.mubr.bf16.gmra.mxu0 %v2381
    %v2839 = vpop.f32.mrf.mxu0
    %v2840 = vadd.f32 0.0, %v2839
    %v2841 = vpop.f32.mrf.mxu0
    %v2842 = vpop.f32.mrf.mxu0
    %v2843 = vadd.f32 0.0, %v2842
    %v2844 = vpop.f32.mrf.mxu0
    %2845 = vmatprep.mubr.bf16.mxu0 0
    %2846 = vmatmul.mubr.bf16.gmra.mxu0 %v2382
    %v2847 = vpop.f32.mrf.mxu0
    %v2848 = vadd.f32 0.0, %v2847
    %v2849 = vpop.f32.mrf.mxu0
    %v2850 = vpop.f32.mrf.mxu0
    %v2851 = vadd.f32 0.0, %v2850
    %v2852 = vpop.f32.mrf.mxu0
    %2853 = vmatprep.mubr.bf16.mxu0 0
    %2854 = vmatmul.mubr.bf16.gmra.mxu0 %v2383
    %v2855 = vpop.f32.mrf.mxu0
    %v2856 = vadd.f32 0.0, %v2855
    %v2857 = vpop.f32.mrf.mxu0
    %v2858 = vpop.f32.mrf.mxu0
    %v2859 = vadd.f32 0.0, %v2858
    %v2860 = vpop.f32.mrf.mxu0
    %2861 = vmatprep.mubr.bf16.mxu0 0
    %2862 = vmatmul.mubr.bf16.gmra.mxu0 %v2384
    %v2863 = vpop.f32.mrf.mxu0
    %v2864 = vadd.f32 0.0, %v2863
    %v2865 = vpop.f32.mrf.mxu0
    %v2866 = vpop.f32.mrf.mxu0
    %v2867 = vadd.f32 0.0, %v2866
    %v2868 = vpop.f32.mrf.mxu0
    %2869 = vdwg.mxu0
    %v2870 = vadd.f32 %v2646, %v2808
    %v2871 = vadd.f32 %v2649, %v2811
    %v2872 = vadd.f32 %v2654, %v2816
    %v2873 = vadd.f32 %v2657, %v2819
    %v2874 = vadd.f32 %v2662, %v2824
    %v2875 = vadd.f32 %v2665, %v2827
    %v2876 = vadd.f32 %v2670, %v2832
    %v2877 = vadd.f32 %v2673, %v2835
    %v2878 = vadd.f32 %v2678, %v2840
    %v2879 = vadd.f32 %v2681, %v2843
    %v2880 = vadd.f32 %v2686, %v2848
    %v2881 = vadd.f32 %v2689, %v2851
    %v2882 = vadd.f32 %v2694, %v2856
    %v2883 = vadd.f32 %v2697, %v2859
    %v2884 = vadd.f32 %v2702, %v2864
    %v2885 = vadd.f32 %v2705, %v2867
    %s2886 = scalar_lea.vmem [#allocation2], 192
    %v2887 = vld [vmem:[%s2886] sm:$0xf]
    %v2888 = vld [vmem:[%s2886 + $0x4] sm:$0xf]
    %v2889 = vld [vmem:[%s2886 + $0x8] sm:$0xf]
    %v2890 = vld [vmem:[%s2886 + $0xc] sm:$0xf]
    %v2891 = vld [vmem:[%s2886 + $0x10] sm:$0xf]
    %v2892 = vld [vmem:[%s2886 + $0x14] sm:$0xf]
    %v2893 = vld [vmem:[%s2886 + $0x18] sm:$0xf]
    %v2894 = vld [vmem:[%s2886 + $0x1c] sm:$0xf]
    %v2895 = vld [vmem:[%s2886 + $0x20] sm:$0xf]
    %v2896 = vld [vmem:[%s2886 + $0x24] sm:$0xf]
    %v2897 = vld [vmem:[%s2886 + $0x28] sm:$0xf]
    %v2898 = vld [vmem:[%s2886 + $0x2c] sm:$0xf]
    %v2899 = vld [vmem:[%s2886 + $0x30] sm:$0xf]
    %v2900 = vld [vmem:[%s2886 + $0x34] sm:$0xf]
    %v2901 = vld [vmem:[%s2886 + $0x38] sm:$0xf]
    %v2902 = vld [vmem:[%s2886 + $0x3c] sm:$0xf]
    %s2903 = scalar_lea.vmem [#allocation2], 256
    %v2904 = vld [vmem:[%s2903] sm:$0xf]
    %v2905 = vld [vmem:[%s2903 + $0x4] sm:$0xf]
    %v2906 = vld [vmem:[%s2903 + $0x8] sm:$0xf]
    %v2907 = vld [vmem:[%s2903 + $0xc] sm:$0xf]
    %v2908 = vld [vmem:[%s2903 + $0x10] sm:$0xf]
    %v2909 = vld [vmem:[%s2903 + $0x14] sm:$0xf]
    %v2910 = vld [vmem:[%s2903 + $0x18] sm:$0xf]
    %v2911 = vld [vmem:[%s2903 + $0x1c] sm:$0xf]
    %v2912 = vld [vmem:[%s2903 + $0x20] sm:$0xf]
    %v2913 = vld [vmem:[%s2903 + $0x24] sm:$0xf]
    %v2914 = vld [vmem:[%s2903 + $0x28] sm:$0xf]
    %v2915 = vld [vmem:[%s2903 + $0x2c] sm:$0xf]
    %v2916 = vld [vmem:[%s2903 + $0x30] sm:$0xf]
    %v2917 = vld [vmem:[%s2903 + $0x34] sm:$0xf]
    %v2918 = vld [vmem:[%s2903 + $0x38] sm:$0xf]
    %v2919 = vld [vmem:[%s2903 + $0x3c] sm:$0xf]
    %v2936 = vunpack.c.l.b16 %v2904
    %v2937 = vunpack.c.l.b16 %v2905
    %v2938 = vunpack.c.l.b16 %v2906
    %v2939 = vunpack.c.l.b16 %v2907
    %v2940 = vunpack.c.l.b16 %v2908
    %v2941 = vunpack.c.l.b16 %v2909
    %v2942 = vunpack.c.l.b16 %v2910
    %v2943 = vunpack.c.l.b16 %v2911
    %v2944 = vunpack.c.l.b16 %v2912
    %v2945 = vunpack.c.l.b16 %v2913
    %v2946 = vunpack.c.l.b16 %v2914
    %v2947 = vunpack.c.l.b16 %v2915
    %v2948 = vunpack.c.l.b16 %v2916
    %v2949 = vunpack.c.l.b16 %v2917
    %v2950 = vunpack.c.l.b16 %v2918
    %v2951 = vunpack.c.l.b16 %v2919
    %v2952 = vpack.c.b16 %v2937, %v2936
    %v2953 = vpack.c.b16 %v2939, %v2938
    %v2954 = vpack.c.b16 %v2941, %v2940
    %v2955 = vpack.c.b16 %v2943, %v2942
    %v2956 = vpack.c.b16 %v2945, %v2944
    %v2957 = vpack.c.b16 %v2947, %v2946
    %v2958 = vpack.c.b16 %v2949, %v2948
    %v2959 = vpack.c.b16 %v2951, %v2950
    %2968 = vmatprep.subr.bf16.mxu0 0
    %2969 = vmatpush1.bf16.msra.mxu0 %v2959
    %2970 = vmatprep.subr.bf16.mxu0 0
    %2971 = vmatpush1.bf16.msra.mxu0 %v2958
    %2972 = vmatprep.subr.bf16.mxu0 0
    %2973 = vmatpush1.bf16.msra.mxu0 %v2957
    %2974 = vmatprep.subr.bf16.mxu0 0
    %2975 = vmatpush1.bf16.msra.mxu0 %v2956
    %2976 = vmatprep.subr.bf16.mxu0 0
    %2977 = vmatpush1.bf16.msra.mxu0 %v2955
    %2978 = vmatprep.subr.bf16.mxu0 0
    %2979 = vmatpush1.bf16.msra.mxu0 %v2954
    %2980 = vmatprep.subr.bf16.mxu0 0
    %2981 = vmatpush1.bf16.msra.mxu0 %v2953
    %2982 = vmatprep.subr.bf16.mxu0 0
    %2983 = vmatpush1.bf16.msra.mxu0 %v2952
    %2984 = vmatprep.subr.bf16.mxu0 0
    %2985 = vmatpush2.bf16.msra.mxu0 0
    %2986 = vmatprep.subr.bf16.mxu0 0
    %2987 = vmatpush2.bf16.msra.mxu0 0
    %2988 = vmatprep.subr.bf16.mxu0 0
    %2989 = vmatpush2.bf16.msra.mxu0 0
    %2990 = vmatprep.subr.bf16.mxu0 0
    %2991 = vmatpush2.bf16.msra.mxu0 0
    %2992 = vmatprep.subr.bf16.mxu0 0
    %2993 = vmatpush2.bf16.msra.mxu0 0
    %2994 = vmatprep.subr.bf16.mxu0 0
    %2995 = vmatpush2.bf16.msra.mxu0 0
    %2996 = vmatprep.subr.bf16.mxu0 0
    %2997 = vmatpush2.bf16.msra.mxu0 0
    %2998 = vmatprep.subr.bf16.mxu0 0
    %2999 = vmatpush2.bf16.msra.mxu0 0
    %3000 = vmatprep.mubr.bf16.mxu0 0
    %3001 = vmatmul.mubr.bf16.gmra.mxu0 %v2321
    %v3002 = vpop.f32.mrf.mxu0
    %v3003 = vadd.f32 0.0, %v3002
    %v3004 = vpop.f32.mrf.mxu0
    %v3005 = vpop.f32.mrf.mxu0
    %v3006 = vadd.f32 0.0, %v3005
    %v3007 = vpop.f32.mrf.mxu0
    %3008 = vmatprep.mubr.bf16.mxu0 0
    %3009 = vmatmul.mubr.bf16.gmra.mxu0 %v2322
    %v3010 = vpop.f32.mrf.mxu0
    %v3011 = vadd.f32 0.0, %v3010
    %v3012 = vpop.f32.mrf.mxu0
    %v3013 = vpop.f32.mrf.mxu0
    %v3014 = vadd.f32 0.0, %v3013
    %v3015 = vpop.f32.mrf.mxu0
    %3016 = vmatprep.mubr.bf16.mxu0 0
    %3017 = vmatmul.mubr.bf16.gmra.mxu0 %v2323
    %v3018 = vpop.f32.mrf.mxu0
    %v3019 = vadd.f32 0.0, %v3018
    %v3020 = vpop.f32.mrf.mxu0
    %v3021 = vpop.f32.mrf.mxu0
    %v3022 = vadd.f32 0.0, %v3021
    %v3023 = vpop.f32.mrf.mxu0
    %3024 = vmatprep.mubr.bf16.mxu0 0
    %3025 = vmatmul.mubr.bf16.gmra.mxu0 %v2324
    %v3026 = vpop.f32.mrf.mxu0
    %v3027 = vadd.f32 0.0, %v3026
    %v3028 = vpop.f32.mrf.mxu0
    %v3029 = vpop.f32.mrf.mxu0
    %v3030 = vadd.f32 0.0, %v3029
    %v3031 = vpop.f32.mrf.mxu0
    %3032 = vmatprep.mubr.bf16.mxu0 0
    %3033 = vmatmul.mubr.bf16.gmra.mxu0 %v2325
    %v3034 = vpop.f32.mrf.mxu0
    %v3035 = vadd.f32 0.0, %v3034
    %v3036 = vpop.f32.mrf.mxu0
    %v3037 = vpop.f32.mrf.mxu0
    %v3038 = vadd.f32 0.0, %v3037
    %v3039 = vpop.f32.mrf.mxu0
    %3040 = vmatprep.mubr.bf16.mxu0 0
    %3041 = vmatmul.mubr.bf16.gmra.mxu0 %v2326
    %v3042 = vpop.f32.mrf.mxu0
    %v3043 = vadd.f32 0.0, %v3042
    %v3044 = vpop.f32.mrf.mxu0
    %v3045 = vpop.f32.mrf.mxu0
    %v3046 = vadd.f32 0.0, %v3045
    %v3047 = vpop.f32.mrf.mxu0
    %3048 = vmatprep.mubr.bf16.mxu0 0
    %3049 = vmatmul.mubr.bf16.gmra.mxu0 %v2327
    %v3050 = vpop.f32.mrf.mxu0
    %v3051 = vadd.f32 0.0, %v3050
    %v3052 = vpop.f32.mrf.mxu0
    %v3053 = vpop.f32.mrf.mxu0
    %v3054 = vadd.f32 0.0, %v3053
    %v3055 = vpop.f32.mrf.mxu0
    %3056 = vmatprep.mubr.bf16.mxu0 0
    %3057 = vmatmul.mubr.bf16.gmra.mxu0 %v2328
    %v3058 = vpop.f32.mrf.mxu0
    %v3059 = vadd.f32 0.0, %v3058
    %v3060 = vpop.f32.mrf.mxu0
    %v3061 = vpop.f32.mrf.mxu0
    %v3062 = vadd.f32 0.0, %v3061
    %v3063 = vpop.f32.mrf.mxu0
    %3064 = vdwg.mxu0
    %v3081 = vunpack.c.l.b16 %v2887
    %v3082 = vunpack.c.l.b16 %v2888
    %v3083 = vunpack.c.l.b16 %v2889
    %v3084 = vunpack.c.l.b16 %v2890
    %v3085 = vunpack.c.l.b16 %v2891
    %v3086 = vunpack.c.l.b16 %v2892
    %v3087 = vunpack.c.l.b16 %v2893
    %v3088 = vunpack.c.l.b16 %v2894
    %v3089 = vunpack.c.l.b16 %v2895
    %v3090 = vunpack.c.l.b16 %v2896
    %v3091 = vunpack.c.l.b16 %v2897
    %v3092 = vunpack.c.l.b16 %v2898
    %v3093 = vunpack.c.l.b16 %v2899
    %v3094 = vunpack.c.l.b16 %v2900
    %v3095 = vunpack.c.l.b16 %v2901
    %v3096 = vunpack.c.l.b16 %v2902
    %v3097 = vpack.c.b16 %v3082, %v3081
    %v3098 = vpack.c.b16 %v3084, %v3083
    %v3099 = vpack.c.b16 %v3086, %v3085
    %v3100 = vpack.c.b16 %v3088, %v3087
    %v3101 = vpack.c.b16 %v3090, %v3089
    %v3102 = vpack.c.b16 %v3092, %v3091
    %v3103 = vpack.c.b16 %v3094, %v3093
    %v3104 = vpack.c.b16 %v3096, %v3095
    %3113 = vmatprep.subr.bf16.mxu0 0
    %3114 = vmatpush1.bf16.msra.mxu0 %v3104
    %3115 = vmatprep.subr.bf16.mxu0 0
    %3116 = vmatpush1.bf16.msra.mxu0 %v3103
    %3117 = vmatprep.subr.bf16.mxu0 0
    %3118 = vmatpush1.bf16.msra.mxu0 %v3102
    %3119 = vmatprep.subr.bf16.mxu0 0
    %3120 = vmatpush1.bf16.msra.mxu0 %v3101
    %3121 = vmatprep.subr.bf16.mxu0 0
    %3122 = vmatpush1.bf16.msra.mxu0 %v3100
    %3123 = vmatprep.subr.bf16.mxu0 0
    %3124 = vmatpush1.bf16.msra.mxu0 %v3099
    %3125 = vmatprep.subr.bf16.mxu0 0
    %3126 = vmatpush1.bf16.msra.mxu0 %v3098
    %3127 = vmatprep.subr.bf16.mxu0 0
    %3128 = vmatpush1.bf16.msra.mxu0 %v3097
    %3129 = vmatprep.subr.bf16.mxu0 0
    %3130 = vmatpush2.bf16.msra.mxu0 0
    %3131 = vmatprep.subr.bf16.mxu0 0
    %3132 = vmatpush2.bf16.msra.mxu0 0
    %3133 = vmatprep.subr.bf16.mxu0 0
    %3134 = vmatpush2.bf16.msra.mxu0 0
    %3135 = vmatprep.subr.bf16.mxu0 0
    %3136 = vmatpush2.bf16.msra.mxu0 0
    %3137 = vmatprep.subr.bf16.mxu0 0
    %3138 = vmatpush2.bf16.msra.mxu0 0
    %3139 = vmatprep.subr.bf16.mxu0 0
    %3140 = vmatpush2.bf16.msra.mxu0 0
    %3141 = vmatprep.subr.bf16.mxu0 0
    %3142 = vmatpush2.bf16.msra.mxu0 0
    %3143 = vmatprep.subr.bf16.mxu0 0
    %3144 = vmatpush2.bf16.msra.mxu0 0
    %3145 = vmatprep.mubr.bf16.mxu0 0
    %3146 = vmatmul.mubr.bf16.gmra.mxu0 %v2313
    %v3147 = vpop.f32.mrf.mxu0
    %v3148 = vadd.f32 %v3003, %v3147
    %v3149 = vpop.f32.mrf.mxu0
    %v3150 = vpop.f32.mrf.mxu0
    %v3151 = vadd.f32 %v3006, %v3150
    %v3152 = vpop.f32.mrf.mxu0
    %3153 = vmatprep.mubr.bf16.mxu0 0
    %3154 = vmatmul.mubr.bf16.gmra.mxu0 %v2314
    %v3155 = vpop.f32.mrf.mxu0
    %v3156 = vadd.f32 %v3011, %v3155
    %v3157 = vpop.f32.mrf.mxu0
    %v3158 = vpop.f32.mrf.mxu0
    %v3159 = vadd.f32 %v3014, %v3158
    %v3160 = vpop.f32.mrf.mxu0
    %3161 = vmatprep.mubr.bf16.mxu0 0
    %3162 = vmatmul.mubr.bf16.gmra.mxu0 %v2315
    %v3163 = vpop.f32.mrf.mxu0
    %v3164 = vadd.f32 %v3019, %v3163
    %v3165 = vpop.f32.mrf.mxu0
    %v3166 = vpop.f32.mrf.mxu0
    %v3167 = vadd.f32 %v3022, %v3166
    %v3168 = vpop.f32.mrf.mxu0
    %3169 = vmatprep.mubr.bf16.mxu0 0
    %3170 = vmatmul.mubr.bf16.gmra.mxu0 %v2316
    %v3171 = vpop.f32.mrf.mxu0
    %v3172 = vadd.f32 %v3027, %v3171
    %v3173 = vpop.f32.mrf.mxu0
    %v3174 = vpop.f32.mrf.mxu0
    %v3175 = vadd.f32 %v3030, %v3174
    %v3176 = vpop.f32.mrf.mxu0
    %3177 = vmatprep.mubr.bf16.mxu0 0
    %3178 = vmatmul.mubr.bf16.gmra.mxu0 %v2317
    %v3179 = vpop.f32.mrf.mxu0
    %v3180 = vadd.f32 %v3035, %v3179
    %v3181 = vpop.f32.mrf.mxu0
    %v3182 = vpop.f32.mrf.mxu0
    %v3183 = vadd.f32 %v3038, %v3182
    %v3184 = vpop.f32.mrf.mxu0
    %3185 = vmatprep.mubr.bf16.mxu0 0
    %3186 = vmatmul.mubr.bf16.gmra.mxu0 %v2318
    %v3187 = vpop.f32.mrf.mxu0
    %v3188 = vadd.f32 %v3043, %v3187
    %v3189 = vpop.f32.mrf.mxu0
    %v3190 = vpop.f32.mrf.mxu0
    %v3191 = vadd.f32 %v3046, %v3190
    %v3192 = vpop.f32.mrf.mxu0
    %3193 = vmatprep.mubr.bf16.mxu0 0
    %3194 = vmatmul.mubr.bf16.gmra.mxu0 %v2319
    %v3195 = vpop.f32.mrf.mxu0
    %v3196 = vadd.f32 %v3051, %v3195
    %v3197 = vpop.f32.mrf.mxu0
    %v3198 = vpop.f32.mrf.mxu0
    %v3199 = vadd.f32 %v3054, %v3198
    %v3200 = vpop.f32.mrf.mxu0
    %3201 = vmatprep.mubr.bf16.mxu0 0
    %3202 = vmatmul.mubr.bf16.gmra.mxu0 %v2320
    %v3203 = vpop.f32.mrf.mxu0
    %v3204 = vadd.f32 %v3059, %v3203
    %v3205 = vpop.f32.mrf.mxu0
    %v3206 = vpop.f32.mrf.mxu0
    %v3207 = vadd.f32 %v3062, %v3206
    %v3208 = vpop.f32.mrf.mxu0
    %3209 = vdwg.mxu0
    %s3210 = scalar_lea.vmem [#allocation2], 320
    %v3211 = vld [vmem:[%s3210] sm:$0xf]
    %v3212 = vld [vmem:[%s3210 + $0x4] sm:$0xf]
    %v3213 = vld [vmem:[%s3210 + $0x8] sm:$0xf]
    %v3214 = vld [vmem:[%s3210 + $0xc] sm:$0xf]
    %v3215 = vld [vmem:[%s3210 + $0x10] sm:$0xf]
    %v3216 = vld [vmem:[%s3210 + $0x14] sm:$0xf]
    %v3217 = vld [vmem:[%s3210 + $0x18] sm:$0xf]
    %v3218 = vld [vmem:[%s3210 + $0x1c] sm:$0xf]
    %v3219 = vld [vmem:[%s3210 + $0x20] sm:$0xf]
    %v3220 = vld [vmem:[%s3210 + $0x24] sm:$0xf]
    %v3221 = vld [vmem:[%s3210 + $0x28] sm:$0xf]
    %v3222 = vld [vmem:[%s3210 + $0x2c] sm:$0xf]
    %v3223 = vld [vmem:[%s3210 + $0x30] sm:$0xf]
    %v3224 = vld [vmem:[%s3210 + $0x34] sm:$0xf]
    %v3225 = vld [vmem:[%s3210 + $0x38] sm:$0xf]
    %v3226 = vld [vmem:[%s3210 + $0x3c] sm:$0xf]
    %v3243 = vunpack.c.l.b16 %v3211
    %v3244 = vunpack.c.l.b16 %v3212
    %v3245 = vunpack.c.l.b16 %v3213
    %v3246 = vunpack.c.l.b16 %v3214
    %v3247 = vunpack.c.l.b16 %v3215
    %v3248 = vunpack.c.l.b16 %v3216
    %v3249 = vunpack.c.l.b16 %v3217
    %v3250 = vunpack.c.l.b16 %v3218
    %v3251 = vunpack.c.l.b16 %v3219
    %v3252 = vunpack.c.l.b16 %v3220
    %v3253 = vunpack.c.l.b16 %v3221
    %v3254 = vunpack.c.l.b16 %v3222
    %v3255 = vunpack.c.l.b16 %v3223
    %v3256 = vunpack.c.l.b16 %v3224
    %v3257 = vunpack.c.l.b16 %v3225
    %v3258 = vunpack.c.l.b16 %v3226
    %v3259 = vpack.c.b16 %v3244, %v3243
    %v3260 = vpack.c.b16 %v3246, %v3245
    %v3261 = vpack.c.b16 %v3248, %v3247
    %v3262 = vpack.c.b16 %v3250, %v3249
    %v3263 = vpack.c.b16 %v3252, %v3251
    %v3264 = vpack.c.b16 %v3254, %v3253
    %v3265 = vpack.c.b16 %v3256, %v3255
    %v3266 = vpack.c.b16 %v3258, %v3257
    %3275 = vmatprep.subr.bf16.mxu0 0
    %3276 = vmatpush1.bf16.msra.mxu0 %v3266
    %3277 = vmatprep.subr.bf16.mxu0 0
    %3278 = vmatpush1.bf16.msra.mxu0 %v3265
    %3279 = vmatprep.subr.bf16.mxu0 0
    %3280 = vmatpush1.bf16.msra.mxu0 %v3264
    %3281 = vmatprep.subr.bf16.mxu0 0
    %3282 = vmatpush1.bf16.msra.mxu0 %v3263
    %3283 = vmatprep.subr.bf16.mxu0 0
    %3284 = vmatpush1.bf16.msra.mxu0 %v3262
    %3285 = vmatprep.subr.bf16.mxu0 0
    %3286 = vmatpush1.bf16.msra.mxu0 %v3261
    %3287 = vmatprep.subr.bf16.mxu0 0
    %3288 = vmatpush1.bf16.msra.mxu0 %v3260
    %3289 = vmatprep.subr.bf16.mxu0 0
    %3290 = vmatpush1.bf16.msra.mxu0 %v3259
    %3291 = vmatprep.subr.bf16.mxu0 0
    %3292 = vmatpush2.bf16.msra.mxu0 0
    %3293 = vmatprep.subr.bf16.mxu0 0
    %3294 = vmatpush2.bf16.msra.mxu0 0
    %3295 = vmatprep.subr.bf16.mxu0 0
    %3296 = vmatpush2.bf16.msra.mxu0 0
    %3297 = vmatprep.subr.bf16.mxu0 0
    %3298 = vmatpush2.bf16.msra.mxu0 0
    %3299 = vmatprep.subr.bf16.mxu0 0
    %3300 = vmatpush2.bf16.msra.mxu0 0
    %3301 = vmatprep.subr.bf16.mxu0 0
    %3302 = vmatpush2.bf16.msra.mxu0 0
    %3303 = vmatprep.subr.bf16.mxu0 0
    %3304 = vmatpush2.bf16.msra.mxu0 0
    %3305 = vmatprep.subr.bf16.mxu0 0
    %3306 = vmatpush2.bf16.msra.mxu0 0
    %3307 = vmatprep.mubr.bf16.mxu0 0
    %3308 = vmatmul.mubr.bf16.gmra.mxu0 %v2377
    %v3309 = vpop.f32.mrf.mxu0
    %v3310 = vadd.f32 0.0, %v3309
    %v3311 = vpop.f32.mrf.mxu0
    %v3312 = vpop.f32.mrf.mxu0
    %v3313 = vadd.f32 0.0, %v3312
    %v3314 = vpop.f32.mrf.mxu0
    %3315 = vmatprep.mubr.bf16.mxu0 0
    %3316 = vmatmul.mubr.bf16.gmra.mxu0 %v2378
    %v3317 = vpop.f32.mrf.mxu0
    %v3318 = vadd.f32 0.0, %v3317
    %v3319 = vpop.f32.mrf.mxu0
    %v3320 = vpop.f32.mrf.mxu0
    %v3321 = vadd.f32 0.0, %v3320
    %v3322 = vpop.f32.mrf.mxu0
    %3323 = vmatprep.mubr.bf16.mxu0 0
    %3324 = vmatmul.mubr.bf16.gmra.mxu0 %v2379
    %v3325 = vpop.f32.mrf.mxu0
    %v3326 = vadd.f32 0.0, %v3325
    %v3327 = vpop.f32.mrf.mxu0
    %v3328 = vpop.f32.mrf.mxu0
    %v3329 = vadd.f32 0.0, %v3328
    %v3330 = vpop.f32.mrf.mxu0
    %3331 = vmatprep.mubr.bf16.mxu0 0
    %3332 = vmatmul.mubr.bf16.gmra.mxu0 %v2380
    %v3333 = vpop.f32.mrf.mxu0
    %v3334 = vadd.f32 0.0, %v3333
    %v3335 = vpop.f32.mrf.mxu0
    %v3336 = vpop.f32.mrf.mxu0
    %v3337 = vadd.f32 0.0, %v3336
    %v3338 = vpop.f32.mrf.mxu0
    %3339 = vmatprep.mubr.bf16.mxu0 0
    %3340 = vmatmul.mubr.bf16.gmra.mxu0 %v2381
    %v3341 = vpop.f32.mrf.mxu0
    %v3342 = vadd.f32 0.0, %v3341
    %v3343 = vpop.f32.mrf.mxu0
    %v3344 = vpop.f32.mrf.mxu0
    %v3345 = vadd.f32 0.0, %v3344
    %v3346 = vpop.f32.mrf.mxu0
    %3347 = vmatprep.mubr.bf16.mxu0 0
    %3348 = vmatmul.mubr.bf16.gmra.mxu0 %v2382
    %v3349 = vpop.f32.mrf.mxu0
    %v3350 = vadd.f32 0.0, %v3349
    %v3351 = vpop.f32.mrf.mxu0
    %v3352 = vpop.f32.mrf.mxu0
    %v3353 = vadd.f32 0.0, %v3352
    %v3354 = vpop.f32.mrf.mxu0
    %3355 = vmatprep.mubr.bf16.mxu0 0
    %3356 = vmatmul.mubr.bf16.gmra.mxu0 %v2383
    %v3357 = vpop.f32.mrf.mxu0
    %v3358 = vadd.f32 0.0, %v3357
    %v3359 = vpop.f32.mrf.mxu0
    %v3360 = vpop.f32.mrf.mxu0
    %v3361 = vadd.f32 0.0, %v3360
    %v3362 = vpop.f32.mrf.mxu0
    %3363 = vmatprep.mubr.bf16.mxu0 0
    %3364 = vmatmul.mubr.bf16.gmra.mxu0 %v2384
    %v3365 = vpop.f32.mrf.mxu0
    %v3366 = vadd.f32 0.0, %v3365
    %v3367 = vpop.f32.mrf.mxu0
    %v3368 = vpop.f32.mrf.mxu0
    %v3369 = vadd.f32 0.0, %v3368
    %v3370 = vpop.f32.mrf.mxu0
    %3371 = vdwg.mxu0
    %v3372 = vadd.f32 %v3148, %v3310
    %v3373 = vadd.f32 %v3151, %v3313
    %v3374 = vadd.f32 %v3156, %v3318
    %v3375 = vadd.f32 %v3159, %v3321
    %v3376 = vadd.f32 %v3164, %v3326
    %v3377 = vadd.f32 %v3167, %v3329
    %v3378 = vadd.f32 %v3172, %v3334
    %v3379 = vadd.f32 %v3175, %v3337
    %v3380 = vadd.f32 %v3180, %v3342
    %v3381 = vadd.f32 %v3183, %v3345
    %v3382 = vadd.f32 %v3188, %v3350
    %v3383 = vadd.f32 %v3191, %v3353
    %v3384 = vadd.f32 %v3196, %v3358
    %v3385 = vadd.f32 %v3199, %v3361
    %v3386 = vadd.f32 %v3204, %v3366
    %v3387 = vadd.f32 %v3207, %v3369
    %s3388 = scalar_lea.vmem [#allocation2], 384
    %v3389 = vld [vmem:[%s3388] sm:$0xf]
    %v3390 = vld [vmem:[%s3388 + $0x4] sm:$0xf]
    %v3391 = vld [vmem:[%s3388 + $0x8] sm:$0xf]
    %v3392 = vld [vmem:[%s3388 + $0xc] sm:$0xf]
    %v3393 = vld [vmem:[%s3388 + $0x10] sm:$0xf]
    %v3394 = vld [vmem:[%s3388 + $0x14] sm:$0xf]
    %v3395 = vld [vmem:[%s3388 + $0x18] sm:$0xf]
    %v3396 = vld [vmem:[%s3388 + $0x1c] sm:$0xf]
    %v3397 = vld [vmem:[%s3388 + $0x20] sm:$0xf]
    %v3398 = vld [vmem:[%s3388 + $0x24] sm:$0xf]
    %v3399 = vld [vmem:[%s3388 + $0x28] sm:$0xf]
    %v3400 = vld [vmem:[%s3388 + $0x2c] sm:$0xf]
    %v3401 = vld [vmem:[%s3388 + $0x30] sm:$0xf]
    %v3402 = vld [vmem:[%s3388 + $0x34] sm:$0xf]
    %v3403 = vld [vmem:[%s3388 + $0x38] sm:$0xf]
    %v3404 = vld [vmem:[%s3388 + $0x3c] sm:$0xf]
    %s3405 = scalar_lea.vmem [#allocation2], 448
    %v3406 = vld [vmem:[%s3405] sm:$0xf]
    %v3407 = vld [vmem:[%s3405 + $0x4] sm:$0xf]
    %v3408 = vld [vmem:[%s3405 + $0x8] sm:$0xf]
    %v3409 = vld [vmem:[%s3405 + $0xc] sm:$0xf]
    %v3410 = vld [vmem:[%s3405 + $0x10] sm:$0xf]
    %v3411 = vld [vmem:[%s3405 + $0x14] sm:$0xf]
    %v3412 = vld [vmem:[%s3405 + $0x18] sm:$0xf]
    %v3413 = vld [vmem:[%s3405 + $0x1c] sm:$0xf]
    %v3414 = vld [vmem:[%s3405 + $0x20] sm:$0xf]
    %v3415 = vld [vmem:[%s3405 + $0x24] sm:$0xf]
    %v3416 = vld [vmem:[%s3405 + $0x28] sm:$0xf]
    %v3417 = vld [vmem:[%s3405 + $0x2c] sm:$0xf]
    %v3418 = vld [vmem:[%s3405 + $0x30] sm:$0xf]
    %v3419 = vld [vmem:[%s3405 + $0x34] sm:$0xf]
    %v3420 = vld [vmem:[%s3405 + $0x38] sm:$0xf]
    %v3421 = vld [vmem:[%s3405 + $0x3c] sm:$0xf]
    %v3438 = vunpack.c.l.b16 %v3406
    %v3439 = vunpack.c.l.b16 %v3407
    %v3440 = vunpack.c.l.b16 %v3408
    %v3441 = vunpack.c.l.b16 %v3409
    %v3442 = vunpack.c.l.b16 %v3410
    %v3443 = vunpack.c.l.b16 %v3411
    %v3444 = vunpack.c.l.b16 %v3412
    %v3445 = vunpack.c.l.b16 %v3413
    %v3446 = vunpack.c.l.b16 %v3414
    %v3447 = vunpack.c.l.b16 %v3415
    %v3448 = vunpack.c.l.b16 %v3416
    %v3449 = vunpack.c.l.b16 %v3417
    %v3450 = vunpack.c.l.b16 %v3418
    %v3451 = vunpack.c.l.b16 %v3419
    %v3452 = vunpack.c.l.b16 %v3420
    %v3453 = vunpack.c.l.b16 %v3421
    %v3454 = vpack.c.b16 %v3439, %v3438
    %v3455 = vpack.c.b16 %v3441, %v3440
    %v3456 = vpack.c.b16 %v3443, %v3442
    %v3457 = vpack.c.b16 %v3445, %v3444
    %v3458 = vpack.c.b16 %v3447, %v3446
    %v3459 = vpack.c.b16 %v3449, %v3448
    %v3460 = vpack.c.b16 %v3451, %v3450
    %v3461 = vpack.c.b16 %v3453, %v3452
    %3470 = vmatprep.subr.bf16.mxu0 0
    %3471 = vmatpush1.bf16.msra.mxu0 %v3461
    %3472 = vmatprep.subr.bf16.mxu0 0
    %3473 = vmatpush1.bf16.msra.mxu0 %v3460
    %3474 = vmatprep.subr.bf16.mxu0 0
    %3475 = vmatpush1.bf16.msra.mxu0 %v3459
    %3476 = vmatprep.subr.bf16.mxu0 0
    %3477 = vmatpush1.bf16.msra.mxu0 %v3458
    %3478 = vmatprep.subr.bf16.mxu0 0
    %3479 = vmatpush1.bf16.msra.mxu0 %v3457
    %3480 = vmatprep.subr.bf16.mxu0 0
    %3481 = vmatpush1.bf16.msra.mxu0 %v3456
    %3482 = vmatprep.subr.bf16.mxu0 0
    %3483 = vmatpush1.bf16.msra.mxu0 %v3455
    %3484 = vmatprep.subr.bf16.mxu0 0
    %3485 = vmatpush1.bf16.msra.mxu0 %v3454
    %3486 = vmatprep.subr.bf16.mxu0 0
    %3487 = vmatpush2.bf16.msra.mxu0 0
    %3488 = vmatprep.subr.bf16.mxu0 0
    %3489 = vmatpush2.bf16.msra.mxu0 0
    %3490 = vmatprep.subr.bf16.mxu0 0
    %3491 = vmatpush2.bf16.msra.mxu0 0
    %3492 = vmatprep.subr.bf16.mxu0 0
    %3493 = vmatpush2.bf16.msra.mxu0 0
    %3494 = vmatprep.subr.bf16.mxu0 0
    %3495 = vmatpush2.bf16.msra.mxu0 0
    %3496 = vmatprep.subr.bf16.mxu0 0
    %3497 = vmatpush2.bf16.msra.mxu0 0
    %3498 = vmatprep.subr.bf16.mxu0 0
    %3499 = vmatpush2.bf16.msra.mxu0 0
    %3500 = vmatprep.subr.bf16.mxu0 0
    %3501 = vmatpush2.bf16.msra.mxu0 0
    %3502 = vmatprep.mubr.bf16.mxu0 0
    %3503 = vmatmul.mubr.bf16.gmra.mxu0 %v2321
    %v3504 = vpop.f32.mrf.mxu0
    %v3505 = vadd.f32 0.0, %v3504
    %v3506 = vpop.f32.mrf.mxu0
    %v3507 = vpop.f32.mrf.mxu0
    %v3508 = vadd.f32 0.0, %v3507
    %v3509 = vpop.f32.mrf.mxu0
    %3510 = vmatprep.mubr.bf16.mxu0 0
    %3511 = vmatmul.mubr.bf16.gmra.mxu0 %v2322
    %v3512 = vpop.f32.mrf.mxu0
    %v3513 = vadd.f32 0.0, %v3512
    %v3514 = vpop.f32.mrf.mxu0
    %v3515 = vpop.f32.mrf.mxu0
    %v3516 = vadd.f32 0.0, %v3515
    %v3517 = vpop.f32.mrf.mxu0
    %3518 = vmatprep.mubr.bf16.mxu0 0
    %3519 = vmatmul.mubr.bf16.gmra.mxu0 %v2323
    %v3520 = vpop.f32.mrf.mxu0
    %v3521 = vadd.f32 0.0, %v3520
    %v3522 = vpop.f32.mrf.mxu0
    %v3523 = vpop.f32.mrf.mxu0
    %v3524 = vadd.f32 0.0, %v3523
    %v3525 = vpop.f32.mrf.mxu0
    %3526 = vmatprep.mubr.bf16.mxu0 0
    %3527 = vmatmul.mubr.bf16.gmra.mxu0 %v2324
    %v3528 = vpop.f32.mrf.mxu0
    %v3529 = vadd.f32 0.0, %v3528
    %v3530 = vpop.f32.mrf.mxu0
    %v3531 = vpop.f32.mrf.mxu0
    %v3532 = vadd.f32 0.0, %v3531
    %v3533 = vpop.f32.mrf.mxu0
    %3534 = vmatprep.mubr.bf16.mxu0 0
    %3535 = vmatmul.mubr.bf16.gmra.mxu0 %v2325
    %v3536 = vpop.f32.mrf.mxu0
    %v3537 = vadd.f32 0.0, %v3536
    %v3538 = vpop.f32.mrf.mxu0
    %v3539 = vpop.f32.mrf.mxu0
    %v3540 = vadd.f32 0.0, %v3539
    %v3541 = vpop.f32.mrf.mxu0
    %3542 = vmatprep.mubr.bf16.mxu0 0
    %3543 = vmatmul.mubr.bf16.gmra.mxu0 %v2326
    %v3544 = vpop.f32.mrf.mxu0
    %v3545 = vadd.f32 0.0, %v3544
    %v3546 = vpop.f32.mrf.mxu0
    %v3547 = vpop.f32.mrf.mxu0
    %v3548 = vadd.f32 0.0, %v3547
    %v3549 = vpop.f32.mrf.mxu0
    %3550 = vmatprep.mubr.bf16.mxu0 0
    %3551 = vmatmul.mubr.bf16.gmra.mxu0 %v2327
    %v3552 = vpop.f32.mrf.mxu0
    %v3553 = vadd.f32 0.0, %v3552
    %v3554 = vpop.f32.mrf.mxu0
    %v3555 = vpop.f32.mrf.mxu0
    %v3556 = vadd.f32 0.0, %v3555
    %v3557 = vpop.f32.mrf.mxu0
    %3558 = vmatprep.mubr.bf16.mxu0 0
    %3559 = vmatmul.mubr.bf16.gmra.mxu0 %v2328
    %v3560 = vpop.f32.mrf.mxu0
    %v3561 = vadd.f32 0.0, %v3560
    %v3562 = vpop.f32.mrf.mxu0
    %v3563 = vpop.f32.mrf.mxu0
    %v3564 = vadd.f32 0.0, %v3563
    %v3565 = vpop.f32.mrf.mxu0
    %3566 = vdwg.mxu0
    %v3583 = vunpack.c.l.b16 %v3389
    %v3584 = vunpack.c.l.b16 %v3390
    %v3585 = vunpack.c.l.b16 %v3391
    %v3586 = vunpack.c.l.b16 %v3392
    %v3587 = vunpack.c.l.b16 %v3393
    %v3588 = vunpack.c.l.b16 %v3394
    %v3589 = vunpack.c.l.b16 %v3395
    %v3590 = vunpack.c.l.b16 %v3396
    %v3591 = vunpack.c.l.b16 %v3397
    %v3592 = vunpack.c.l.b16 %v3398
    %v3593 = vunpack.c.l.b16 %v3399
    %v3594 = vunpack.c.l.b16 %v3400
    %v3595 = vunpack.c.l.b16 %v3401
    %v3596 = vunpack.c.l.b16 %v3402
    %v3597 = vunpack.c.l.b16 %v3403
    %v3598 = vunpack.c.l.b16 %v3404
    %v3599 = vpack.c.b16 %v3584, %v3583
    %v3600 = vpack.c.b16 %v3586, %v3585
    %v3601 = vpack.c.b16 %v3588, %v3587
    %v3602 = vpack.c.b16 %v3590, %v3589
    %v3603 = vpack.c.b16 %v3592, %v3591
    %v3604 = vpack.c.b16 %v3594, %v3593
    %v3605 = vpack.c.b16 %v3596, %v3595
    %v3606 = vpack.c.b16 %v3598, %v3597
    %3615 = vmatprep.subr.bf16.mxu0 0
    %3616 = vmatpush1.bf16.msra.mxu0 %v3606
    %3617 = vmatprep.subr.bf16.mxu0 0
    %3618 = vmatpush1.bf16.msra.mxu0 %v3605
    %3619 = vmatprep.subr.bf16.mxu0 0
    %3620 = vmatpush1.bf16.msra.mxu0 %v3604
    %3621 = vmatprep.subr.bf16.mxu0 0
    %3622 = vmatpush1.bf16.msra.mxu0 %v3603
    %3623 = vmatprep.subr.bf16.mxu0 0
    %3624 = vmatpush1.bf16.msra.mxu0 %v3602
    %3625 = vmatprep.subr.bf16.mxu0 0
    %3626 = vmatpush1.bf16.msra.mxu0 %v3601
    %3627 = vmatprep.subr.bf16.mxu0 0
    %3628 = vmatpush1.bf16.msra.mxu0 %v3600
    %3629 = vmatprep.subr.bf16.mxu0 0
    %3630 = vmatpush1.bf16.msra.mxu0 %v3599
    %3631 = vmatprep.subr.bf16.mxu0 0
    %3632 = vmatpush2.bf16.msra.mxu0 0
    %3633 = vmatprep.subr.bf16.mxu0 0
    %3634 = vmatpush2.bf16.msra.mxu0 0
    %3635 = vmatprep.subr.bf16.mxu0 0
    %3636 = vmatpush2.bf16.msra.mxu0 0
    %3637 = vmatprep.subr.bf16.mxu0 0
    %3638 = vmatpush2.bf16.msra.mxu0 0
    %3639 = vmatprep.subr.bf16.mxu0 0
    %3640 = vmatpush2.bf16.msra.mxu0 0
    %3641 = vmatprep.subr.bf16.mxu0 0
    %3642 = vmatpush2.bf16.msra.mxu0 0
    %3643 = vmatprep.subr.bf16.mxu0 0
    %3644 = vmatpush2.bf16.msra.mxu0 0
    %3645 = vmatprep.subr.bf16.mxu0 0
    %3646 = vmatpush2.bf16.msra.mxu0 0
    %3647 = vmatprep.mubr.bf16.mxu0 0
    %3648 = vmatmul.mubr.bf16.gmra.mxu0 %v2313
    %v3649 = vpop.f32.mrf.mxu0
    %v3650 = vadd.f32 %v3505, %v3649
    %v3651 = vpop.f32.mrf.mxu0
    %v3652 = vpop.f32.mrf.mxu0
    %v3653 = vadd.f32 %v3508, %v3652
    %v3654 = vpop.f32.mrf.mxu0
    %3655 = vmatprep.mubr.bf16.mxu0 0
    %3656 = vmatmul.mubr.bf16.gmra.mxu0 %v2314
    %v3657 = vpop.f32.mrf.mxu0
    %v3658 = vadd.f32 %v3513, %v3657
    %v3659 = vpop.f32.mrf.mxu0
    %v3660 = vpop.f32.mrf.mxu0
    %v3661 = vadd.f32 %v3516, %v3660
    %v3662 = vpop.f32.mrf.mxu0
    %3663 = vmatprep.mubr.bf16.mxu0 0
    %3664 = vmatmul.mubr.bf16.gmra.mxu0 %v2315
    %v3665 = vpop.f32.mrf.mxu0
    %v3666 = vadd.f32 %v3521, %v3665
    %v3667 = vpop.f32.mrf.mxu0
    %v3668 = vpop.f32.mrf.mxu0
    %v3669 = vadd.f32 %v3524, %v3668
    %v3670 = vpop.f32.mrf.mxu0
    %3671 = vmatprep.mubr.bf16.mxu0 0
    %3672 = vmatmul.mubr.bf16.gmra.mxu0 %v2316
    %v3673 = vpop.f32.mrf.mxu0
    %v3674 = vadd.f32 %v3529, %v3673
    %v3675 = vpop.f32.mrf.mxu0
    %v3676 = vpop.f32.mrf.mxu0
    %v3677 = vadd.f32 %v3532, %v3676
    %v3678 = vpop.f32.mrf.mxu0
    %3679 = vmatprep.mubr.bf16.mxu0 0
    %3680 = vmatmul.mubr.bf16.gmra.mxu0 %v2317
    %v3681 = vpop.f32.mrf.mxu0
    %v3682 = vadd.f32 %v3537, %v3681
    %v3683 = vpop.f32.mrf.mxu0
    %v3684 = vpop.f32.mrf.mxu0
    %v3685 = vadd.f32 %v3540, %v3684
    %v3686 = vpop.f32.mrf.mxu0
    %3687 = vmatprep.mubr.bf16.mxu0 0
    %3688 = vmatmul.mubr.bf16.gmra.mxu0 %v2318
    %v3689 = vpop.f32.mrf.mxu0
    %v3690 = vadd.f32 %v3545, %v3689
    %v3691 = vpop.f32.mrf.mxu0
    %v3692 = vpop.f32.mrf.mxu0
    %v3693 = vadd.f32 %v3548, %v3692
    %v3694 = vpop.f32.mrf.mxu0
    %3695 = vmatprep.mubr.bf16.mxu0 0
    %3696 = vmatmul.mubr.bf16.gmra.mxu0 %v2319
    %v3697 = vpop.f32.mrf.mxu0
    %v3698 = vadd.f32 %v3553, %v3697
    %v3699 = vpop.f32.mrf.mxu0
    %v3700 = vpop.f32.mrf.mxu0
    %v3701 = vadd.f32 %v3556, %v3700
    %v3702 = vpop.f32.mrf.mxu0
    %3703 = vmatprep.mubr.bf16.mxu0 0
    %3704 = vmatmul.mubr.bf16.gmra.mxu0 %v2320
    %v3705 = vpop.f32.mrf.mxu0
    %v3706 = vadd.f32 %v3561, %v3705
    %v3707 = vpop.f32.mrf.mxu0
    %v3708 = vpop.f32.mrf.mxu0
    %v3709 = vadd.f32 %v3564, %v3708
    %v3710 = vpop.f32.mrf.mxu0
    %3711 = vdwg.mxu0
    %s3712 = scalar_lea.vmem [#allocation2], 512
    %v3713 = vld [vmem:[%s3712] sm:$0xf]
    %v3714 = vld [vmem:[%s3712 + $0x4] sm:$0xf]
    %v3715 = vld [vmem:[%s3712 + $0x8] sm:$0xf]
    %v3716 = vld [vmem:[%s3712 + $0xc] sm:$0xf]
    %v3717 = vld [vmem:[%s3712 + $0x10] sm:$0xf]
    %v3718 = vld [vmem:[%s3712 + $0x14] sm:$0xf]
    %v3719 = vld [vmem:[%s3712 + $0x18] sm:$0xf]
    %v3720 = vld [vmem:[%s3712 + $0x1c] sm:$0xf]
    %v3721 = vld [vmem:[%s3712 + $0x20] sm:$0xf]
    %v3722 = vld [vmem:[%s3712 + $0x24] sm:$0xf]
    %v3723 = vld [vmem:[%s3712 + $0x28] sm:$0xf]
    %v3724 = vld [vmem:[%s3712 + $0x2c] sm:$0xf]
    %v3725 = vld [vmem:[%s3712 + $0x30] sm:$0xf]
    %v3726 = vld [vmem:[%s3712 + $0x34] sm:$0xf]
    %v3727 = vld [vmem:[%s3712 + $0x38] sm:$0xf]
    %v3728 = vld [vmem:[%s3712 + $0x3c] sm:$0xf]
    %v3745 = vunpack.c.l.b16 %v3713
    %v3746 = vunpack.c.l.b16 %v3714
    %v3747 = vunpack.c.l.b16 %v3715
    %v3748 = vunpack.c.l.b16 %v3716
    %v3749 = vunpack.c.l.b16 %v3717
    %v3750 = vunpack.c.l.b16 %v3718
    %v3751 = vunpack.c.l.b16 %v3719
    %v3752 = vunpack.c.l.b16 %v3720
    %v3753 = vunpack.c.l.b16 %v3721
    %v3754 = vunpack.c.l.b16 %v3722
    %v3755 = vunpack.c.l.b16 %v3723
    %v3756 = vunpack.c.l.b16 %v3724
    %v3757 = vunpack.c.l.b16 %v3725
    %v3758 = vunpack.c.l.b16 %v3726
    %v3759 = vunpack.c.l.b16 %v3727
    %v3760 = vunpack.c.l.b16 %v3728
    %v3761 = vpack.c.b16 %v3746, %v3745
    %v3762 = vpack.c.b16 %v3748, %v3747
    %v3763 = vpack.c.b16 %v3750, %v3749
    %v3764 = vpack.c.b16 %v3752, %v3751
    %v3765 = vpack.c.b16 %v3754, %v3753
    %v3766 = vpack.c.b16 %v3756, %v3755
    %v3767 = vpack.c.b16 %v3758, %v3757
    %v3768 = vpack.c.b16 %v3760, %v3759
    %3777 = vmatprep.subr.bf16.mxu0 0
    %3778 = vmatpush1.bf16.msra.mxu0 %v3768
    %3779 = vmatprep.subr.bf16.mxu0 0
    %3780 = vmatpush1.bf16.msra.mxu0 %v3767
    %3781 = vmatprep.subr.bf16.mxu0 0
    %3782 = vmatpush1.bf16.msra.mxu0 %v3766
    %3783 = vmatprep.subr.bf16.mxu0 0
    %3784 = vmatpush1.bf16.msra.mxu0 %v3765
    %3785 = vmatprep.subr.bf16.mxu0 0
    %3786 = vmatpush1.bf16.msra.mxu0 %v3764
    %3787 = vmatprep.subr.bf16.mxu0 0
    %3788 = vmatpush1.bf16.msra.mxu0 %v3763
    %3789 = vmatprep.subr.bf16.mxu0 0
    %3790 = vmatpush1.bf16.msra.mxu0 %v3762
    %3791 = vmatprep.subr.bf16.mxu0 0
    %3792 = vmatpush1.bf16.msra.mxu0 %v3761
    %3793 = vmatprep.subr.bf16.mxu0 0
    %3794 = vmatpush2.bf16.msra.mxu0 0
    %3795 = vmatprep.subr.bf16.mxu0 0
    %3796 = vmatpush2.bf16.msra.mxu0 0
    %3797 = vmatprep.subr.bf16.mxu0 0
    %3798 = vmatpush2.bf16.msra.mxu0 0
    %3799 = vmatprep.subr.bf16.mxu0 0
    %3800 = vmatpush2.bf16.msra.mxu0 0
    %3801 = vmatprep.subr.bf16.mxu0 0
    %3802 = vmatpush2.bf16.msra.mxu0 0
    %3803 = vmatprep.subr.bf16.mxu0 0
    %3804 = vmatpush2.bf16.msra.mxu0 0
    %3805 = vmatprep.subr.bf16.mxu0 0
    %3806 = vmatpush2.bf16.msra.mxu0 0
    %3807 = vmatprep.subr.bf16.mxu0 0
    %3808 = vmatpush2.bf16.msra.mxu0 0
    %3809 = vmatprep.mubr.bf16.mxu0 0
    %3810 = vmatmul.mubr.bf16.gmra.mxu0 %v2377
    %v3811 = vpop.f32.mrf.mxu0
    %v3812 = vadd.f32 0.0, %v3811
    %v3813 = vpop.f32.mrf.mxu0
    %v3814 = vpop.f32.mrf.mxu0
    %v3815 = vadd.f32 0.0, %v3814
    %v3816 = vpop.f32.mrf.mxu0
    %3817 = vmatprep.mubr.bf16.mxu0 0
    %3818 = vmatmul.mubr.bf16.gmra.mxu0 %v2378
    %v3819 = vpop.f32.mrf.mxu0
    %v3820 = vadd.f32 0.0, %v3819
    %v3821 = vpop.f32.mrf.mxu0
    %v3822 = vpop.f32.mrf.mxu0
    %v3823 = vadd.f32 0.0, %v3822
    %v3824 = vpop.f32.mrf.mxu0
    %3825 = vmatprep.mubr.bf16.mxu0 0
    %3826 = vmatmul.mubr.bf16.gmra.mxu0 %v2379
    %v3827 = vpop.f32.mrf.mxu0
    %v3828 = vadd.f32 0.0, %v3827
    %v3829 = vpop.f32.mrf.mxu0
    %v3830 = vpop.f32.mrf.mxu0
    %v3831 = vadd.f32 0.0, %v3830
    %v3832 = vpop.f32.mrf.mxu0
    %3833 = vmatprep.mubr.bf16.mxu0 0
    %3834 = vmatmul.mubr.bf16.gmra.mxu0 %v2380
    %v3835 = vpop.f32.mrf.mxu0
    %v3836 = vadd.f32 0.0, %v3835
    %v3837 = vpop.f32.mrf.mxu0
    %v3838 = vpop.f32.mrf.mxu0
    %v3839 = vadd.f32 0.0, %v3838
    %v3840 = vpop.f32.mrf.mxu0
    %3841 = vmatprep.mubr.bf16.mxu0 0
    %3842 = vmatmul.mubr.bf16.gmra.mxu0 %v2381
    %v3843 = vpop.f32.mrf.mxu0
    %v3844 = vadd.f32 0.0, %v3843
    %v3845 = vpop.f32.mrf.mxu0
    %v3846 = vpop.f32.mrf.mxu0
    %v3847 = vadd.f32 0.0, %v3846
    %v3848 = vpop.f32.mrf.mxu0
    %3849 = vmatprep.mubr.bf16.mxu0 0
    %3850 = vmatmul.mubr.bf16.gmra.mxu0 %v2382
    %v3851 = vpop.f32.mrf.mxu0
    %v3852 = vadd.f32 0.0, %v3851
    %v3853 = vpop.f32.mrf.mxu0
    %v3854 = vpop.f32.mrf.mxu0
    %v3855 = vadd.f32 0.0, %v3854
    %v3856 = vpop.f32.mrf.mxu0
    %3857 = vmatprep.mubr.bf16.mxu0 0
    %3858 = vmatmul.mubr.bf16.gmra.mxu0 %v2383
    %v3859 = vpop.f32.mrf.mxu0
    %v3860 = vadd.f32 0.0, %v3859
    %v3861 = vpop.f32.mrf.mxu0
    %v3862 = vpop.f32.mrf.mxu0
    %v3863 = vadd.f32 0.0, %v3862
    %v3864 = vpop.f32.mrf.mxu0
    %3865 = vmatprep.mubr.bf16.mxu0 0
    %3866 = vmatmul.mubr.bf16.gmra.mxu0 %v2384
    %v3867 = vpop.f32.mrf.mxu0
    %v3868 = vadd.f32 0.0, %v3867
    %v3869 = vpop.f32.mrf.mxu0
    %v3870 = vpop.f32.mrf.mxu0
    %v3871 = vadd.f32 0.0, %v3870
    %v3872 = vpop.f32.mrf.mxu0
    %3873 = vdwg.mxu0
    %v3874 = vadd.f32 %v3650, %v3812
    %v3875 = vadd.f32 %v3653, %v3815
    %v3876 = vadd.f32 %v3658, %v3820
    %v3877 = vadd.f32 %v3661, %v3823
    %v3878 = vadd.f32 %v3666, %v3828
    %v3879 = vadd.f32 %v3669, %v3831
    %v3880 = vadd.f32 %v3674, %v3836
    %v3881 = vadd.f32 %v3677, %v3839
    %v3882 = vadd.f32 %v3682, %v3844
    %v3883 = vadd.f32 %v3685, %v3847
    %v3884 = vadd.f32 %v3690, %v3852
    %v3885 = vadd.f32 %v3693, %v3855
    %v3886 = vadd.f32 %v3698, %v3860
    %v3887 = vadd.f32 %v3701, %v3863
    %v3888 = vadd.f32 %v3706, %v3868
    %v3889 = vadd.f32 %v3709, %v3871
    %v3890 = vmul.f32 %v2885, %v1861
    %v3891 = vmul.f32 %v2870, %v1865
    %v3892 = vmul.f32 %v2871, %v1869
    %v3893 = vmul.f32 %v2872, %v1873
    %v3894 = vmul.f32 %v2873, %v1877
    %v3895 = vmul.f32 %v2874, %v1881
    %v3896 = vmul.f32 %v2875, %v1885
    %v3897 = vmul.f32 %v2876, %v1889
    %v3898 = vmul.f32 %v2877, %v1893
    %v3899 = vmul.f32 %v2878, %v1897
    %v3900 = vmul.f32 %v2879, %v1901
    %v3901 = vmul.f32 %v2880, %v1905
    %v3902 = vmul.f32 %v2881, %v1909
    %v3903 = vmul.f32 %v2882, %v1913
    %v3904 = vmul.f32 %v2883, %v1917
    %v3905 = vmul.f32 %v2884, %v1921
    %v3906 = vadd.f32 %v3890, %v3372
    %v3907 = vadd.f32 %v3891, %v3373
    %v3908 = vadd.f32 %v3892, %v3374
    %v3909 = vadd.f32 %v3893, %v3375
    %v3910 = vadd.f32 %v3894, %v3376
    %v3911 = vadd.f32 %v3895, %v3377
    %v3912 = vadd.f32 %v3896, %v3378
    %v3913 = vadd.f32 %v3897, %v3379
    %v3914 = vadd.f32 %v3898, %v3380
    %v3915 = vadd.f32 %v3899, %v3381
    %v3916 = vadd.f32 %v3900, %v3382
    %v3917 = vadd.f32 %v3901, %v3383
    %v3918 = vadd.f32 %v3902, %v3384
    %v3919 = vadd.f32 %v3903, %v3385
    %v3920 = vadd.f32 %v3904, %v3386
    %v3921 = vadd.f32 %v3905, %v3387
    %v3922 = vmul.f32 %v3875, %v1957
    %v3923 = vmul.f32 %v3876, %v1961
    %v3924 = vmul.f32 %v3877, %v1965
    %v3925 = vmul.f32 %v3878, %v1969
    %v3926 = vmul.f32 %v3879, %v1973
    %v3927 = vmul.f32 %v3880, %v1977
    %v3928 = vmul.f32 %v3881, %v1981
    %v3929 = vmul.f32 %v3882, %v1985
    %v3930 = vmul.f32 %v3883, %v1989
    %v3931 = vmul.f32 %v3884, %v1993
    %v3932 = vmul.f32 %v3885, %v1997
    %v3933 = vmul.f32 %v3886, %v2001
    %v3934 = vmul.f32 %v3887, %v2005
    %v3935 = vmul.f32 %v3888, %v2009
    %v3936 = vmul.f32 %v3889, %v2013
    %v3937 = vmul.f32 %v3874, %v2017
    %v3938 = vadd.f32 %v3906, %v3922
    %v3939 = vadd.f32 %v3907, %v3923
    %v3940 = vadd.f32 %v3908, %v3924
    %v3941 = vadd.f32 %v3909, %v3925
    %v3942 = vadd.f32 %v3910, %v3926
    %v3943 = vadd.f32 %v3911, %v3927
    %v3944 = vadd.f32 %v3912, %v3928
    %v3945 = vadd.f32 %v3913, %v3929
    %v3946 = vadd.f32 %v3914, %v3930
    %v3947 = vadd.f32 %v3915, %v3931
    %v3948 = vadd.f32 %v3916, %v3932
    %v3949 = vadd.f32 %v3917, %v3933
    %v3950 = vadd.f32 %v3918, %v3934
    %v3951 = vadd.f32 %v3919, %v3935
    %v3952 = vadd.f32 %v3920, %v3936
    %v3953 = vadd.f32 %v3921, %v3937
    %v3954 = vld [vmem:[%s6] sm:$0x1]
    %v3955 = vld [vmem:[%s7] sm:$0x1]
    %v3956 = vmul.f32 %v3938, %v2055
    %v3957 = vmul.f32 %v3939, %v2059
    %v3958 = vmul.f32 %v3940, %v2063
    %v3959 = vmul.f32 %v3941, %v2067
    %v3960 = vmul.f32 %v3942, %v2071
    %v3961 = vmul.f32 %v3943, %v2075
    %v3962 = vmul.f32 %v3944, %v2079
    %v3963 = vmul.f32 %v3945, %v2083
    %v3964 = vmul.f32 %v3946, %v2087
    %v3965 = vmul.f32 %v3947, %v2091
    %v3966 = vmul.f32 %v3948, %v2095
    %v3967 = vmul.f32 %v3949, %v2099
    %v3968 = vmul.f32 %v3950, %v2103
    %v3969 = vmul.f32 %v3951, %v2107
    %v3970 = vmul.f32 %v3952, %v2111
    %v3971 = vmul.f32 %v3953, %v2115
    %v3972 = vadd.f32 %v3956, %v3957
    %v3973 = vadd.f32 %v3972, %v3958
    %v3974 = vadd.f32 %v3973, %v3959
    %v3975 = vadd.f32 %v3974, %v3960
    %v3976 = vadd.f32 %v3975, %v3961
    %v3977 = vadd.f32 %v3976, %v3962
    %v3978 = vadd.f32 %v3977, %v3963
    %v3979 = vadd.f32 %v3978, %v3964
    %v3980 = vadd.f32 %v3979, %v3965
    %v3981 = vadd.f32 %v3980, %v3966
    %v3982 = vadd.f32 %v3981, %v3967
    %v3983 = vadd.f32 %v3982, %v3968
    %v3984 = vadd.f32 %v3983, %v3969
    %v3985 = vadd.f32 %v3984, %v3970
    %v3986 = vadd.f32 %v3985, %v3971
    %v3987 = vrot.slane %v3986, 4
    %v3988 = vadd.f32 %v3986, %v3987
    %v3989 = vrot.slane %v3988, 2
    %v3990 = vadd.f32 %v3988, %v3989
    %v3991 = vrot.slane %v3990, 1
    %v3992 = vadd.f32 %v3990, %v3991
    %v3993 = vmul.f32 %v3992, 0.0078125
    %v3994 = vmul.f32 %v3956, %v3956
    %v3995 = vmul.f32 %v3957, %v3957
    %v3996 = vmul.f32 %v3958, %v3958
    %v3997 = vmul.f32 %v3959, %v3959
    %v3998 = vmul.f32 %v3960, %v3960
    %v3999 = vmul.f32 %v3961, %v3961
    %v4000 = vmul.f32 %v3962, %v3962
    %v4001 = vmul.f32 %v3963, %v3963
    %v4002 = vmul.f32 %v3964, %v3964
    %v4003 = vmul.f32 %v3965, %v3965
    %v4004 = vmul.f32 %v3966, %v3966
    %v4005 = vmul.f32 %v3967, %v3967
    %v4006 = vmul.f32 %v3968, %v3968
    %v4007 = vmul.f32 %v3969, %v3969
    %v4008 = vmul.f32 %v3970, %v3970
    %v4009 = vmul.f32 %v3971, %v3971
    %v4010 = vadd.f32 %v3994, %v3995
    %v4011 = vadd.f32 %v4010, %v3996
    %v4012 = vadd.f32 %v4011, %v3997
    %v4013 = vadd.f32 %v4012, %v3998
    %v4014 = vadd.f32 %v4013, %v3999
    %v4015 = vadd.f32 %v4014, %v4000
    %v4016 = vadd.f32 %v4015, %v4001
    %v4017 = vadd.f32 %v4016, %v4002
    %v4018 = vadd.f32 %v4017, %v4003
    %v4019 = vadd.f32 %v4018, %v4004
    %v4020 = vadd.f32 %v4019, %v4005
    %v4021 = vadd.f32 %v4020, %v4006
    %v4022 = vadd.f32 %v4021, %v4007
    %v4023 = vadd.f32 %v4022, %v4008
    %v4024 = vadd.f32 %v4023, %v4009
    %v4025 = vrot.slane %v4024, 4
    %v4026 = vadd.f32 %v4024, %v4025
    %v4027 = vrot.slane %v4026, 2
    %v4028 = vadd.f32 %v4026, %v4027
    %v4029 = vrot.slane %v4028, 1
    %v4030 = vadd.f32 %v4028, %v4029
    %v4031 = vmul.f32 %v4030, 0.0078125
    %v4032 = vmul.f32 %v3993, %v3993
    %v4033 = vsub.f32 %v4031, %v4032
    %v4034 = vadd.f32 %v4033, 1e-05
    %v4035 = vrsqrt.pop %v4034
    %v4036 = vmul.f32 %v3954, %v4035
    %v4037 = vmul.f32 %v3993, %v4036
    %v4038 = vsub.f32 %v3955, %v4037
    %v4040 = vlaneseq
    %v4041 = vshrl.u32 %v4040, 7
    %v4042 = vsub.s32 0, %v4041
    %v4043 = vrot.slane %v4036, %v4042
    %v4045 = vmul.f32 %v3938, %v4043
    %v4046 = vmul.f32 %v3939, %v4043
    %v4047 = vmul.f32 %v3940, %v4043
    %v4048 = vmul.f32 %v3941, %v4043
    %v4049 = vmul.f32 %v3942, %v4043
    %v4050 = vmul.f32 %v3943, %v4043
    %v4051 = vmul.f32 %v3944, %v4043
    %v4052 = vmul.f32 %v3945, %v4043
    %v4053 = vmul.f32 %v3946, %v4043
    %v4054 = vmul.f32 %v3947, %v4043
    %v4055 = vmul.f32 %v3948, %v4043
    %v4056 = vmul.f32 %v3949, %v4043
    %v4057 = vmul.f32 %v3950, %v4043
    %v4058 = vmul.f32 %v3951, %v4043
    %v4059 = vmul.f32 %v3952, %v4043
    %v4060 = vmul.f32 %v3953, %v4043
    %v4062 = vlaneseq
    %v4063 = vshrl.u32 %v4062, 7
    %v4064 = vsub.s32 0, %v4063
    %v4065 = vrot.slane %v4038, %v4064
    %v4067 = vadd.f32 %v4045, %v4065
    %v4068 = vadd.f32 %v4046, %v4065
    %v4069 = vadd.f32 %v4047, %v4065
    %v4070 = vadd.f32 %v4048, %v4065
    %v4071 = vadd.f32 %v4049, %v4065
    %v4072 = vadd.f32 %v4050, %v4065
    %v4073 = vadd.f32 %v4051, %v4065
    %v4074 = vadd.f32 %v4052, %v4065
    %v4075 = vadd.f32 %v4053, %v4065
    %v4076 = vadd.f32 %v4054, %v4065
    %v4077 = vadd.f32 %v4055, %v4065
    %v4078 = vadd.f32 %v4056, %v4065
    %v4079 = vadd.f32 %v4057, %v4065
    %v4080 = vadd.f32 %v4058, %v4065
    %v4081 = vadd.f32 %v4059, %v4065
    %v4082 = vadd.f32 %v4060, %v4065
    %v4083 = vadd.f32 %v4067, %v54
    %v4084 = vadd.f32 %v4068, %v55
    %v4085 = vadd.f32 %v4069, %v56
    %v4086 = vadd.f32 %v4070, %v57
    %v4087 = vadd.f32 %v4071, %v58
    %v4088 = vadd.f32 %v4072, %v59
    %v4089 = vadd.f32 %v4073, %v60
    %v4090 = vadd.f32 %v4074, %v61
    %v4091 = vadd.f32 %v4075, %v62
    %v4092 = vadd.f32 %v4076, %v63
    %v4093 = vadd.f32 %v4077, %v64
    %v4094 = vadd.f32 %v4078, %v65
    %v4095 = vadd.f32 %v4079, %v66
    %v4096 = vadd.f32 %v4080, %v67
    %v4097 = vadd.f32 %v4081, %v68
    %v4098 = vadd.f32 %v4082, %v69
    %v4099 = vmax.f32 %v4083, 0.0
    %v4100 = vmax.f32 %v4084, 0.0
    %v4101 = vmax.f32 %v4085, 0.0
    %v4102 = vmax.f32 %v4086, 0.0
    %v4103 = vmax.f32 %v4087, 0.0
    %v4104 = vmax.f32 %v4088, 0.0
    %v4105 = vmax.f32 %v4089, 0.0
    %v4106 = vmax.f32 %v4090, 0.0
    %v4107 = vmax.f32 %v4091, 0.0
    %v4108 = vmax.f32 %v4092, 0.0
    %v4109 = vmax.f32 %v4093, 0.0
    %v4110 = vmax.f32 %v4094, 0.0
    %v4111 = vmax.f32 %v4095, 0.0
    %v4112 = vmax.f32 %v4096, 0.0
    %v4113 = vmax.f32 %v4097, 0.0
    %v4114 = vmax.f32 %v4098, 0.0
    %4115 = vst [vmem:[#allocation7] sm:$0xff] %v4099
    %4116 = vst [vmem:[#allocation7 + $0x8] sm:$0xff] %v4100
    %4117 = vst [vmem:[#allocation7 + $0x10] sm:$0xff] %v4101
    %4118 = vst [vmem:[#allocation7 + $0x18] sm:$0xff] %v4102
    %4119 = vst [vmem:[#allocation7 + $0x20] sm:$0xff] %v4103
    %4120 = vst [vmem:[#allocation7 + $0x28] sm:$0xff] %v4104
    %4121 = vst [vmem:[#allocation7 + $0x30] sm:$0xff] %v4105
    %4122 = vst [vmem:[#allocation7 + $0x38] sm:$0xff] %v4106
    %4123 = vst [vmem:[#allocation7 + $0x40] sm:$0xff] %v4107
    %4124 = vst [vmem:[#allocation7 + $0x48] sm:$0xff] %v4108
    %4125 = vst [vmem:[#allocation7 + $0x50] sm:$0xff] %v4109
    %4126 = vst [vmem:[#allocation7 + $0x58] sm:$0xff] %v4110
    %4127 = vst [vmem:[#allocation7 + $0x60] sm:$0xff] %v4111
    %4128 = vst [vmem:[#allocation7 + $0x68] sm:$0xff] %v4112
    %4129 = vst [vmem:[#allocation7 + $0x70] sm:$0xff] %v4113
    %4130 = vst [vmem:[#allocation7 + $0x78] sm:$0xff] %v4114
    // Predicated region
    $region38: #{resnet_block_forward.1} parent=1 // pred_check
      _
    $region39: #{resnet_block_forward.1} parent=1 // pred_check_branch
      %4132 = sbr.rel (0) target = $region41
    $region40: #{resnet_block_forward.1} parent=1 // pred_region
      %s4134 = ssub.s32 2048, 2048
      %4135 = vsyncadd [#allocation6], %s4134
      %s4136 = sshll.u32 [#allocation7], 4
      %s4137 = int_to_ptr.vmem [resolvable:$true] %s4136
      %4142 = dma.vmem_to_hbm [thread:$0]  %s4137, 2048, %s8, [#allocation6], 128, 128, 8
    $region41: #{resnet_block_forward.1} parent=1 // pred_fallthru
      _
    // Predicated region
    $region42: #{resnet_block_forward.1} parent=1 // pred_check
      _
    $region43: #{resnet_block_forward.1} parent=1 // pred_check_branch
      %4144 = sbr.rel (0) target = $region45
    $region44: #{resnet_block_forward.1} parent=1 // pred_region
      %4145 = dma.done [#allocation6], 2048
    $region45: #{resnet_block_forward.1} parent=1 // pred_fallthru
      _
    %4146 = vsyncpa [#allocation5], 1
    %4147 = vsyncpa [#allocation6], 1
  %4148 = vsyncmov [#allocation3]
  %s4149 = vpop.sfrf %4148
  %p4150 = scmp.eq.s32.totalorder %s4149, 0
  %p4151 = pneg %p4150
  %4153 = shalt.err (%p4151)

</llo_original>
